<compile_context>
chip_gen: v5e
topology: v5e:2x2
jax: 0.10.0
libtpu: 0.0.40
codegen_flags: <defaults>
</compile_context>

<pallas_src>
import math

import jax
import jax.numpy as jnp
from jax.experimental import pallas as pl
from jax.experimental.pallas import tpu as pltpu

EPS = 1e-5


# ----------------------------- VMEM budget (per generation) ---------------------------
def _vmem_limit_bytes():
    """Scoped-VMEM cap derived from the physical per-core VMEM (v7x: 64 MiB/TC)."""
    try:
        phys = int(pltpu.get_tpu_info().vmem_capacity_bytes)
    except Exception:
        phys = 64 << 20                      # conservative fallback (v7x per-TC)
    return min((phys * 3) // 4, 96 << 20)    # v5e/v6e -> 96 MiB, v7x -> 48 MiB


VMEM_LIMIT = _vmem_limit_bytes()
# Each BlockSpec is double-buffered by the pipeline; keep the per-step working set well
# under the limit.
STEP_BUDGET = VMEM_LIMIT // 3


def _sigmoid(x):
    # single-EUP-transcendental sigmoid: sigmoid(x) = 0.5 * (tanh(x/2) + 1)
    return 0.5 * (jnp.tanh(0.5 * x) + 1.0)


# ----------------------------- tile-size helpers --------------------------------------
def _row_block(n, cz, ch, budget):
    """Rows (leading pair index) per grid step of the projection kernel.

    tr*n (flattened pair rows per block) should be a multiple of 128 so the
    channel-major a/b output blocks are lane-dense; tr must divide n."""
    wtot = 4 * ch + cz
    bpr = 4 * cz + 4 * wtot + 2 * (2 * ch + cz)       # z in + live proj + bf16 outs
    base = 128 // math.gcd(n, 128)
    if base > n or n % base != 0:
        return n                                      # block == full array -> legal
    tr = base
    while n % (tr * 2) == 0 and (tr * 2) < n and (tr * 2) * n * bpr <= budget:
        tr *= 2
    return tr


def _chan_block(ch, n, budget):
    """Channels per grid step of the triangle kernel."""
    per_c = n * n * (2 + 2 + 2 + 4)                   # a,b in + p out (bf16) + f32 acc
    tc = 1
    while ch % (tc * 2) == 0 and (tc * 2) * per_c <= budget and (tc * 2) < ch:
        tc *= 2
    return tc


def _i_block(n, tc, budget):
    """First-pair-index rows per grid step of the triangle kernel (128-multiple or n)."""
    def fits(ti):
        return tc * n * (n * 2 + ti * 8) <= budget    # b full + a/p blocks + f32 acc
    if fits(n):
        return n
    ti = (n // 128) * 128
    while ti >= 128:
        if n % ti == 0 and fits(ti):
            return ti
        ti -= 128
    return n                                          # fallback (see padding TODO)


def _flat_block(nn, ch, cz, budget):
    """Flattened pair rows per grid step of the output kernel (multiple of 128)."""
    if nn % 128 != 0:
        return nn                                     # fallback (see padding TODO)
    per_row = ch * (2 + 4) + cz * (2 + 4 + 4)         # x bf16+f32, g bf16, z f32, out
    tm = 128
    while nn % (tm * 2) == 0 and (tm * 2) * per_row <= budget and (tm * 2) < nn:
        tm *= 2
    return tm


# ---------------- Kernel A: LayerNorm-in + fused gated projections --------------------
def _proj_kernel(z_ref, lnw_ref, lnb_ref, wcat_ref, bcat_ref,
                 a_cm_ref, b_cm_ref, g_ref):
    tr, n, cz = z_ref.shape
    ch = a_cm_ref.shape[0]

    z = z_ref[...].reshape(tr * n, cz)              # leading-dim merge (layout-preserving)
    mu = jnp.mean(z, axis=-1, keepdims=True)
    var = jnp.mean((z - mu) ** 2, axis=-1, keepdims=True)
    zn = (z - mu) * jax.lax.rsqrt(var + EPS)
    zn = zn * lnw_ref[...] + lnb_ref[...]           # f32 LayerNorm + affine (VPU)

    # one wide projection matmul [Cz, 4*Ch+Cz]: bf16 operands, f32 accumulation (MXU)
    proj = jnp.dot(zn.astype(jnp.bfloat16), wcat_ref[...],
                   preferred_element_type=jnp.float32) + bcat_ref[...]

    # mask is all-ones in this model (mask=None) -> a*mask == a, b*mask == b
    a = proj[:, 0:ch] * _sigmoid(proj[:, ch:2 * ch])
    b = proj[:, 2 * ch:3 * ch] * _sigmoid(proj[:, 3 * ch:4 * ch])
    g_ref[...] = _sigmoid(proj[:, 4 * ch:4 * ch + cz]).astype(jnp.bfloat16)

    # store a/b channel-major (2-D vxpose) as bf16 MXU operands for the triangle kernel
    a_cm_ref[...] = a.T.astype(jnp.bfloat16)
    b_cm_ref[...] = b.T.astype(jnp.bfloat16)


# ---------------- Kernel B: per-channel triangle product on the MXU -------------------
def _tri_kernel_outgoing(a_ref, b_ref, p_ref):
    # stored layout: A[c,i,k] = a[i,k,c];  p[c,i,j] = sum_k A[c,i,k] B[c,j,k]
    p = jax.lax.dot_general(a_ref[...], b_ref[...],
                            dimension_numbers=(((2,), (2,)), ((0,), (0,))),
                            preferred_element_type=jnp.float32)
    p_ref[...] = p.astype(p_ref.dtype)


def _tri_kernel_incoming(a_ref, b_ref, p_ref):
    # stored layout: A[c,k,i] = a[k,i,c];  p[c,i,j] = sum_k A[c,k,i] B[c,k,j]
    # expressed directly via dot_general (contract dim 1) so Mosaic folds the transpose
    # into the MXU feed -- no f32/bf16 swapaxes round-trip.
    p = jax.lax.dot_general(a_ref[...], b_ref[...],
                            dimension_numbers=(((1,), (1,)), ((0,), (0,))),
                            preferred_element_type=jnp.float32)
    p_ref[...] = p.astype(p_ref.dtype)


# ---------------- Kernel C: LayerNorm-out + linear_z + gate + residual ----------------
def _out_kernel(x_cm_ref, g_ref, z_ref, lnw_ref, lnb_ref, wz_ref, bz_ref, out_ref):
    # channel-major consumption: LN statistics over the channel (sublane) axis, no
    # per-step [Ch, tm] transpose.
    x = x_cm_ref[...].astype(jnp.float32)            # [Ch, TM]
    mu = jnp.mean(x, axis=0, keepdims=True)
    var = jnp.mean((x - mu) ** 2, axis=0, keepdims=True)
    xn = (x - mu) * jax.lax.rsqrt(var + EPS)
    xn = xn * lnw_ref[...] + lnb_ref[...]            # per-channel affine, [Ch,1] broadcast
    # linear_z as a transposed-LHS matmul: contract channel axis 0 against w_z axis 0
    xl = jax.lax.dot_general(xn.astype(jnp.bfloat16), wz_ref[...],
                             dimension_numbers=(((0,), (0,)), ((), ())),
                             preferred_element_type=jnp.float32) + bz_ref[...]
    out_ref[...] = z_ref[...] + xl * g_ref[...].astype(jnp.float32)


# ---------------- Wrapper: one TriangleMultiplicativeUpdate + residual ----------------
def tri_mul_update(z, params, *, outgoing):
    n1, n2, cz = z.shape
    assert n1 == n2, "pair representation must be square"
    n = n1
    nn = n * n
    ch = params['w_ap'].shape[1]
    wtot = 4 * ch + cz

    # fused projection weight/bias (a_p | a_g | b_p | b_g | g); weights cast to bf16
    w_cat = jnp.concatenate([params['w_ap'], params['w_ag'], params['w_bp'],
                             params['w_bg'], params['w_g']], axis=1).astype(jnp.bfloat16)
    b_cat = jnp.concatenate([params['b_ap'], params['b_ag'], params['b_bp'],
                             params['b_bg'], params['b_g']], axis=1)
    w_z = params['w_z'].astype(jnp.bfloat16)
    ln_out_w = params['ln_out_w'].reshape(ch, 1)     # [1,Ch] -> [Ch,1] (free reshape)
    ln_out_b = params['ln_out_b'].reshape(ch, 1)

    tr = _row_block(n, cz, ch, STEP_BUDGET)
    tc = _chan_block(ch, n, STEP_BUDGET)
    ti = _i_block(n, tc, STEP_BUDGET)
    tm = _flat_block(nn, ch, cz, STEP_BUDGET)

    # ---- kernel A: grid over row-blocks of the first pair index ----------------------
    a_cm, b_cm, g2 = pl.pallas_call(
        _proj_kernel,
        grid=(n // tr,),
        in_specs=[
            pl.BlockSpec((tr, n, cz), lambda t: (t, 0, 0)),
            pl.BlockSpec((1, cz), lambda t: (0, 0)),
            pl.BlockSpec((1, cz), lambda t: (0, 0)),
            pl.BlockSpec((cz, wtot), lambda t: (0, 0)),
            pl.BlockSpec((1, wtot), lambda t: (0, 0)),
        ],
        out_specs=(
            pl.BlockSpec((ch, tr * n), lambda t: (0, t)),
            pl.BlockSpec((ch, tr * n), lambda t: (0, t)),
            pl.BlockSpec((tr * n, cz), lambda t: (t, 0)),
        ),
        out_shape=(
            jax.ShapeDtypeStruct((ch, nn), jnp.bfloat16),   # a, channel-major
            jax.ShapeDtypeStruct((ch, nn), jnp.bfloat16),   # b, channel-major
            jax.ShapeDtypeStruct((nn, cz), jnp.bfloat16),   # gate g (bf16 intermediate)
        ),
        compiler_params=pltpu.CompilerParams(
            dimension_semantics=("parallel",), vmem_limit_bytes=VMEM_LIMIT),
        cost_estimate=pl.CostEstimate(
            flops=2 * nn * cz * wtot,
            transcendentals=nn * (2 * ch + cz),
            bytes_accessed=nn * cz * 4 + cz * wtot * 2 + 2 * nn * ch * 2 + nn * cz * 2),
    )(z, params['ln_in_w'], params['ln_in_b'], w_cat, b_cat)

    # free (row-major) reshapes: [Ch, N*N] -> [Ch, N, N]
    a_cm3 = a_cm.reshape(ch, n, n)
    b_cm3 = b_cm.reshape(ch, n, n)

    # ---- kernel B: grid over (channel blocks, i blocks) -------------------------------
    if outgoing:
        tri_kernel = _tri_kernel_outgoing
        a_spec = pl.BlockSpec((tc, ti, n), lambda c, i: (c, i, 0))   # A[c,i,k]
    else:
        tri_kernel = _tri_kernel_incoming
        a_spec = pl.BlockSpec((tc, n, ti), lambda c, i: (c, 0, i))   # A[c,k,i]

    p_cm = pl.pallas_call(
        tri_kernel,
        grid=(ch // tc, n // ti),
        in_specs=[a_spec,
                  pl.BlockSpec((tc, n, n), lambda c, i: (c, 0, 0))],
        out_specs=pl.BlockSpec((tc, ti, n), lambda c, i: (c, i, 0)),
        out_shape=jax.ShapeDtypeStruct((ch, n, n), jnp.bfloat16),    # bf16 intermediate
        compiler_params=pltpu.CompilerParams(
            dimension_semantics=("parallel", "parallel"), vmem_limit_bytes=VMEM_LIMIT),
        cost_estimate=pl.CostEstimate(
            flops=2 * ch * nn * n,
            transcendentals=0,
            bytes_accessed=2 * ch * nn * 2 + ch * nn * 2),
    )(a_cm3, b_cm3)

    x_cm = p_cm.reshape(ch, nn)        # free reshape back to [Ch, N*N]
    z2 = z.reshape(nn, cz)

    # ---- kernel C: grid over flattened pair-row blocks --------------------------------
    # (no input_output_aliases: without guaranteed donation of z the alias would force a
    #  defensive copy and add HBM traffic)
    out2 = pl.pallas_call(
        _out_kernel,
        grid=(nn // tm,),
        in_specs=[
            pl.BlockSpec((ch, tm), lambda m: (0, m)),
            pl.BlockSpec((tm, cz), lambda m: (m, 0)),
            pl.BlockSpec((tm, cz), lambda m: (m, 0)),
            pl.BlockSpec((ch, 1), lambda m: (0, 0)),
            pl.BlockSpec((ch, 1), lambda m: (0, 0)),
            pl.BlockSpec((ch, cz), lambda m: (0, 0)),
            pl.BlockSpec((1, cz), lambda m: (0, 0)),
        ],
        out_specs=pl.BlockSpec((tm, cz), lambda m: (m, 0)),
        out_shape=jax.ShapeDtypeStruct((nn, cz), jnp.float32),
        compiler_params=pltpu.CompilerParams(
            dimension_semantics=("parallel",), vmem_limit_bytes=VMEM_LIMIT),
        cost_estimate=pl.CostEstimate(
            flops=2 * nn * ch * cz,
            transcendentals=0,
            bytes_accessed=ch * nn * 2 + nn * cz * 2 + 2 * nn * cz * 4 + ch * cz * 2),
    )(x_cm, g2, z2, ln_out_w, ln_out_b, w_z, params['b_z'])

    return out2.reshape(n, n, cz)


def tri_model_forward(z, params_in, params_out):
    # PyTorch tri_model.forward (eval): the discarded first `a = tri_mul_in(z)` is a
    # no-op for the output; DropoutRowwise(0.3) is identity in inference.
    z = tri_mul_update(z, params_in, outgoing=False)   # z + tri_mul_in(z)
    z = tri_mul_update(z, params_out, outgoing=True)   # z + tri_mul_out(z)
    return z


# ---------------- deterministic synthetic parameters ----------------------------------
def init_tri_params(key, c_z, c_hidden):
    ks = jax.random.split(key, 20)

    def w(k, fi, fo):
        return (jax.random.normal(k, (fi, fo), jnp.float32) / jnp.sqrt(fi)).astype(jnp.float32)

    def bias(k, fo):
        return (0.02 * jax.random.normal(k, (1, fo), jnp.float32)).astype(jnp.float32)

    return {
        'ln_in_w': 1.0 + 0.1 * jax.random.normal(ks[0], (1, c_z), jnp.float32),
        'ln_in_b': 0.05 * jax.random.normal(ks[1], (1, c_z), jnp.float32),
        'w_ap': w(ks[2], c_z, c_hidden), 'b_ap': bias(ks[3], c_hidden),
        'w_ag': w(ks[4], c_z, c_hidden), 'b_ag': bias(ks[5], c_hidden),
        'w_bp': w(ks[6], c_z, c_hidden), 'b_bp': bias(ks[7], c_hidden),
        'w_bg': w(ks[8], c_z, c_hidden), 'b_bg': bias(ks[9], c_hidden),
        'w_g': w(ks[10], c_z, c_z), 'b_g': bias(ks[11], c_z),
        'w_z': w(ks[12], c_hidden, c_z), 'b_z': bias(ks[13], c_z),
        'ln_out_w': 1.0 + 0.1 * jax.random.normal(ks[14], (1, c_hidden), jnp.float32),
        'ln_out_b': 0.05 * jax.random.normal(ks[15], (1, c_hidden), jnp.float32),
    }


# ---------------- plain-JAX references --------------------------------------------------
def _layer_norm(x, w, b):
    mu = jnp.mean(x, -1, keepdims=True)
    var = jnp.mean((x - mu) ** 2, -1, keepdims=True)
    return (x - mu) * jax.lax.rsqrt(var + EPS) * w[0] + b[0]


def _tri_mul_ref(z, p, *, outgoing, mxu_bf16):
    """mxu_bf16=True mirrors the kernel's mixed precision (bf16 MXU operands, f32
    accumulation, bf16 g / triangle-product intermediates, tanh-form sigmoid);
    mxu_bf16=False is the full-f32 PyTorch-equivalent module."""
    prec = None if mxu_bf16 else jax.lax.Precision.HIGHEST
    sig = _sigmoid if mxu_bf16 else jax.nn.sigmoid

    def cast(x):
        return x.astype(jnp.bfloat16) if mxu_bf16 else x

    zn = _layer_norm(z, p['ln_in_w'], p['ln_in_b'])

    def lin(w, b):
        return jnp.dot(cast(zn), cast(w), precision=prec,
                       preferred_element_type=jnp.float32) + b[0]

    a = lin(p['w_ap'], p['b_ap']) * sig(lin(p['w_ag'], p['b_ag']))
    b = lin(p['w_bp'], p['b_bp']) * sig(lin(p['w_bg'], p['b_bg']))
    g = sig(lin(p['w_g'], p['b_g']))
    if mxu_bf16:
        g = cast(g).astype(jnp.float32)              # bf16 HBM intermediate in the kernel
    if outgoing:
        x = jnp.einsum('ikc,jkc->ijc', cast(a), cast(b), precision=prec,
                       preferred_element_type=jnp.float32)
    else:
        x = jnp.einsum('kic,kjc->ijc', cast(a), cast(b), precision=prec,
                       preferred_element_type=jnp.float32)
    if mxu_bf16:
        x = cast(x).astype(jnp.float32)              # bf16 HBM intermediate in the kernel
    xn = _layer_norm(x, p['ln_out_w'], p['ln_out_b'])
    xl = jnp.dot(cast(xn), cast(p['w_z']), precision=prec,
                 preferred_element_type=jnp.float32) + p['b_z'][0]
    return z + xl * g


def _tri_model_ref(z, params_in, params_out, *, mxu_bf16):
    z = _tri_mul_ref(z, params_in, outgoing=False, mxu_bf16=mxu_bf16)
    z = _tri_mul_ref(z, params_out, outgoing=True, mxu_bf16=mxu_bf16)
    return z


if __name__ == "__main__":
    N_RES, C_Z, C_HIDDEN = 16, 32, 16

    key = jax.random.PRNGKey(0)
    k_z, k_in, k_out = jax.random.split(key, 3)
    z = jax.random.normal(k_z, (N_RES, N_RES, C_Z), jnp.float32)

    params_in = init_tri_params(k_in, C_Z, C_HIDDEN)
    params_out = init_tri_params(k_out, C_Z, C_HIDDEN)

    fwd = jax.jit(tri_model_forward)
    out = jax.block_until_ready(fwd(z, params_in, params_out))

    assert out.shape == (N_RES, N_RES, C_Z)
    assert bool(jnp.all(jnp.isfinite(out)))

    # tight check: pure-JAX reference with the kernel's exact mixed precision
    # (tolerance allows single-bf16-ulp rounding flips on the bf16 intermediates)
    ref_mixed = _tri_model_ref(z, params_in, params_out, mxu_bf16=True)
    err_mixed = float(jnp.max(jnp.abs(out - ref_mixed)))
    assert jnp.allclose(out, ref_mixed, atol=5e-3, rtol=5e-3), err_mixed

    # loose sanity check against the full-f32 module semantics (bf16 rounding only)
    ref_f32 = _tri_model_ref(z, params_in, params_out, mxu_bf16=False)
    err_f32 = float(jnp.max(jnp.abs(out - ref_f32)))
    assert err_f32 < 0.25, err_f32

    print("KERNEL_OK")
</pallas_src>

<mosaic_0001>
module attributes {stable_mosaic.version = 11 : i64} {
  func.func @_proj_kernel(%arg0: i32, %arg1: memref<8x16x32xf32, #tpu.memory_space<vmem>>, %arg2: memref<1x32xf32, #tpu.memory_space<vmem>>, %arg3: memref<1x32xf32, #tpu.memory_space<vmem>>, %arg4: memref<32x96xbf16, #tpu.memory_space<vmem>>, %arg5: memref<1x96xf32, #tpu.memory_space<vmem>>, %arg6: memref<16x128xbf16, #tpu.memory_space<vmem>>, %arg7: memref<16x128xbf16, #tpu.memory_space<vmem>>, %arg8: memref<128x32xbf16, #tpu.memory_space<vmem>>) attributes {dimension_semantics = [#tpu.dimension_semantics<parallel>], iteration_bounds = array<i64: 2>, scalar_prefetch = 0 : i64, scratch_operands = 0 : i64, tpu.core_type = #tpu.core_type<tc>, window_params = [{transform_indices = @transform_0, window_bounds = array<i64: 8, 16, 32>}, {pipeline_mode = #tpu.pipeline_mode<synchronous>, transform_indices = @transform_1, window_bounds = array<i64: 1, 32>}, {pipeline_mode = #tpu.pipeline_mode<synchronous>, transform_indices = @transform_2, window_bounds = array<i64: 1, 32>}, {pipeline_mode = #tpu.pipeline_mode<synchronous>, transform_indices = @transform_3, window_bounds = array<i64: 32, 96>}, {pipeline_mode = #tpu.pipeline_mode<synchronous>, transform_indices = @transform_4, window_bounds = array<i64: 1, 96>}, {transform_indices = @transform_5, window_bounds = array<i64: 16, 128>}, {transform_indices = @transform_6, window_bounds = array<i64: 16, 128>}, {transform_indices = @transform_7, window_bounds = array<i64: 128, 32>}]} {
    %c0 = arith.constant 0 : index
    %c0_0 = arith.constant 0 : index
    %c0_1 = arith.constant 0 : index
    %0 = vector.load %arg1[%c0, %c0_0, %c0_1] : memref<8x16x32xf32, #tpu.memory_space<vmem>>, vector<8x16x32xf32>
    %1 = vector.shape_cast %0 : vector<8x16x32xf32> to vector<128x32xf32>
    %cst = arith.constant dense<0.000000e+00> : vector<128xf32>
    %2 = vector.multi_reduction <add>, %1, %cst [1] : vector<128x32xf32> to vector<128xf32>
    %3 = vector.shape_cast %2 : vector<128xf32> to vector<128x1xf32>
    %cst_2 = arith.constant 3.200000e+01 : f32
    %4 = vector.broadcast %cst_2 : f32 to vector<128x1xf32>
    %5 = arith.divf %3, %4 : vector<128x1xf32>
    %6 = vector.broadcast %5 : vector<128x1xf32> to vector<128x32xf32>
    %7 = arith.subf %1, %6 : vector<128x32xf32>
    %8 = arith.mulf %7, %7 : vector<128x32xf32>
    %cst_3 = arith.constant dense<0.000000e+00> : vector<128xf32>
    %9 = vector.multi_reduction <add>, %8, %cst_3 [1] : vector<128x32xf32> to vector<128xf32>
    %10 = vector.shape_cast %9 : vector<128xf32> to vector<128x1xf32>
    %cst_4 = arith.constant 3.200000e+01 : f32
    %11 = vector.broadcast %cst_4 : f32 to vector<128x1xf32>
    %12 = arith.divf %10, %11 : vector<128x1xf32>
    %13 = vector.broadcast %5 : vector<128x1xf32> to vector<128x32xf32>
    %14 = arith.subf %1, %13 : vector<128x32xf32>
    %cst_5 = arith.constant 9.99999974E-6 : f32
    %15 = vector.broadcast %cst_5 : f32 to vector<128x1xf32>
    %16 = arith.addf %12, %15 : vector<128x1xf32>
    %17 = math.rsqrt %16 : vector<128x1xf32>
    %18 = vector.broadcast %17 : vector<128x1xf32> to vector<128x32xf32>
    %19 = arith.mulf %14, %18 : vector<128x32xf32>
    %c0_6 = arith.constant 0 : index
    %c0_7 = arith.constant 0 : index
    %20 = vector.load %arg2[%c0_6, %c0_7] : memref<1x32xf32, #tpu.memory_space<vmem>>, vector<1x32xf32>
    %21 = vector.broadcast %20 : vector<1x32xf32> to vector<128x32xf32>
    %22 = arith.mulf %19, %21 : vector<128x32xf32>
    %c0_8 = arith.constant 0 : index
    %c0_9 = arith.constant 0 : index
    %23 = vector.load %arg3[%c0_8, %c0_9] : memref<1x32xf32, #tpu.memory_space<vmem>>, vector<1x32xf32>
    %24 = vector.broadcast %23 : vector<1x32xf32> to vector<128x32xf32>
    %25 = arith.addf %22, %24 : vector<128x32xf32>
    %26 = arith.truncf %25 : vector<128x32xf32> to vector<128x32xbf16>
    %c0_10 = arith.constant 0 : index
    %c0_11 = arith.constant 0 : index
    %27 = vector.load %arg4[%c0_10, %c0_11] : memref<32x96xbf16, #tpu.memory_space<vmem>>, vector<32x96xbf16>
    %cst_12 = arith.constant dense<0.000000e+00> : vector<128x96xf32>
    %28 = tpu.matmul %26, %27, %cst_12 {dimension_numbers = #tpu.dot_dimension_numbers<[1], [0], [0], [1], [0, 0, 1, 1], [], []>} : vector<128x32xbf16>, vector<32x96xbf16>, vector<128x96xf32> -> vector<128x96xf32>
    %c0_13 = arith.constant 0 : index
    %c0_14 = arith.constant 0 : index
    %29 = vector.load %arg5[%c0_13, %c0_14] : memref<1x96xf32, #tpu.memory_space<vmem>>, vector<1x96xf32>
    %30 = vector.broadcast %29 : vector<1x96xf32> to vector<128x96xf32>
    %31 = arith.addf %28, %30 : vector<128x96xf32>
    %32 = vector.extract_strided_slice %31 {offsets = [0, 0], sizes = [128, 16], strides = [1, 1]} : vector<128x96xf32> to vector<128x16xf32>
    %33 = vector.extract_strided_slice %31 {offsets = [0, 16], sizes = [128, 16], strides = [1, 1]} : vector<128x96xf32> to vector<128x16xf32>
    %cst_15 = arith.constant 5.000000e-01 : f32
    %34 = vector.broadcast %cst_15 : f32 to vector<128x16xf32>
    %35 = arith.mulf %34, %33 : vector<128x16xf32>
    %36 = math.tanh %35 : vector<128x16xf32>
    %cst_16 = arith.constant 1.000000e+00 : f32
    %37 = vector.broadcast %cst_16 : f32 to vector<128x16xf32>
    %38 = arith.addf %36, %37 : vector<128x16xf32>
    %cst_17 = arith.constant 5.000000e-01 : f32
    %39 = vector.broadcast %cst_17 : f32 to vector<128x16xf32>
    %40 = arith.mulf %39, %38 : vector<128x16xf32>
    %41 = arith.mulf %32, %40 : vector<128x16xf32>
    %42 = vector.extract_strided_slice %31 {offsets = [0, 32], sizes = [128, 16], strides = [1, 1]} : vector<128x96xf32> to vector<128x16xf32>
    %43 = vector.extract_strided_slice %31 {offsets = [0, 48], sizes = [128, 16], strides = [1, 1]} : vector<128x96xf32> to vector<128x16xf32>
    %cst_18 = arith.constant 5.000000e-01 : f32
    %44 = vector.broadcast %cst_18 : f32 to vector<128x16xf32>
    %45 = arith.mulf %44, %43 : vector<128x16xf32>
    %46 = math.tanh %45 : vector<128x16xf32>
    %cst_19 = arith.constant 1.000000e+00 : f32
    %47 = vector.broadcast %cst_19 : f32 to vector<128x16xf32>
    %48 = arith.addf %46, %47 : vector<128x16xf32>
    %cst_20 = arith.constant 5.000000e-01 : f32
    %49 = vector.broadcast %cst_20 : f32 to vector<128x16xf32>
    %50 = arith.mulf %49, %48 : vector<128x16xf32>
    %51 = arith.mulf %42, %50 : vector<128x16xf32>
    %52 = vector.extract_strided_slice %31 {offsets = [0, 64], sizes = [128, 32], strides = [1, 1]} : vector<128x96xf32> to vector<128x32xf32>
    %cst_21 = arith.constant 5.000000e-01 : f32
    %53 = vector.broadcast %cst_21 : f32 to vector<128x32xf32>
    %54 = arith.mulf %53, %52 : vector<128x32xf32>
    %55 = math.tanh %54 : vector<128x32xf32>
    %cst_22 = arith.constant 1.000000e+00 : f32
    %56 = vector.broadcast %cst_22 : f32 to vector<128x32xf32>
    %57 = arith.addf %55, %56 : vector<128x32xf32>
    %cst_23 = arith.constant 5.000000e-01 : f32
    %58 = vector.broadcast %cst_23 : f32 to vector<128x32xf32>
    %59 = arith.mulf %58, %57 : vector<128x32xf32>
    %60 = arith.truncf %59 : vector<128x32xf32> to vector<128x32xbf16>
    %c0_24 = arith.constant 0 : index
    %c0_25 = arith.constant 0 : index
    %61 = vector.load %arg8[%c0_24, %c0_25] : memref<128x32xbf16, #tpu.memory_space<vmem>>, vector<128x32xbf16>
    tpu.vector_store %arg8[%c0_24, %c0_25], %60 {strides = array<i32>} : memref<128x32xbf16, #tpu.memory_space<vmem>>, vector<128x32xbf16>,
    %62 = tpu.transpose %41, [1, 0] : vector<128x16xf32> -> vector<16x128xf32>
    %63 = arith.truncf %62 : vector<16x128xf32> to vector<16x128xbf16>
    %c0_26 = arith.constant 0 : index
    %c0_27 = arith.constant 0 : index
    %64 = vector.load %arg6[%c0_26, %c0_27] : memref<16x128xbf16, #tpu.memory_space<vmem>>, vector<16x128xbf16>
    tpu.vector_store %arg6[%c0_26, %c0_27], %63 {strides = array<i32>} : memref<16x128xbf16, #tpu.memory_space<vmem>>, vector<16x128xbf16>,
    %65 = tpu.transpose %51, [1, 0] : vector<128x16xf32> -> vector<16x128xf32>
    %66 = arith.truncf %65 : vector<16x128xf32> to vector<16x128xbf16>
    %c0_28 = arith.constant 0 : index
    %c0_29 = arith.constant 0 : index
    %67 = vector.load %arg7[%c0_28, %c0_29] : memref<16x128xbf16, #tpu.memory_space<vmem>>, vector<16x128xbf16>
    tpu.vector_store %arg7[%c0_28, %c0_29], %66 {strides = array<i32>} : memref<16x128xbf16, #tpu.memory_space<vmem>>, vector<16x128xbf16>,
    return
  }
  func.func @transform_0(%arg0: i32) -> (i32, i32, i32) {
    %c0_i32 = arith.constant 0 : i32
    %c0_i32_0 = arith.constant 0 : i32
    %c0_i32_1 = arith.constant 0 : i32
    return %arg0, %c0_i32, %c0_i32_0 : i32, i32, i32
  }
  func.func @transform_1(%arg0: i32) -> (i32, i32) {
    %c0_i32 = arith.constant 0 : i32
    %c0_i32_0 = arith.constant 0 : i32
    %c0_i32_1 = arith.constant 0 : i32
    return %c0_i32, %c0_i32_0 : i32, i32
  }
  func.func @transform_2(%arg0: i32) -> (i32, i32) {
    %c0_i32 = arith.constant 0 : i32
    %c0_i32_0 = arith.constant 0 : i32
    %c0_i32_1 = arith.constant 0 : i32
    return %c0_i32, %c0_i32_0 : i32, i32
  }
  func.func @transform_3(%arg0: i32) -> (i32, i32) {
    %c0_i32 = arith.constant 0 : i32
    %c0_i32_0 = arith.constant 0 : i32
    %c0_i32_1 = arith.constant 0 : i32
    return %c0_i32, %c0_i32_0 : i32, i32
  }
  func.func @transform_4(%arg0: i32) -> (i32, i32) {
    %c0_i32 = arith.constant 0 : i32
    %c0_i32_0 = arith.constant 0 : i32
    %c0_i32_1 = arith.constant 0 : i32
    return %c0_i32, %c0_i32_0 : i32, i32
  }
  func.func @transform_5(%arg0: i32) -> (i32, i32) {
    %c0_i32 = arith.constant 0 : i32
    %c0_i32_0 = arith.constant 0 : i32
    return %c0_i32, %arg0 : i32, i32
  }
  func.func @transform_6(%arg0: i32) -> (i32, i32) {
    %c0_i32 = arith.constant 0 : i32
    %c0_i32_0 = arith.constant 0 : i32
    return %c0_i32, %arg0 : i32, i32
  }
  func.func @transform_7(%arg0: i32) -> (i32, i32) {
    %c0_i32 = arith.constant 0 : i32
    %c0_i32_0 = arith.constant 0 : i32
    return %arg0, %c0_i32 : i32, i32
  }
}

module attributes {stable_mosaic.version = 11 : i64} {
  func.func @_tri_kernel_incoming(%arg0: i32, %arg1: i32, %arg2: memref<8x16x16xbf16, #tpu.memory_space<vmem>>, %arg3: memref<8x16x16xbf16, #tpu.memory_space<vmem>>, %arg4: memref<8x16x16xbf16, #tpu.memory_space<vmem>>) attributes {dimension_semantics = [#tpu.dimension_semantics<parallel>, #tpu.dimension_semantics<parallel>], iteration_bounds = array<i64: 2, 1>, scalar_prefetch = 0 : i64, scratch_operands = 0 : i64, tpu.core_type = #tpu.core_type<tc>, window_params = [{transform_indices = @transform_0, window_bounds = array<i64: 8, 16, 16>}, {transform_indices = @transform_1, window_bounds = array<i64: 8, 16, 16>}, {transform_indices = @transform_2, window_bounds = array<i64: 8, 16, 16>}]} {
    %c0 = arith.constant 0 : index
    %c0_0 = arith.constant 0 : index
    %c0_1 = arith.constant 0 : index
    %0 = vector.load %arg2[%c0, %c0_0, %c0_1] : memref<8x16x16xbf16, #tpu.memory_space<vmem>>, vector<8x16x16xbf16>
    %c0_2 = arith.constant 0 : index
    %c0_3 = arith.constant 0 : index
    %c0_4 = arith.constant 0 : index
    %1 = vector.load %arg3[%c0_2, %c0_3, %c0_4] : memref<8x16x16xbf16, #tpu.memory_space<vmem>>, vector<8x16x16xbf16>
    %cst = arith.constant dense<0.000000e+00> : vector<8x16x16xf32>
    %2 = tpu.matmul %0, %1, %cst {dimension_numbers = #tpu.dot_dimension_numbers<[1], [1], [2], [2], [0, 0, 0, 2, 1, 2], [0], [0]>} : vector<8x16x16xbf16>, vector<8x16x16xbf16>, vector<8x16x16xf32> -> vector<8x16x16xf32>
    %3 = arith.truncf %2 : vector<8x16x16xf32> to vector<8x16x16xbf16>
    %c0_5 = arith.constant 0 : index
    %c0_6 = arith.constant 0 : index
    %c0_7 = arith.constant 0 : index
    %4 = vector.load %arg4[%c0_5, %c0_6, %c0_7] : memref<8x16x16xbf16, #tpu.memory_space<vmem>>, vector<8x16x16xbf16>
    tpu.vector_store %arg4[%c0_5, %c0_6, %c0_7], %3 {strides = array<i32>} : memref<8x16x16xbf16, #tpu.memory_space<vmem>>, vector<8x16x16xbf16>,
    return
  }
  func.func @transform_0(%arg0: i32, %arg1: i32) -> (i32, i32, i32) {
    %c0_i32 = arith.constant 0 : i32
    %c0_i32_0 = arith.constant 0 : i32
    return %arg0, %c0_i32, %arg1 : i32, i32, i32
  }
  func.func @transform_1(%arg0: i32, %arg1: i32) -> (i32, i32, i32) {
    %c0_i32 = arith.constant 0 : i32
    %c0_i32_0 = arith.constant 0 : i32
    %c0_i32_1 = arith.constant 0 : i32
    return %arg0, %c0_i32, %c0_i32_0 : i32, i32, i32
  }
  func.func @transform_2(%arg0: i32, %arg1: i32) -> (i32, i32, i32) {
    %c0_i32 = arith.constant 0 : i32
    %c0_i32_0 = arith.constant 0 : i32
    return %arg0, %arg1, %c0_i32 : i32, i32, i32
  }
}

module attributes {stable_mosaic.version = 11 : i64} {
  func.func @_out_kernel(%arg0: i32, %arg1: memref<16x128xbf16, #tpu.memory_space<vmem>>, %arg2: memref<128x32xbf16, #tpu.memory_space<vmem>>, %arg3: memref<128x32xf32, #tpu.memory_space<vmem>>, %arg4: memref<16x1xf32, #tpu.memory_space<vmem>>, %arg5: memref<16x1xf32, #tpu.memory_space<vmem>>, %arg6: memref<16x32xbf16, #tpu.memory_space<vmem>>, %arg7: memref<1x32xf32, #tpu.memory_space<vmem>>, %arg8: memref<128x32xf32, #tpu.memory_space<vmem>>) attributes {dimension_semantics = [#tpu.dimension_semantics<parallel>], iteration_bounds = array<i64: 2>, scalar_prefetch = 0 : i64, scratch_operands = 0 : i64, tpu.core_type = #tpu.core_type<tc>, window_params = [{transform_indices = @transform_0, window_bounds = array<i64: 16, 128>}, {transform_indices = @transform_1, window_bounds = array<i64: 128, 32>}, {transform_indices = @transform_2, window_bounds = array<i64: 128, 32>}, {pipeline_mode = #tpu.pipeline_mode<synchronous>, transform_indices = @transform_3, window_bounds = array<i64: 16, 1>}, {pipeline_mode = #tpu.pipeline_mode<synchronous>, transform_indices = @transform_4, window_bounds = array<i64: 16, 1>}, {pipeline_mode = #tpu.pipeline_mode<synchronous>, transform_indices = @transform_5, window_bounds = array<i64: 16, 32>}, {pipeline_mode = #tpu.pipeline_mode<synchronous>, transform_indices = @transform_6, window_bounds = array<i64: 1, 32>}, {transform_indices = @transform_7, window_bounds = array<i64: 128, 32>}]} {
    %c0 = arith.constant 0 : index
    %c0_0 = arith.constant 0 : index
    %0 = vector.load %arg1[%c0, %c0_0] : memref<16x128xbf16, #tpu.memory_space<vmem>>, vector<16x128xbf16>
    %1 = arith.extf %0 : vector<16x128xbf16> to vector<16x128xf32>
    %cst = arith.constant dense<0.000000e+00> : vector<128xf32>
    %2 = vector.multi_reduction <add>, %1, %cst [0] : vector<16x128xf32> to vector<128xf32>
    %3 = vector.shape_cast %2 : vector<128xf32> to vector<1x128xf32>
    %cst_1 = arith.constant 1.600000e+01 : f32
    %4 = vector.broadcast %cst_1 : f32 to vector<1x128xf32>
    %5 = arith.divf %3, %4 : vector<1x128xf32>
    %6 = vector.broadcast %5 : vector<1x128xf32> to vector<16x128xf32>
    %7 = arith.subf %1, %6 : vector<16x128xf32>
    %8 = arith.mulf %7, %7 : vector<16x128xf32>
    %cst_2 = arith.constant dense<0.000000e+00> : vector<128xf32>
    %9 = vector.multi_reduction <add>, %8, %cst_2 [0] : vector<16x128xf32> to vector<128xf32>
    %10 = vector.shape_cast %9 : vector<128xf32> to vector<1x128xf32>
    %cst_3 = arith.constant 1.600000e+01 : f32
    %11 = vector.broadcast %cst_3 : f32 to vector<1x128xf32>
    %12 = arith.divf %10, %11 : vector<1x128xf32>
    %13 = vector.broadcast %5 : vector<1x128xf32> to vector<16x128xf32>
    %14 = arith.subf %1, %13 : vector<16x128xf32>
    %cst_4 = arith.constant 9.99999974E-6 : f32
    %15 = vector.broadcast %cst_4 : f32 to vector<1x128xf32>
    %16 = arith.addf %12, %15 : vector<1x128xf32>
    %17 = math.rsqrt %16 : vector<1x128xf32>
    %18 = vector.broadcast %17 : vector<1x128xf32> to vector<16x128xf32>
    %19 = arith.mulf %14, %18 : vector<16x128xf32>
    %c0_5 = arith.constant 0 : index
    %c0_6 = arith.constant 0 : index
    %20 = vector.load %arg4[%c0_5, %c0_6] : memref<16x1xf32, #tpu.memory_space<vmem>>, vector<16x1xf32>
    %21 = vector.broadcast %20 : vector<16x1xf32> to vector<16x128xf32>
    %22 = arith.mulf %19, %21 : vector<16x128xf32>
    %c0_7 = arith.constant 0 : index
    %c0_8 = arith.constant 0 : index
    %23 = vector.load %arg5[%c0_7, %c0_8] : memref<16x1xf32, #tpu.memory_space<vmem>>, vector<16x1xf32>
    %24 = vector.broadcast %23 : vector<16x1xf32> to vector<16x128xf32>
    %25 = arith.addf %22, %24 : vector<16x128xf32>
    %26 = arith.truncf %25 : vector<16x128xf32> to vector<16x128xbf16>
    %c0_9 = arith.constant 0 : index
    %c0_10 = arith.constant 0 : index
    %27 = vector.load %arg6[%c0_9, %c0_10] : memref<16x32xbf16, #tpu.memory_space<vmem>>, vector<16x32xbf16>
    %cst_11 = arith.constant dense<0.000000e+00> : vector<128x32xf32>
    %28 = tpu.matmul %26, %27, %cst_11 {dimension_numbers = #tpu.dot_dimension_numbers<[0], [0], [1], [1], [0, 1, 1, 1], [], []>} : vector<16x128xbf16>, vector<16x32xbf16>, vector<128x32xf32> -> vector<128x32xf32>
    %c0_12 = arith.constant 0 : index
    %c0_13 = arith.constant 0 : index
    %29 = vector.load %arg7[%c0_12, %c0_13] : memref<1x32xf32, #tpu.memory_space<vmem>>, vector<1x32xf32>
    %30 = vector.broadcast %29 : vector<1x32xf32> to vector<128x32xf32>
    %31 = arith.addf %28, %30 : vector<128x32xf32>
    %c0_14 = arith.constant 0 : index
    %c0_15 = arith.constant 0 : index
    %32 = vector.load %arg3[%c0_14, %c0_15] : memref<128x32xf32, #tpu.memory_space<vmem>>, vector<128x32xf32>
    %c0_16 = arith.constant 0 : index
    %c0_17 = arith.constant 0 : index
    %33 = vector.load %arg2[%c0_16, %c0_17] : memref<128x32xbf16, #tpu.memory_space<vmem>>, vector<128x32xbf16>
    %34 = arith.extf %33 : vector<128x32xbf16> to vector<128x32xf32>
    %35 = arith.mulf %31, %34 : vector<128x32xf32>
    %36 = arith.addf %32, %35 : vector<128x32xf32>
    %c0_18 = arith.constant 0 : index
    %c0_19 = arith.constant 0 : index
    %37 = vector.load %arg8[%c0_18, %c0_19] : memref<128x32xf32, #tpu.memory_space<vmem>>, vector<128x32xf32>
    tpu.vector_store %arg8[%c0_18, %c0_19], %36 {strides = array<i32>} : memref<128x32xf32, #tpu.memory_space<vmem>>, vector<128x32xf32>,
    return
  }
  func.func @transform_0(%arg0: i32) -> (i32, i32) {
    %c0_i32 = arith.constant 0 : i32
    %c0_i32_0 = arith.constant 0 : i32
    return %c0_i32, %arg0 : i32, i32
  }
  func.func @transform_1(%arg0: i32) -> (i32, i32) {
    %c0_i32 = arith.constant 0 : i32
    %c0_i32_0 = arith.constant 0 : i32
    return %arg0, %c0_i32 : i32, i32
  }
  func.func @transform_2(%arg0: i32) -> (i32, i32) {
    %c0_i32 = arith.constant 0 : i32
    %c0_i32_0 = arith.constant 0 : i32
    return %arg0, %c0_i32 : i32, i32
  }
  func.func @transform_3(%arg0: i32) -> (i32, i32) {
    %c0_i32 = arith.constant 0 : i32
    %c0_i32_0 = arith.constant 0 : i32
    %c0_i32_1 = arith.constant 0 : i32
    return %c0_i32, %c0_i32_0 : i32, i32
  }
  func.func @transform_4(%arg0: i32) -> (i32, i32) {
    %c0_i32 = arith.constant 0 : i32
    %c0_i32_0 = arith.constant 0 : i32
    %c0_i32_1 = arith.constant 0 : i32
    return %c0_i32, %c0_i32_0 : i32, i32
  }
  func.func @transform_5(%arg0: i32) -> (i32, i32) {
    %c0_i32 = arith.constant 0 : i32
    %c0_i32_0 = arith.constant 0 : i32
    %c0_i32_1 = arith.constant 0 : i32
    return %c0_i32, %c0_i32_0 : i32, i32
  }
  func.func @transform_6(%arg0: i32) -> (i32, i32) {
    %c0_i32 = arith.constant 0 : i32
    %c0_i32_0 = arith.constant 0 : i32
    %c0_i32_1 = arith.constant 0 : i32
    return %c0_i32, %c0_i32_0 : i32, i32
  }
  func.func @transform_7(%arg0: i32) -> (i32, i32) {
    %c0_i32 = arith.constant 0 : i32
    %c0_i32_0 = arith.constant 0 : i32
    return %arg0, %c0_i32 : i32, i32
  }
}

module attributes {stable_mosaic.version = 11 : i64} {
  func.func @_tri_kernel_outgoing(%arg0: i32, %arg1: i32, %arg2: memref<8x16x16xbf16, #tpu.memory_space<vmem>>, %arg3: memref<8x16x16xbf16, #tpu.memory_space<vmem>>, %arg4: memref<8x16x16xbf16, #tpu.memory_space<vmem>>) attributes {dimension_semantics = [#tpu.dimension_semantics<parallel>, #tpu.dimension_semantics<parallel>], iteration_bounds = array<i64: 2, 1>, scalar_prefetch = 0 : i64, scratch_operands = 0 : i64, tpu.core_type = #tpu.core_type<tc>, window_params = [{transform_indices = @transform_0, window_bounds = array<i64: 8, 16, 16>}, {transform_indices = @transform_1, window_bounds = array<i64: 8, 16, 16>}, {transform_indices = @transform_2, window_bounds = array<i64: 8, 16, 16>}]} {
    %c0 = arith.constant 0 : index
    %c0_0 = arith.constant 0 : index
    %c0_1 = arith.constant 0 : index
    %0 = vector.load %arg2[%c0, %c0_0, %c0_1] : memref<8x16x16xbf16, #tpu.memory_space<vmem>>, vector<8x16x16xbf16>
    %c0_2 = arith.constant 0 : index
    %c0_3 = arith.constant 0 : index
    %c0_4 = arith.constant 0 : index
    %1 = vector.load %arg3[%c0_2, %c0_3, %c0_4] : memref<8x16x16xbf16, #tpu.memory_space<vmem>>, vector<8x16x16xbf16>
    %cst = arith.constant dense<0.000000e+00> : vector<8x16x16xf32>
    %2 = tpu.matmul %0, %1, %cst {dimension_numbers = #tpu.dot_dimension_numbers<[2], [2], [1], [1], [0, 0, 0, 1, 1, 1], [0], [0]>} : vector<8x16x16xbf16>, vector<8x16x16xbf16>, vector<8x16x16xf32> -> vector<8x16x16xf32>
    %3 = arith.truncf %2 : vector<8x16x16xf32> to vector<8x16x16xbf16>
    %c0_5 = arith.constant 0 : index
    %c0_6 = arith.constant 0 : index
    %c0_7 = arith.constant 0 : index
    %4 = vector.load %arg4[%c0_5, %c0_6, %c0_7] : memref<8x16x16xbf16, #tpu.memory_space<vmem>>, vector<8x16x16xbf16>
    tpu.vector_store %arg4[%c0_5, %c0_6, %c0_7], %3 {strides = array<i32>} : memref<8x16x16xbf16, #tpu.memory_space<vmem>>, vector<8x16x16xbf16>,
    return
  }
  func.func @transform_0(%arg0: i32, %arg1: i32) -> (i32, i32, i32) {
    %c0_i32 = arith.constant 0 : i32
    %c0_i32_0 = arith.constant 0 : i32
    return %arg0, %arg1, %c0_i32 : i32, i32, i32
  }
  func.func @transform_1(%arg0: i32, %arg1: i32) -> (i32, i32, i32) {
    %c0_i32 = arith.constant 0 : i32
    %c0_i32_0 = arith.constant 0 : i32
    %c0_i32_1 = arith.constant 0 : i32
    return %arg0, %c0_i32, %c0_i32_0 : i32, i32, i32
  }
  func.func @transform_2(%arg0: i32, %arg1: i32) -> (i32, i32, i32) {
    %c0_i32 = arith.constant 0 : i32
    %c0_i32_0 = arith.constant 0 : i32
    return %arg0, %arg1, %c0_i32 : i32, i32, i32
  }
}

module attributes {stable_mosaic.version = 11 : i64} {
  func.func @_out_kernel(%arg0: i32, %arg1: memref<16x128xbf16, #tpu.memory_space<vmem>>, %arg2: memref<128x32xbf16, #tpu.memory_space<vmem>>, %arg3: memref<128x32xf32, #tpu.memory_space<vmem>>, %arg4: memref<16x1xf32, #tpu.memory_space<vmem>>, %arg5: memref<16x1xf32, #tpu.memory_space<vmem>>, %arg6: memref<16x32xbf16, #tpu.memory_space<vmem>>, %arg7: memref<1x32xf32, #tpu.memory_space<vmem>>, %arg8: memref<128x32xf32, #tpu.memory_space<vmem>>) attributes {dimension_semantics = [#tpu.dimension_semantics<parallel>], iteration_bounds = array<i64: 2>, scalar_prefetch = 0 : i64, scratch_operands = 0 : i64, tpu.core_type = #tpu.core_type<tc>, window_params = [{transform_indices = @transform_0, window_bounds = array<i64: 16, 128>}, {transform_indices = @transform_1, window_bounds = array<i64: 128, 32>}, {transform_indices = @transform_2, window_bounds = array<i64: 128, 32>}, {pipeline_mode = #tpu.pipeline_mode<synchronous>, transform_indices = @transform_3, window_bounds = array<i64: 16, 1>}, {pipeline_mode = #tpu.pipeline_mode<synchronous>, transform_indices = @transform_4, window_bounds = array<i64: 16, 1>}, {pipeline_mode = #tpu.pipeline_mode<synchronous>, transform_indices = @transform_5, window_bounds = array<i64: 16, 32>}, {pipeline_mode = #tpu.pipeline_mode<synchronous>, transform_indices = @transform_6, window_bounds = array<i64: 1, 32>}, {transform_indices = @transform_7, window_bounds = array<i64: 128, 32>}]} {
    %c0 = arith.constant 0 : index
    %c0_0 = arith.constant 0 : index
    %0 = vector.load %arg1[%c0, %c0_0] : memref<16x128xbf16, #tpu.memory_space<vmem>>, vector<16x128xbf16>
    %1 = arith.extf %0 : vector<16x128xbf16> to vector<16x128xf32>
    %cst = arith.constant dense<0.000000e+00> : vector<128xf32>
    %2 = vector.multi_reduction <add>, %1, %cst [0] : vector<16x128xf32> to vector<128xf32>
    %3 = vector.shape_cast %2 : vector<128xf32> to vector<1x128xf32>
    %cst_1 = arith.constant 1.600000e+01 : f32
    %4 = vector.broadcast %cst_1 : f32 to vector<1x128xf32>
    %5 = arith.divf %3, %4 : vector<1x128xf32>
    %6 = vector.broadcast %5 : vector<1x128xf32> to vector<16x128xf32>
    %7 = arith.subf %1, %6 : vector<16x128xf32>
    %8 = arith.mulf %7, %7 : vector<16x128xf32>
    %cst_2 = arith.constant dense<0.000000e+00> : vector<128xf32>
    %9 = vector.multi_reduction <add>, %8, %cst_2 [0] : vector<16x128xf32> to vector<128xf32>
    %10 = vector.shape_cast %9 : vector<128xf32> to vector<1x128xf32>
    %cst_3 = arith.constant 1.600000e+01 : f32
    %11 = vector.broadcast %cst_3 : f32 to vector<1x128xf32>
    %12 = arith.divf %10, %11 : vector<1x128xf32>
    %13 = vector.broadcast %5 : vector<1x128xf32> to vector<16x128xf32>
    %14 = arith.subf %1, %13 : vector<16x128xf32>
    %cst_4 = arith.constant 9.99999974E-6 : f32
    %15 = vector.broadcast %cst_4 : f32 to vector<1x128xf32>
    %16 = arith.addf %12, %15 : vector<1x128xf32>
    %17 = math.rsqrt %16 : vector<1x128xf32>
    %18 = vector.broadcast %17 : vector<1x128xf32> to vector<16x128xf32>
    %19 = arith.mulf %14, %18 : vector<16x128xf32>
    %c0_5 = arith.constant 0 : index
    %c0_6 = arith.constant 0 : index
    %20 = vector.load %arg4[%c0_5, %c0_6] : memref<16x1xf32, #tpu.memory_space<vmem>>, vector<16x1xf32>
    %21 = vector.broadcast %20 : vector<16x1xf32> to vector<16x128xf32>
    %22 = arith.mulf %19, %21 : vector<16x128xf32>
    %c0_7 = arith.constant 0 : index
    %c0_8 = arith.constant 0 : index
    %23 = vector.load %arg5[%c0_7, %c0_8] : memref<16x1xf32, #tpu.memory_space<vmem>>, vector<16x1xf32>
    %24 = vector.broadcast %23 : vector<16x1xf32> to vector<16x128xf32>
    %25 = arith.addf %22, %24 : vector<16x128xf32>
    %26 = arith.truncf %25 : vector<16x128xf32> to vector<16x128xbf16>
    %c0_9 = arith.constant 0 : index
    %c0_10 = arith.constant 0 : index
    %27 = vector.load %arg6[%c0_9, %c0_10] : memref<16x32xbf16, #tpu.memory_space<vmem>>, vector<16x32xbf16>
    %cst_11 = arith.constant dense<0.000000e+00> : vector<128x32xf32>
    %28 = tpu.matmul %26, %27, %cst_11 {dimension_numbers = #tpu.dot_dimension_numbers<[0], [0], [1], [1], [0, 1, 1, 1], [], []>} : vector<16x128xbf16>, vector<16x32xbf16>, vector<128x32xf32> -> vector<128x32xf32>
    %c0_12 = arith.constant 0 : index
    %c0_13 = arith.constant 0 : index
    %29 = vector.load %arg7[%c0_12, %c0_13] : memref<1x32xf32, #tpu.memory_space<vmem>>, vector<1x32xf32>
    %30 = vector.broadcast %29 : vector<1x32xf32> to vector<128x32xf32>
    %31 = arith.addf %28, %30 : vector<128x32xf32>
    %c0_14 = arith.constant 0 : index
    %c0_15 = arith.constant 0 : index
    %32 = vector.load %arg3[%c0_14, %c0_15] : memref<128x32xf32, #tpu.memory_space<vmem>>, vector<128x32xf32>
    %c0_16 = arith.constant 0 : index
    %c0_17 = arith.constant 0 : index
    %33 = vector.load %arg2[%c0_16, %c0_17] : memref<128x32xbf16, #tpu.memory_space<vmem>>, vector<128x32xbf16>
    %34 = arith.extf %33 : vector<128x32xbf16> to vector<128x32xf32>
    %35 = arith.mulf %31, %34 : vector<128x32xf32>
    %36 = arith.addf %32, %35 : vector<128x32xf32>
    %c0_18 = arith.constant 0 : index
    %c0_19 = arith.constant 0 : index
    %37 = vector.load %arg8[%c0_18, %c0_19] : memref<128x32xf32, #tpu.memory_space<vmem>>, vector<128x32xf32>
    tpu.vector_store %arg8[%c0_18, %c0_19], %36 {strides = array<i32>} : memref<128x32xf32, #tpu.memory_space<vmem>>, vector<128x32xf32>,
    return
  }
  func.func @transform_0(%arg0: i32) -> (i32, i32) {
    %c0_i32 = arith.constant 0 : i32
    %c0_i32_0 = arith.constant 0 : i32
    return %c0_i32, %arg0 : i32, i32
  }
  func.func @transform_1(%arg0: i32) -> (i32, i32) {
    %c0_i32 = arith.constant 0 : i32
    %c0_i32_0 = arith.constant 0 : i32
    return %arg0, %c0_i32 : i32, i32
  }
  func.func @transform_2(%arg0: i32) -> (i32, i32) {
    %c0_i32 = arith.constant 0 : i32
    %c0_i32_0 = arith.constant 0 : i32
    return %arg0, %c0_i32 : i32, i32
  }
  func.func @transform_3(%arg0: i32) -> (i32, i32) {
    %c0_i32 = arith.constant 0 : i32
    %c0_i32_0 = arith.constant 0 : i32
    %c0_i32_1 = arith.constant 0 : i32
    return %c0_i32, %c0_i32_0 : i32, i32
  }
  func.func @transform_4(%arg0: i32) -> (i32, i32) {
    %c0_i32 = arith.constant 0 : i32
    %c0_i32_0 = arith.constant 0 : i32
    %c0_i32_1 = arith.constant 0 : i32
    return %c0_i32, %c0_i32_0 : i32, i32
  }
  func.func @transform_5(%arg0: i32) -> (i32, i32) {
    %c0_i32 = arith.constant 0 : i32
    %c0_i32_0 = arith.constant 0 : i32
    %c0_i32_1 = arith.constant 0 : i32
    return %c0_i32, %c0_i32_0 : i32, i32
  }
  func.func @transform_6(%arg0: i32) -> (i32, i32) {
    %c0_i32 = arith.constant 0 : i32
    %c0_i32_0 = arith.constant 0 : i32
    %c0_i32_1 = arith.constant 0 : i32
    return %c0_i32, %c0_i32_0 : i32, i32
  }
  func.func @transform_7(%arg0: i32) -> (i32, i32) {
    %c0_i32 = arith.constant 0 : i32
    %c0_i32_0 = arith.constant 0 : i32
    return %arg0, %c0_i32 : i32, i32
  }
}

</mosaic_0001>

<llo_original>
// kernel: tri_model_forward.7
$region0: #{tri_model_forward.7}
  #allocation0 [shape = 'u32[]', space=smem, size = 0x4, offset = 0x4, fixed_abs, tag = 'smem constant byte address 0x4 - core index']
  #allocation1 [shape = 'u32[72,128]{1,0:T(1,128)}', space=vmem, size = 0x9000, scoped, tag = 'internal scratch']
  %s0 = inlined_call_operand.vmem [shape: bf16[16,16,16], index: 0, kind: input, shape index: {}]
  %s1 = inlined_call_operand.vmem [shape: bf16[16,16,16], index: 1, kind: input, shape index: {}]
  %s2 = inlined_call_operand.vmem [shape: bf16[16,16,16], index: 2, kind: output, shape index: {}]
  %s3 = sld [smem:[#allocation0]]
  $region41: #{tri_model_forward.7} parent=0
    _
  %s5 = ssub.s32 1, %s3
  %s6 = scalar_select 0, %s5, %s3
  loop: start=0, step=1, limit=4
  $region2: #{tri_model_forward.7} parent=0 // loop_pre_header
    _
  $region3: #{tri_model_forward.7} parent=0 // loop_header
    %s8 = sphi 0, %s12
    %p9 = scmp.ge.s32.totalorder %s8, 4
    %s15 = sphi 0, %s27
    %s16 = sphi 0, %s23
    %s17 = sphi 0, %s15
    %s18 = sphi 0, %s16
    %s19 = sphi 0, %s17
    %s20 = sphi 0, %s18
    %s32 = sphi 0, %s34
    %s35 = sphi 0, %s32
    %s36 = sphi 0, %s35
    %s52 = sphi 0, %s36
    %s58 = sphi 0, %s60
    %s61 = sphi 0, %s58
    %s62 = sphi 0, %s61
    %s78 = sphi 0, %s62
    %s86 = sphi 0, %s88
    %s89 = sphi 0, %s86
    %s90 = sphi 0, %s89
    %s106 = sphi 0, %s90
  $region4: #{tri_model_forward.7} parent=0 // loop_header_branch
    %11 = sbr.rel (%p9) target = $region8
  $region5: #{tri_model_forward.7} parent=0 // loop_body
    %s13 = ssub.s32 %s8, 1
    %s14 = ssub.s32 %s8, 2
    %s21 = sadd.s32 1, %s16
    %p22 = scmp.ge.s32.totalorder %s21, 1
    %s23 = scalar_select %p22, 0, %s21
    %s24 = sadd.s32 1, %s15
    %s25 = scalar_select %p22, %s24, %s15
    %p26 = scmp.ge.s32.totalorder %s25, 2
    %s27 = scalar_select %p26, 0, %s25
    %s28 = ssub.s32 %s15, %s27
    %s29 = ssub.s32 %s16, %s23
    %s30 = sor.u32 %s28, %s29
    %p31 = scmp.eq.s32.totalorder %s30, 0
    %s33 = sadd.s32 %s32, 1
    %s34 = scalar_select %p31, %s32, %s33
    %p37 = pneg %p31
    %p38 = scmp.eq.s32.totalorder %s8, 1
    %p39 = por %p37, %p38
    %p40 = scmp.ne.s32.totalorder %s32, %s35
    %p41 = scmp.eq.s32.totalorder %s8, 0
    %p42 = por %p40, %p41
    %p43 = scmp.ne.s32.totalorder %s32, %s35
    %p44 = scmp.eq.s32.totalorder %s13, 1
    %p45 = por %p43, %p44
    %p46 = scmp.ne.s32.totalorder %s35, %s36
    %p47 = scmp.eq.s32.totalorder %s13, 0
    %p48 = por %p46, %p47
    %p49 = scmp.ne.s32.totalorder %s35, %s36
    %p50 = scmp.eq.s32.totalorder %s14, 1
    %p51 = por %p49, %p50
    %p53 = scmp.ne.s32.totalorder %s36, %s52
    %p54 = scmp.eq.s32.totalorder %s14, 0
    %p55 = por %p53, %p54
    %s56 = ssub.s32 %s15, %s27
    %p57 = scmp.eq.s32.totalorder %s56, 0
    %s59 = sadd.s32 %s58, 1
    %s60 = scalar_select %p57, %s58, %s59
    %p63 = pneg %p57
    %p64 = scmp.eq.s32.totalorder %s8, 1
    %p65 = por %p63, %p64
    %p66 = scmp.ne.s32.totalorder %s58, %s61
    %p67 = scmp.eq.s32.totalorder %s8, 0
    %p68 = por %p66, %p67
    %p69 = scmp.ne.s32.totalorder %s58, %s61
    %p70 = scmp.eq.s32.totalorder %s13, 1
    %p71 = por %p69, %p70
    %p72 = scmp.ne.s32.totalorder %s61, %s62
    %p73 = scmp.eq.s32.totalorder %s13, 0
    %p74 = por %p72, %p73
    %p75 = scmp.ne.s32.totalorder %s61, %s62
    %p76 = scmp.eq.s32.totalorder %s14, 1
    %p77 = por %p75, %p76
    %p79 = scmp.ne.s32.totalorder %s62, %s78
    %p80 = scmp.eq.s32.totalorder %s14, 0
    %p81 = por %p79, %p80
    %s82 = ssub.s32 %s15, %s27
    %s83 = ssub.s32 %s16, %s23
    %s84 = sor.u32 %s82, %s83
    %p85 = scmp.eq.s32.totalorder %s84, 0
    %s87 = sadd.s32 %s86, 1
    %s88 = scalar_select %p85, %s86, %s87
    %p91 = pneg %p85
    %p92 = scmp.eq.s32.totalorder %s8, 1
    %p93 = por %p91, %p92
    %p94 = scmp.ne.s32.totalorder %s86, %s89
    %p95 = scmp.eq.s32.totalorder %s8, 0
    %p96 = por %p94, %p95
    %p97 = scmp.ne.s32.totalorder %s86, %s89
    %p98 = scmp.eq.s32.totalorder %s13, 1
    %p99 = por %p97, %p98
    %p100 = scmp.ne.s32.totalorder %s89, %s90
    %p101 = scmp.eq.s32.totalorder %s13, 0
    %p102 = por %p100, %p101
    %p103 = scmp.ne.s32.totalorder %s89, %s90
    %p104 = scmp.eq.s32.totalorder %s14, 1
    %p105 = por %p103, %p104
    %p107 = scmp.ne.s32.totalorder %s90, %s106
    %p108 = scmp.eq.s32.totalorder %s14, 0
    %p109 = por %p107, %p108
    %p110 = scmp.le.s32.totalorder 1, %s8
    %p111 = scmp.lt.s32.totalorder %s8, 3
    %p112 = pnand %p110, %p111
    %p113 = pneg %p112
    // Predicated region
    $region9: #{tri_model_forward.7} parent=5 // pred_check
      _
    $region10: #{tri_model_forward.7} parent=5 // pred_check_branch
      %115 = sbr.rel (%p112) target = $region12
    $region11: #{tri_model_forward.7} parent=5 // pred_region
      %s116 = ssub.s32 %s8, 1
    $region12: #{tri_model_forward.7} parent=5 // pred_fallthru
      _
    %p117 = scmp.lt.s32.totalorder %s8, 2
    // Predicated region
    $region13: #{tri_model_forward.7} parent=5 // pred_check
      %p118 = pneg %p117
    $region14: #{tri_model_forward.7} parent=5 // pred_check_branch
      %120 = sbr.rel (%p118) target = $region16
    $region15: #{tri_model_forward.7} parent=5 // pred_region
      // Predicated region
      $region17: #{tri_model_forward.7} parent=15 // pred_check
        %p121 = pneg %p42
      $region18: #{tri_model_forward.7} parent=15 // pred_check_branch
        %123 = sbr.rel (%p121) target = $region20
      $region19: #{tri_model_forward.7} parent=15 // pred_region
        %s124 = smul.u32 8, %s15
        %p125 = scmp.lt.s32.totalorder %s124, 15
        %s126 = scalar_select %p125, %s124, 15
        %p127 = scmp.lt.s32.totalorder %s16, 0
        %s128 = scalar_select %p127, %s16, 0
        %s129 = smul.addr %s126, 2
        %s130 = sadd.s32 %s128, %s129
        %s131 = smul.addr %s130, 4
        %s132 = scalar_lea.vmem %s0, %s131
        %s133 = smul.u32 8, %s15
      $region20: #{tri_model_forward.7} parent=15 // pred_fallthru
        _
      // Predicated region
      $region21: #{tri_model_forward.7} parent=15 // pred_check
        %p134 = pneg %p68
      $region22: #{tri_model_forward.7} parent=15 // pred_check_branch
        %136 = sbr.rel (%p134) target = $region24
      $region23: #{tri_model_forward.7} parent=15 // pred_region
        %s137 = smul.u32 8, %s15
        %p138 = scmp.lt.s32.totalorder %s137, 15
        %s139 = scalar_select %p138, %s137, 15
        %s140 = smul.addr %s139, 2
        %s141 = smul.addr %s140, 4
        %s142 = scalar_lea.vmem %s1, %s141
        %s143 = smul.u32 8, %s15
      $region24: #{tri_model_forward.7} parent=15 // pred_fallthru
        _
    $region16: #{tri_model_forward.7} parent=5 // pred_fallthru
      _
    %p144 = scmp.le.s32.totalorder 1, %s8
    %p145 = scmp.lt.s32.totalorder %s8, 3
    %p146 = pnand %p144, %p145
    %p147 = pneg %p146
    // Predicated region
    $region25: #{tri_model_forward.7} parent=5 // pred_check
      _
    $region26: #{tri_model_forward.7} parent=5 // pred_check_branch
      %149 = sbr.rel (%p146) target = $region28
    $region27: #{tri_model_forward.7} parent=5 // pred_region
      %s150 = ssub.s32 %s8, 1
      %s151 = smul.u32 8, %s17
      %p152 = scmp.lt.s32.totalorder %s151, 15
      %s153 = scalar_select %p152, %s151, 15
      %p154 = scmp.lt.s32.totalorder %s18, 0
      %s155 = scalar_select %p154, %s18, 0
      %s156 = smul.addr %s153, 2
      %s157 = sadd.s32 %s155, %s156
      %s158 = smul.addr %s157, 4
      %s159 = scalar_lea.vmem %s0, %s158
      %p160 = pneg %p48
      %p161 = pneg %p45
      %s162 = smul.u32 8, %s17
      %p163 = scmp.lt.s32.totalorder %s162, 15
      %s164 = scalar_select %p163, %s162, 15
      %s165 = smul.addr %s164, 2
      %s166 = smul.addr %s165, 4
      %s167 = scalar_lea.vmem %s1, %s166
      %p168 = pneg %p74
      %p169 = pneg %p71
      %p170 = pneg %p102
      %p171 = pneg %p99
      %s172 = smul.u32 8, %s17
      %s173 = smul.u32 2, %s18
      %p174 = scmp.lt.s32.totalorder %s172, 15
      %s175 = scalar_select %p174, %s172, 15
      %p176 = scmp.lt.s32.totalorder %s173, 1
      %s177 = scalar_select %p176, %s173, 1
      %s178 = smul.addr %s175, 2
      %s179 = sadd.s32 %s177, %s178
      %s180 = smul.addr %s179, 4
      %s181 = scalar_lea.vmem %s2, %s180
      %s182 = smul.u32 8, %s17
      %p183 = scmp.lt.s32.totalorder %s182, 15
      %s184 = scalar_select %p183, %s182, 15
      %p185 = scmp.lt.s32.totalorder %s18, 0
      %s186 = scalar_select %p185, %s18, 0
      %s187 = smul.addr %s184, 2
      %s188 = sadd.s32 %s186, %s187
      %s189 = smul.addr %s188, 4
      %s190 = scalar_lea.vmem %s0, %s189
      %s191 = smul.u32 8, %s17
      %s192 = smul.u32 8, %s17
      %p193 = scmp.lt.s32.totalorder %s192, 15
      %s194 = scalar_select %p193, %s192, 15
      %s195 = smul.addr %s194, 2
      %s196 = smul.addr %s195, 4
      %s197 = scalar_lea.vmem %s1, %s196
      %s198 = smul.u32 8, %s17
      %s199 = smul.u32 8, %s17
      %s200 = smul.u32 2, %s18
      %p201 = scmp.lt.s32.totalorder %s199, 15
      %s202 = scalar_select %p201, %s199, 15
      %p203 = scmp.lt.s32.totalorder %s200, 1
      %s204 = scalar_select %p203, %s200, 1
      %s205 = smul.addr %s202, 2
      %s206 = sadd.s32 %s204, %s205
      %s207 = smul.addr %s206, 4
      %s208 = scalar_lea.vmem %s2, %s207
      %s209 = smul.u32 8, %s17
      %s210 = smul.u32 2, %s18
      %v212 = vld [vmem:[%s190] sm:$0xf]
      %v213 = vld [vmem:[%s190 + $0x4] sm:$0xf]
      %v214 = vld [vmem:[%s190 + $0x8] sm:$0xf]
      %v215 = vld [vmem:[%s190 + $0xc] sm:$0xf]
      %v216 = vld [vmem:[%s190 + $0x10] sm:$0xf]
      %v217 = vld [vmem:[%s190 + $0x14] sm:$0xf]
      %v218 = vld [vmem:[%s190 + $0x18] sm:$0xf]
      %v219 = vld [vmem:[%s190 + $0x1c] sm:$0xf]
      %v220 = vld [vmem:[%s190 + $0x20] sm:$0xf]
      %v221 = vld [vmem:[%s190 + $0x24] sm:$0xf]
      %v222 = vld [vmem:[%s190 + $0x28] sm:$0xf]
      %v223 = vld [vmem:[%s190 + $0x2c] sm:$0xf]
      %v224 = vld [vmem:[%s190 + $0x30] sm:$0xf]
      %v225 = vld [vmem:[%s190 + $0x34] sm:$0xf]
      %v226 = vld [vmem:[%s190 + $0x38] sm:$0xf]
      %v227 = vld [vmem:[%s190 + $0x3c] sm:$0xf]
      %v228 = vld [vmem:[%s197] sm:$0xf]
      %v229 = vld [vmem:[%s197 + $0x4] sm:$0xf]
      %v230 = vld [vmem:[%s197 + $0x8] sm:$0xf]
      %v231 = vld [vmem:[%s197 + $0xc] sm:$0xf]
      %v232 = vld [vmem:[%s197 + $0x10] sm:$0xf]
      %v233 = vld [vmem:[%s197 + $0x14] sm:$0xf]
      %v234 = vld [vmem:[%s197 + $0x18] sm:$0xf]
      %v235 = vld [vmem:[%s197 + $0x1c] sm:$0xf]
      %v236 = vld [vmem:[%s197 + $0x20] sm:$0xf]
      %v237 = vld [vmem:[%s197 + $0x24] sm:$0xf]
      %v238 = vld [vmem:[%s197 + $0x28] sm:$0xf]
      %v239 = vld [vmem:[%s197 + $0x2c] sm:$0xf]
      %v240 = vld [vmem:[%s197 + $0x30] sm:$0xf]
      %v241 = vld [vmem:[%s197 + $0x34] sm:$0xf]
      %v242 = vld [vmem:[%s197 + $0x38] sm:$0xf]
      %v243 = vld [vmem:[%s197 + $0x3c] sm:$0xf]
      %v246 = vunpack.c.l.b16 %v212
      %v247 = vunpack.c.l.b16 %v213
      %v248 = vpack.c.b16 %v247, %v246
      %250 = vxpose.xlu0.c.b16.start [1/8] %v248, 128
      %251 = vxpose.xlu0.c.b16.cont [2/8] 0, 128
      %252 = vxpose.xlu0.c.b16.cont [3/8] 0, 128
      %253 = vxpose.xlu0.c.b16.cont [4/8] 0, 128
      %254 = vxpose.xlu0.c.b16.cont [5/8] 0, 128
      %255 = vxpose.xlu0.c.b16.cont [6/8] 0, 128
      %256 = vxpose.xlu0.c.b16.cont [7/8] 0, 128
      %257 = vxpose.xlu0.c.b16.end [8/8] 0, 128
      %v258 = vpop.trf.xlu0
      %v259 = vpop.trf.xlu0
      %v260 = vpop.trf.xlu0
      %v261 = vpop.trf.xlu0
      %v262 = vpop.trf.xlu0
      %v263 = vpop.trf.xlu0
      %v264 = vpop.trf.xlu0
      %v265 = vpop.trf.xlu0
      %v268 = vunpack.c.l.b16 %v228
      %v269 = vunpack.c.l.b16 %v229
      %v270 = vpack.c.b16 %v269, %v268
      %vm272 = vcmask 130048
      %v274 = vsel %vm272, %v258, 0
      %276 = vmatpush.bf16.msra.mxu0 0
      %277 = vmatpush.bf16.msra.mxu0 0
      %278 = vmatpush.bf16.msra.mxu0 0
      %279 = vmatpush.bf16.msra.mxu0 0
      %280 = vmatpush.bf16.msra.mxu0 0
      %281 = vmatpush.bf16.msra.mxu0 0
      %282 = vmatpush.bf16.msra.mxu0 0
      %283 = vmatpush.bf16.msra.mxu0 %v270
      %284 = vmatmul.bf16.gmra.mxu0 %v274
      %v285 = vpop.f32.mrf.mxu0
      %v286 = vadd.f32 0.0, %v285
      %v287 = vpop.f32.mrf.mxu0
      %v288 = vadd.f32 0.0, %v287
      %289 = vdwg.mxu0
      %v292 = vunpack.c.l.b16 %v214
      %v293 = vunpack.c.l.b16 %v215
      %v294 = vpack.c.b16 %v293, %v292
      %296 = vxpose.xlu0.c.b16.start [1/8] %v294, 128
      %297 = vxpose.xlu0.c.b16.cont [2/8] 0, 128
      %298 = vxpose.xlu0.c.b16.cont [3/8] 0, 128
      %299 = vxpose.xlu0.c.b16.cont [4/8] 0, 128
      %300 = vxpose.xlu0.c.b16.cont [5/8] 0, 128
      %301 = vxpose.xlu0.c.b16.cont [6/8] 0, 128
      %302 = vxpose.xlu0.c.b16.cont [7/8] 0, 128
      %303 = vxpose.xlu0.c.b16.end [8/8] 0, 128
      %v304 = vpop.trf.xlu0
      %v305 = vpop.trf.xlu0
      %v306 = vpop.trf.xlu0
      %v307 = vpop.trf.xlu0
      %v308 = vpop.trf.xlu0
      %v309 = vpop.trf.xlu0
      %v310 = vpop.trf.xlu0
      %v311 = vpop.trf.xlu0
      %v314 = vunpack.c.l.b16 %v230
      %v315 = vunpack.c.l.b16 %v231
      %v316 = vpack.c.b16 %v315, %v314
      %v319 = vsel %vm272, %v304, 0
      %321 = vmatpush.bf16.msra.mxu0 0
      %322 = vmatpush.bf16.msra.mxu0 0
      %323 = vmatpush.bf16.msra.mxu0 0
      %324 = vmatpush.bf16.msra.mxu0 0
      %325 = vmatpush.bf16.msra.mxu0 0
      %326 = vmatpush.bf16.msra.mxu0 0
      %327 = vmatpush.bf16.msra.mxu0 0
      %328 = vmatpush.bf16.msra.mxu0 %v316
      %329 = vmatmul.bf16.gmra.mxu0 %v319
      %v330 = vpop.f32.mrf.mxu0
      %v331 = vadd.f32 0.0, %v330
      %v332 = vpop.f32.mrf.mxu0
      %v333 = vadd.f32 0.0, %v332
      %334 = vdwg.mxu0
      %v337 = vunpack.c.l.b16 %v216
      %v338 = vunpack.c.l.b16 %v217
      %v339 = vpack.c.b16 %v338, %v337
      %341 = vxpose.xlu0.c.b16.start [1/8] %v339, 128
      %342 = vxpose.xlu0.c.b16.cont [2/8] 0, 128
      %343 = vxpose.xlu0.c.b16.cont [3/8] 0, 128
      %344 = vxpose.xlu0.c.b16.cont [4/8] 0, 128
      %345 = vxpose.xlu0.c.b16.cont [5/8] 0, 128
      %346 = vxpose.xlu0.c.b16.cont [6/8] 0, 128
      %347 = vxpose.xlu0.c.b16.cont [7/8] 0, 128
      %348 = vxpose.xlu0.c.b16.end [8/8] 0, 128
      %v349 = vpop.trf.xlu0
      %v350 = vpop.trf.xlu0
      %v351 = vpop.trf.xlu0
      %v352 = vpop.trf.xlu0
      %v353 = vpop.trf.xlu0
      %v354 = vpop.trf.xlu0
      %v355 = vpop.trf.xlu0
      %v356 = vpop.trf.xlu0
      %v359 = vunpack.c.l.b16 %v232
      %v360 = vunpack.c.l.b16 %v233
      %v361 = vpack.c.b16 %v360, %v359
      %v364 = vsel %vm272, %v349, 0
      %366 = vmatpush.bf16.msra.mxu0 0
      %367 = vmatpush.bf16.msra.mxu0 0
      %368 = vmatpush.bf16.msra.mxu0 0
      %369 = vmatpush.bf16.msra.mxu0 0
      %370 = vmatpush.bf16.msra.mxu0 0
      %371 = vmatpush.bf16.msra.mxu0 0
      %372 = vmatpush.bf16.msra.mxu0 0
      %373 = vmatpush.bf16.msra.mxu0 %v361
      %374 = vmatmul.bf16.gmra.mxu0 %v364
      %v375 = vpop.f32.mrf.mxu0
      %v376 = vadd.f32 0.0, %v375
      %v377 = vpop.f32.mrf.mxu0
      %v378 = vadd.f32 0.0, %v377
      %379 = vdwg.mxu0
      %v382 = vunpack.c.l.b16 %v218
      %v383 = vunpack.c.l.b16 %v219
      %v384 = vpack.c.b16 %v383, %v382
      %386 = vxpose.xlu0.c.b16.start [1/8] %v384, 128
      %387 = vxpose.xlu0.c.b16.cont [2/8] 0, 128
      %388 = vxpose.xlu0.c.b16.cont [3/8] 0, 128
      %389 = vxpose.xlu0.c.b16.cont [4/8] 0, 128
      %390 = vxpose.xlu0.c.b16.cont [5/8] 0, 128
      %391 = vxpose.xlu0.c.b16.cont [6/8] 0, 128
      %392 = vxpose.xlu0.c.b16.cont [7/8] 0, 128
      %393 = vxpose.xlu0.c.b16.end [8/8] 0, 128
      %v394 = vpop.trf.xlu0
      %v395 = vpop.trf.xlu0
      %v396 = vpop.trf.xlu0
      %v397 = vpop.trf.xlu0
      %v398 = vpop.trf.xlu0
      %v399 = vpop.trf.xlu0
      %v400 = vpop.trf.xlu0
      %v401 = vpop.trf.xlu0
      %v404 = vunpack.c.l.b16 %v234
      %v405 = vunpack.c.l.b16 %v235
      %v406 = vpack.c.b16 %v405, %v404
      %v409 = vsel %vm272, %v394, 0
      %411 = vmatpush.bf16.msra.mxu0 0
      %412 = vmatpush.bf16.msra.mxu0 0
      %413 = vmatpush.bf16.msra.mxu0 0
      %414 = vmatpush.bf16.msra.mxu0 0
      %415 = vmatpush.bf16.msra.mxu0 0
      %416 = vmatpush.bf16.msra.mxu0 0
      %417 = vmatpush.bf16.msra.mxu0 0
      %418 = vmatpush.bf16.msra.mxu0 %v406
      %419 = vmatmul.bf16.gmra.mxu0 %v409
      %v420 = vpop.f32.mrf.mxu0
      %v421 = vadd.f32 0.0, %v420
      %v422 = vpop.f32.mrf.mxu0
      %v423 = vadd.f32 0.0, %v422
      %424 = vdwg.mxu0
      %v427 = vunpack.c.l.b16 %v220
      %v428 = vunpack.c.l.b16 %v221
      %v429 = vpack.c.b16 %v428, %v427
      %431 = vxpose.xlu0.c.b16.start [1/8] %v429, 128
      %432 = vxpose.xlu0.c.b16.cont [2/8] 0, 128
      %433 = vxpose.xlu0.c.b16.cont [3/8] 0, 128
      %434 = vxpose.xlu0.c.b16.cont [4/8] 0, 128
      %435 = vxpose.xlu0.c.b16.cont [5/8] 0, 128
      %436 = vxpose.xlu0.c.b16.cont [6/8] 0, 128
      %437 = vxpose.xlu0.c.b16.cont [7/8] 0, 128
      %438 = vxpose.xlu0.c.b16.end [8/8] 0, 128
      %v439 = vpop.trf.xlu0
      %v440 = vpop.trf.xlu0
      %v441 = vpop.trf.xlu0
      %v442 = vpop.trf.xlu0
      %v443 = vpop.trf.xlu0
      %v444 = vpop.trf.xlu0
      %v445 = vpop.trf.xlu0
      %v446 = vpop.trf.xlu0
      %v449 = vunpack.c.l.b16 %v236
      %v450 = vunpack.c.l.b16 %v237
      %v451 = vpack.c.b16 %v450, %v449
      %v454 = vsel %vm272, %v439, 0
      %456 = vmatpush.bf16.msra.mxu0 0
      %457 = vmatpush.bf16.msra.mxu0 0
      %458 = vmatpush.bf16.msra.mxu0 0
      %459 = vmatpush.bf16.msra.mxu0 0
      %460 = vmatpush.bf16.msra.mxu0 0
      %461 = vmatpush.bf16.msra.mxu0 0
      %462 = vmatpush.bf16.msra.mxu0 0
      %463 = vmatpush.bf16.msra.mxu0 %v451
      %464 = vmatmul.bf16.gmra.mxu0 %v454
      %v465 = vpop.f32.mrf.mxu0
      %v466 = vadd.f32 0.0, %v465
      %v467 = vpop.f32.mrf.mxu0
      %v468 = vadd.f32 0.0, %v467
      %469 = vdwg.mxu0
      %v472 = vunpack.c.l.b16 %v222
      %v473 = vunpack.c.l.b16 %v223
      %v474 = vpack.c.b16 %v473, %v472
      %476 = vxpose.xlu0.c.b16.start [1/8] %v474, 128
      %477 = vxpose.xlu0.c.b16.cont [2/8] 0, 128
      %478 = vxpose.xlu0.c.b16.cont [3/8] 0, 128
      %479 = vxpose.xlu0.c.b16.cont [4/8] 0, 128
      %480 = vxpose.xlu0.c.b16.cont [5/8] 0, 128
      %481 = vxpose.xlu0.c.b16.cont [6/8] 0, 128
      %482 = vxpose.xlu0.c.b16.cont [7/8] 0, 128
      %483 = vxpose.xlu0.c.b16.end [8/8] 0, 128
      %v484 = vpop.trf.xlu0
      %v485 = vpop.trf.xlu0
      %v486 = vpop.trf.xlu0
      %v487 = vpop.trf.xlu0
      %v488 = vpop.trf.xlu0
      %v489 = vpop.trf.xlu0
      %v490 = vpop.trf.xlu0
      %v491 = vpop.trf.xlu0
      %v494 = vunpack.c.l.b16 %v238
      %v495 = vunpack.c.l.b16 %v239
      %v496 = vpack.c.b16 %v495, %v494
      %v499 = vsel %vm272, %v484, 0
      %501 = vmatpush.bf16.msra.mxu0 0
      %502 = vmatpush.bf16.msra.mxu0 0
      %503 = vmatpush.bf16.msra.mxu0 0
      %504 = vmatpush.bf16.msra.mxu0 0
      %505 = vmatpush.bf16.msra.mxu0 0
      %506 = vmatpush.bf16.msra.mxu0 0
      %507 = vmatpush.bf16.msra.mxu0 0
      %508 = vmatpush.bf16.msra.mxu0 %v496
      %509 = vmatmul.bf16.gmra.mxu0 %v499
      %v510 = vpop.f32.mrf.mxu0
      %v511 = vadd.f32 0.0, %v510
      %v512 = vpop.f32.mrf.mxu0
      %v513 = vadd.f32 0.0, %v512
      %514 = vdwg.mxu0
      %v517 = vunpack.c.l.b16 %v224
      %v518 = vunpack.c.l.b16 %v225
      %v519 = vpack.c.b16 %v518, %v517
      %521 = vxpose.xlu0.c.b16.start [1/8] %v519, 128
      %522 = vxpose.xlu0.c.b16.cont [2/8] 0, 128
      %523 = vxpose.xlu0.c.b16.cont [3/8] 0, 128
      %524 = vxpose.xlu0.c.b16.cont [4/8] 0, 128
      %525 = vxpose.xlu0.c.b16.cont [5/8] 0, 128
      %526 = vxpose.xlu0.c.b16.cont [6/8] 0, 128
      %527 = vxpose.xlu0.c.b16.cont [7/8] 0, 128
      %528 = vxpose.xlu0.c.b16.end [8/8] 0, 128
      %v529 = vpop.trf.xlu0
      %v530 = vpop.trf.xlu0
      %v531 = vpop.trf.xlu0
      %v532 = vpop.trf.xlu0
      %v533 = vpop.trf.xlu0
      %v534 = vpop.trf.xlu0
      %v535 = vpop.trf.xlu0
      %v536 = vpop.trf.xlu0
      %v539 = vunpack.c.l.b16 %v240
      %v540 = vunpack.c.l.b16 %v241
      %v541 = vpack.c.b16 %v540, %v539
      %v544 = vsel %vm272, %v529, 0
      %546 = vmatpush.bf16.msra.mxu0 0
      %547 = vmatpush.bf16.msra.mxu0 0
      %548 = vmatpush.bf16.msra.mxu0 0
      %549 = vmatpush.bf16.msra.mxu0 0
      %550 = vmatpush.bf16.msra.mxu0 0
      %551 = vmatpush.bf16.msra.mxu0 0
      %552 = vmatpush.bf16.msra.mxu0 0
      %553 = vmatpush.bf16.msra.mxu0 %v541
      %554 = vmatmul.bf16.gmra.mxu0 %v544
      %v555 = vpop.f32.mrf.mxu0
      %v556 = vadd.f32 0.0, %v555
      %v557 = vpop.f32.mrf.mxu0
      %v558 = vadd.f32 0.0, %v557
      %559 = vdwg.mxu0
      %v562 = vunpack.c.l.b16 %v226
      %v563 = vunpack.c.l.b16 %v227
      %v564 = vpack.c.b16 %v563, %v562
      %566 = vxpose.xlu0.c.b16.start [1/8] %v564, 128
      %567 = vxpose.xlu0.c.b16.cont [2/8] 0, 128
      %568 = vxpose.xlu0.c.b16.cont [3/8] 0, 128
      %569 = vxpose.xlu0.c.b16.cont [4/8] 0, 128
      %570 = vxpose.xlu0.c.b16.cont [5/8] 0, 128
      %571 = vxpose.xlu0.c.b16.cont [6/8] 0, 128
      %572 = vxpose.xlu0.c.b16.cont [7/8] 0, 128
      %573 = vxpose.xlu0.c.b16.end [8/8] 0, 128
      %v574 = vpop.trf.xlu0
      %v575 = vpop.trf.xlu0
      %v576 = vpop.trf.xlu0
      %v577 = vpop.trf.xlu0
      %v578 = vpop.trf.xlu0
      %v579 = vpop.trf.xlu0
      %v580 = vpop.trf.xlu0
      %v581 = vpop.trf.xlu0
      %v584 = vunpack.c.l.b16 %v242
      %v585 = vunpack.c.l.b16 %v243
      %v586 = vpack.c.b16 %v585, %v584
      %v589 = vsel %vm272, %v574, 0
      %591 = vmatpush.bf16.msra.mxu0 0
      %592 = vmatpush.bf16.msra.mxu0 0
      %593 = vmatpush.bf16.msra.mxu0 0
      %594 = vmatpush.bf16.msra.mxu0 0
      %595 = vmatpush.bf16.msra.mxu0 0
      %596 = vmatpush.bf16.msra.mxu0 0
      %597 = vmatpush.bf16.msra.mxu0 0
      %598 = vmatpush.bf16.msra.mxu0 %v586
      %599 = vmatmul.bf16.gmra.mxu0 %v589
      %v600 = vpop.f32.mrf.mxu0
      %v601 = vadd.f32 0.0, %v600
      %v602 = vpop.f32.mrf.mxu0
      %v603 = vadd.f32 0.0, %v602
      %604 = vdwg.mxu0
      %v605 = vpack.c.bf16 %v286, %v286
      %v606 = vpack.c.bf16 %v288, %v288
      %v607 = vpack.c.bf16 %v331, %v331
      %v608 = vpack.c.bf16 %v333, %v333
      %v609 = vpack.c.bf16 %v376, %v376
      %v610 = vpack.c.bf16 %v378, %v378
      %v611 = vpack.c.bf16 %v421, %v421
      %v612 = vpack.c.bf16 %v423, %v423
      %v613 = vpack.c.bf16 %v466, %v466
      %v614 = vpack.c.bf16 %v468, %v468
      %v615 = vpack.c.bf16 %v511, %v511
      %v616 = vpack.c.bf16 %v513, %v513
      %v617 = vpack.c.bf16 %v556, %v556
      %v618 = vpack.c.bf16 %v558, %v558
      %v619 = vpack.c.bf16 %v601, %v601
      %v620 = vpack.c.bf16 %v603, %v603
      %vm621 = vcmask 125952
      %622 = vst.msk [vmem:[%s208] sm:$0xf] %vm621, %v605
      %623 = vst.msk [vmem:[%s208 + $0x4] sm:$0xf] %vm621, %v606
      %624 = vst.msk [vmem:[%s208 + $0x8] sm:$0xf] %vm621, %v607
      %625 = vst.msk [vmem:[%s208 + $0xc] sm:$0xf] %vm621, %v608
      %626 = vst.msk [vmem:[%s208 + $0x10] sm:$0xf] %vm621, %v609
      %627 = vst.msk [vmem:[%s208 + $0x14] sm:$0xf] %vm621, %v610
      %628 = vst.msk [vmem:[%s208 + $0x18] sm:$0xf] %vm621, %v611
      %629 = vst.msk [vmem:[%s208 + $0x1c] sm:$0xf] %vm621, %v612
      %630 = vst.msk [vmem:[%s208 + $0x20] sm:$0xf] %vm621, %v613
      %631 = vst.msk [vmem:[%s208 + $0x24] sm:$0xf] %vm621, %v614
      %632 = vst.msk [vmem:[%s208 + $0x28] sm:$0xf] %vm621, %v615
      %633 = vst.msk [vmem:[%s208 + $0x2c] sm:$0xf] %vm621, %v616
      %634 = vst.msk [vmem:[%s208 + $0x30] sm:$0xf] %vm621, %v617
      %635 = vst.msk [vmem:[%s208 + $0x34] sm:$0xf] %vm621, %v618
      %636 = vst.msk [vmem:[%s208 + $0x38] sm:$0xf] %vm621, %v619
      %637 = vst.msk [vmem:[%s208 + $0x3c] sm:$0xf] %vm621, %v620
      %s638 = smul.u32 8, %s17
      %s639 = smul.u32 2, %s18
      %p640 = scmp.lt.s32.totalorder %s638, 15
      %s641 = scalar_select %p640, %s638, 15
      %p642 = scmp.lt.s32.totalorder %s639, 1
      %s643 = scalar_select %p642, %s639, 1
      %s644 = smul.addr %s641, 2
      %s645 = sadd.s32 %s643, %s644
      %s646 = smul.addr %s645, 4
      %s647 = scalar_lea.vmem %s2, %s646
      // Predicated region
      $region29: #{tri_model_forward.7} parent=27 // pred_check
        %p648 = pneg %p99
      $region30: #{tri_model_forward.7} parent=27 // pred_check_branch
        %650 = sbr.rel (%p648) target = $region32
      $region31: #{tri_model_forward.7} parent=27 // pred_region
        %s651 = smul.u32 8, %s17
        %s652 = smul.u32 2, %s18
      $region32: #{tri_model_forward.7} parent=27 // pred_fallthru
        _
    $region28: #{tri_model_forward.7} parent=5 // pred_fallthru
      _
    %p653 = scmp.le.s32.totalorder 2, %s8
    // Predicated region
    $region33: #{tri_model_forward.7} parent=5 // pred_check
      %p654 = pneg %p653
    $region34: #{tri_model_forward.7} parent=5 // pred_check_branch
      %656 = sbr.rel (%p654) target = $region36
    $region35: #{tri_model_forward.7} parent=5 // pred_region
      %s657 = ssub.s32 %s8, 2
      // Predicated region
      $region37: #{tri_model_forward.7} parent=35 // pred_check
        %p658 = pneg %p105
      $region38: #{tri_model_forward.7} parent=35 // pred_check_branch
        %660 = sbr.rel (%p658) target = $region40
      $region39: #{tri_model_forward.7} parent=35 // pred_region
        %s661 = smul.u32 8, %s19
        %s662 = smul.u32 2, %s20
        %p663 = scmp.lt.s32.totalorder %s661, 15
        %s664 = scalar_select %p663, %s661, 15
        %p665 = scmp.lt.s32.totalorder %s662, 1
        %s666 = scalar_select %p665, %s662, 1
        %s667 = smul.addr %s664, 2
        %s668 = sadd.s32 %s666, %s667
        %s669 = smul.addr %s668, 4
        %s670 = scalar_lea.vmem %s2, %s669
      $region40: #{tri_model_forward.7} parent=35 // pred_fallthru
        _
    $region36: #{tri_model_forward.7} parent=5 // pred_fallthru
      _
  $region6: #{tri_model_forward.7} parent=0 // loop_footer
    %s12 = sadd.s32 1, %s8
  $region7: #{tri_model_forward.7} parent=0 // loop_footer_branch
    %7 = sbr.rel target = $region3
  $region8: #{tri_model_forward.7} parent=0 // loop_exit
    _

// kernel: tri_model_forward.8
$region0: #{tri_model_forward.8}
  #allocation0 [shape = 'u32[]', space=smem, size = 0x4, offset = 0x4, fixed_abs, tag = 'smem constant byte address 0x4 - core index']
  #allocation1 [shape = 'u32[72,128]{1,0:T(1,128)}', space=vmem, size = 0x9000, scoped, tag = 'internal scratch']
  %s0 = inlined_call_operand.vmem [shape: bf16[16,256], index: 0, kind: input, shape index: {}]
  %s1 = inlined_call_operand.vmem [shape: bf16[256,32], index: 1, kind: input, shape index: {}]
  %s2 = inlined_call_operand.vmem [shape: f32[256,32], index: 2, kind: input, shape index: {}]
  %s3 = inlined_call_operand.vmem [shape: f32[16,1], index: 3, kind: input, shape index: {}]
  %s4 = inlined_call_operand.vmem [shape: f32[16,1], index: 4, kind: input, shape index: {}]
  %s5 = inlined_call_operand.vmem [shape: bf16[16,32], index: 5, kind: input, shape index: {}]
  %s6 = inlined_call_operand.vmem [shape: f32[1,32], index: 6, kind: input, shape index: {}]
  %s7 = inlined_call_operand.vmem [shape: f32[256,32], index: 7, kind: output, shape index: {}]
  %s8 = sld [smem:[#allocation0]]
  $region102: #{tri_model_forward.8} parent=0
    _
  %s10 = ssub.s32 1, %s8
  %s11 = scalar_select 0, %s10, %s8
  $region1: #{tri_model_forward.8} parent=0
    #allocation2 [shape = 'u8[8192]{0}', space=vmem, size = 0x2000, scoped, tag = 'input window, operand 0']
    loop: start=0, step=1, limit=4
    $region2: #{tri_model_forward.8} parent=1 // loop_pre_header
      _
    $region3: #{tri_model_forward.8} parent=1 // loop_header
      %s13 = sphi 0, %s17
      %p14 = scmp.ge.s32.totalorder %s13, 4
      %s23 = sphi 0, %s25
      %s26 = sphi 0, %s23
      %s27 = sphi 0, %s26
      %s43 = sphi 0, %s27
      %s49 = sphi 0, %s51
      %s52 = sphi 0, %s49
      %s53 = sphi 0, %s52
      %s69 = sphi 0, %s53
      %s75 = sphi 0, %s77
      %s78 = sphi 0, %s75
      %s79 = sphi 0, %s78
      %s95 = sphi 0, %s79
      %s99 = sphi 0, %s99
      %s101 = sphi 0, %s99
      %s102 = sphi 0, %s101
      %s116 = sphi 0, %s102
      %s120 = sphi 0, %s120
      %s122 = sphi 0, %s120
      %s123 = sphi 0, %s122
      %s137 = sphi 0, %s123
      %s141 = sphi 0, %s141
      %s143 = sphi 0, %s141
      %s144 = sphi 0, %s143
      %s158 = sphi 0, %s144
      %s162 = sphi 0, %s162
      %s164 = sphi 0, %s162
      %s165 = sphi 0, %s164
      %s179 = sphi 0, %s165
      %s185 = sphi 0, %s187
      %s188 = sphi 0, %s185
      %s189 = sphi 0, %s188
      %s205 = sphi 0, %s189
    $region4: #{tri_model_forward.8} parent=1 // loop_header_branch
      %16 = sbr.rel (%p14) target = $region8
    $region5: #{tri_model_forward.8} parent=1 // loop_body
      %s18 = ssub.s32 %s13, 1
      %s19 = ssub.s32 %s13, 2
      %s20 = sadd.s32 %s13, 1
      %s21 = ssub.s32 %s13, %s20
      %p22 = scmp.eq.s32.totalorder %s21, 0
      %s24 = sadd.s32 %s23, 1
      %s25 = scalar_select %p22, %s23, %s24
      %p28 = pneg %p22
      %p29 = scmp.eq.s32.totalorder %s13, 1
      %p30 = por %p28, %p29
      %p31 = scmp.ne.s32.totalorder %s23, %s26
      %p32 = scmp.eq.s32.totalorder %s13, 0
      %p33 = por %p31, %p32
      %p34 = scmp.ne.s32.totalorder %s23, %s26
      %p35 = scmp.eq.s32.totalorder %s18, 1
      %p36 = por %p34, %p35
      %p37 = scmp.ne.s32.totalorder %s26, %s27
      %p38 = scmp.eq.s32.totalorder %s18, 0
      %p39 = por %p37, %p38
      %p40 = scmp.ne.s32.totalorder %s26, %s27
      %p41 = scmp.eq.s32.totalorder %s19, 1
      %p42 = por %p40, %p41
      %p44 = scmp.ne.s32.totalorder %s27, %s43
      %p45 = scmp.eq.s32.totalorder %s19, 0
      %p46 = por %p44, %p45
      %s47 = ssub.s32 %s13, %s20
      %p48 = scmp.eq.s32.totalorder %s47, 0
      %s50 = sadd.s32 %s49, 1
      %s51 = scalar_select %p48, %s49, %s50
      %p54 = pneg %p48
      %p55 = scmp.eq.s32.totalorder %s13, 1
      %p56 = por %p54, %p55
      %p57 = scmp.ne.s32.totalorder %s49, %s52
      %p58 = scmp.eq.s32.totalorder %s13, 0
      %p59 = por %p57, %p58
      %p60 = scmp.ne.s32.totalorder %s49, %s52
      %p61 = scmp.eq.s32.totalorder %s18, 1
      %p62 = por %p60, %p61
      %p63 = scmp.ne.s32.totalorder %s52, %s53
      %p64 = scmp.eq.s32.totalorder %s18, 0
      %p65 = por %p63, %p64
      %p66 = scmp.ne.s32.totalorder %s52, %s53
      %p67 = scmp.eq.s32.totalorder %s19, 1
      %p68 = por %p66, %p67
      %p70 = scmp.ne.s32.totalorder %s53, %s69
      %p71 = scmp.eq.s32.totalorder %s19, 0
      %p72 = por %p70, %p71
      %s73 = ssub.s32 %s13, %s20
      %p74 = scmp.eq.s32.totalorder %s73, 0
      %s76 = sadd.s32 %s75, 1
      %s77 = scalar_select %p74, %s75, %s76
      %p80 = pneg %p74
      %p81 = scmp.eq.s32.totalorder %s13, 1
      %p82 = por %p80, %p81
      %p83 = scmp.ne.s32.totalorder %s75, %s78
      %p84 = scmp.eq.s32.totalorder %s13, 0
      %p85 = por %p83, %p84
      %p86 = scmp.ne.s32.totalorder %s75, %s78
      %p87 = scmp.eq.s32.totalorder %s18, 1
      %p88 = por %p86, %p87
      %p89 = scmp.ne.s32.totalorder %s78, %s79
      %p90 = scmp.eq.s32.totalorder %s18, 0
      %p91 = por %p89, %p90
      %p92 = scmp.ne.s32.totalorder %s78, %s79
      %p93 = scmp.eq.s32.totalorder %s19, 1
      %p94 = por %p92, %p93
      %p96 = scmp.ne.s32.totalorder %s79, %s95
      %p97 = scmp.eq.s32.totalorder %s19, 0
      %p98 = por %p96, %p97
      %s100 = sadd.s32 %s99, 1
      %p103 = scmp.eq.s32.totalorder %s13, 1
      %p104 = scmp.ne.s32.totalorder %s99, %s101
      %p105 = scmp.eq.s32.totalorder %s13, 0
      %p106 = por %p104, %p105
      %p107 = scmp.ne.s32.totalorder %s99, %s101
      %p108 = scmp.eq.s32.totalorder %s18, 1
      %p109 = por %p107, %p108
      %p110 = scmp.ne.s32.totalorder %s101, %s102
      %p111 = scmp.eq.s32.totalorder %s18, 0
      %p112 = por %p110, %p111
      %p113 = scmp.ne.s32.totalorder %s101, %s102
      %p114 = scmp.eq.s32.totalorder %s19, 1
      %p115 = por %p113, %p114
      %p117 = scmp.ne.s32.totalorder %s102, %s116
      %p118 = scmp.eq.s32.totalorder %s19, 0
      %p119 = por %p117, %p118
      %s121 = sadd.s32 %s120, 1
      %p124 = scmp.eq.s32.totalorder %s13, 1
      %p125 = scmp.ne.s32.totalorder %s120, %s122
      %p126 = scmp.eq.s32.totalorder %s13, 0
      %p127 = por %p125, %p126
      %p128 = scmp.ne.s32.totalorder %s120, %s122
      %p129 = scmp.eq.s32.totalorder %s18, 1
      %p130 = por %p128, %p129
      %p131 = scmp.ne.s32.totalorder %s122, %s123
      %p132 = scmp.eq.s32.totalorder %s18, 0
      %p133 = por %p131, %p132
      %p134 = scmp.ne.s32.totalorder %s122, %s123
      %p135 = scmp.eq.s32.totalorder %s19, 1
      %p136 = por %p134, %p135
      %p138 = scmp.ne.s32.totalorder %s123, %s137
      %p139 = scmp.eq.s32.totalorder %s19, 0
      %p140 = por %p138, %p139
      %s142 = sadd.s32 %s141, 1
      %p145 = scmp.eq.s32.totalorder %s13, 1
      %p146 = scmp.ne.s32.totalorder %s141, %s143
      %p147 = scmp.eq.s32.totalorder %s13, 0
      %p148 = por %p146, %p147
      %p149 = scmp.ne.s32.totalorder %s141, %s143
      %p150 = scmp.eq.s32.totalorder %s18, 1
      %p151 = por %p149, %p150
      %p152 = scmp.ne.s32.totalorder %s143, %s144
      %p153 = scmp.eq.s32.totalorder %s18, 0
      %p154 = por %p152, %p153
      %p155 = scmp.ne.s32.totalorder %s143, %s144
      %p156 = scmp.eq.s32.totalorder %s19, 1
      %p157 = por %p155, %p156
      %p159 = scmp.ne.s32.totalorder %s144, %s158
      %p160 = scmp.eq.s32.totalorder %s19, 0
      %p161 = por %p159, %p160
      %s163 = sadd.s32 %s162, 1
      %p166 = scmp.eq.s32.totalorder %s13, 1
      %p167 = scmp.ne.s32.totalorder %s162, %s164
      %p168 = scmp.eq.s32.totalorder %s13, 0
      %p169 = por %p167, %p168
      %p170 = scmp.ne.s32.totalorder %s162, %s164
      %p171 = scmp.eq.s32.totalorder %s18, 1
      %p172 = por %p170, %p171
      %p173 = scmp.ne.s32.totalorder %s164, %s165
      %p174 = scmp.eq.s32.totalorder %s18, 0
      %p175 = por %p173, %p174
      %p176 = scmp.ne.s32.totalorder %s164, %s165
      %p177 = scmp.eq.s32.totalorder %s19, 1
      %p178 = por %p176, %p177
      %p180 = scmp.ne.s32.totalorder %s165, %s179
      %p181 = scmp.eq.s32.totalorder %s19, 0
      %p182 = por %p180, %p181
      %s183 = ssub.s32 %s13, %s20
      %p184 = scmp.eq.s32.totalorder %s183, 0
      %s186 = sadd.s32 %s185, 1
      %s187 = scalar_select %p184, %s185, %s186
      %p190 = pneg %p184
      %p191 = scmp.eq.s32.totalorder %s13, 1
      %p192 = por %p190, %p191
      %p193 = scmp.ne.s32.totalorder %s185, %s188
      %p194 = scmp.eq.s32.totalorder %s13, 0
      %p195 = por %p193, %p194
      %p196 = scmp.ne.s32.totalorder %s185, %s188
      %p197 = scmp.eq.s32.totalorder %s18, 1
      %p198 = por %p196, %p197
      %p199 = scmp.ne.s32.totalorder %s188, %s189
      %p200 = scmp.eq.s32.totalorder %s18, 0
      %p201 = por %p199, %p200
      %p202 = scmp.ne.s32.totalorder %s188, %s189
      %p203 = scmp.eq.s32.totalorder %s19, 1
      %p204 = por %p202, %p203
      %p206 = scmp.ne.s32.totalorder %s189, %s205
      %p207 = scmp.eq.s32.totalorder %s19, 0
      %p208 = por %p206, %p207
      %p209 = scmp.le.s32.totalorder 1, %s13
      %p210 = scmp.lt.s32.totalorder %s13, 3
      %p211 = pnand %p209, %p210
      %p212 = pneg %p211
      // Predicated region
      $region9: #{tri_model_forward.8} parent=5 // pred_check
        _
      $region10: #{tri_model_forward.8} parent=5 // pred_check_branch
        %214 = sbr.rel (%p211) target = $region12
      $region11: #{tri_model_forward.8} parent=5 // pred_region
        %s215 = ssub.s32 %s13, 1
        // Predicated region
        $region13: #{tri_model_forward.8} parent=11 // pred_check
          %p216 = pneg %p112
        $region14: #{tri_model_forward.8} parent=11 // pred_check_branch
          %218 = sbr.rel (%p216) target = $region16
        $region15: #{tri_model_forward.8} parent=11 // pred_region
          _
        $region16: #{tri_model_forward.8} parent=11 // pred_fallthru
          _
        // Predicated region
        $region17: #{tri_model_forward.8} parent=11 // pred_check
          %p219 = pneg %p133
        $region18: #{tri_model_forward.8} parent=11 // pred_check_branch
          %221 = sbr.rel (%p219) target = $region20
        $region19: #{tri_model_forward.8} parent=11 // pred_region
          _
        $region20: #{tri_model_forward.8} parent=11 // pred_fallthru
          _
        // Predicated region
        $region21: #{tri_model_forward.8} parent=11 // pred_check
          %p222 = pneg %p154
        $region22: #{tri_model_forward.8} parent=11 // pred_check_branch
          %224 = sbr.rel (%p222) target = $region24
        $region23: #{tri_model_forward.8} parent=11 // pred_region
          _
        $region24: #{tri_model_forward.8} parent=11 // pred_fallthru
          _
        // Predicated region
        $region25: #{tri_model_forward.8} parent=11 // pred_check
          %p225 = pneg %p175
        $region26: #{tri_model_forward.8} parent=11 // pred_check_branch
          %227 = sbr.rel (%p225) target = $region28
        $region27: #{tri_model_forward.8} parent=11 // pred_region
          _
        $region28: #{tri_model_forward.8} parent=11 // pred_fallthru
          _
      $region12: #{tri_model_forward.8} parent=5 // pred_fallthru
        _
      %p228 = scmp.lt.s32.totalorder %s13, 2
      // Predicated region
      $region29: #{tri_model_forward.8} parent=5 // pred_check
        %p229 = pneg %p228
      $region30: #{tri_model_forward.8} parent=5 // pred_check_branch
        %231 = sbr.rel (%p229) target = $region32
      $region31: #{tri_model_forward.8} parent=5 // pred_region
        // Predicated region
        $region33: #{tri_model_forward.8} parent=31 // pred_check
          %p232 = pneg %p33
        $region34: #{tri_model_forward.8} parent=31 // pred_check_branch
          %234 = sbr.rel (%p232) target = $region36
        $region35: #{tri_model_forward.8} parent=31 // pred_region
          %s235 = sand.u32 %s23, 1
          %s236 = sand.u32 %s23, 1
          %s237 = smul.addr %s236, 8
          %s238 = scalar_lea.vmem [#allocation2], %s237
          %s239 = smul.addr %s13, 4
          %s240 = scalar_lea.vmem %s0, %s239
          // Predicated region
          $region37: #{tri_model_forward.8} parent=35 // pred_check
            _
          $region38: #{tri_model_forward.8} parent=35 // pred_check_branch
            %242 = sbr.rel (0) target = $region40
          $region39: #{tri_model_forward.8} parent=35 // pred_region
            // Predicated region
            $region41: #{tri_model_forward.8} parent=39 // pred_check
              _
            $region42: #{tri_model_forward.8} parent=39 // pred_check_branch
              %244 = sbr.rel target = $region44
            $region43: #{tri_model_forward.8} parent=39 // pred_region
              // Predicated region
              $region56: #{tri_model_forward.8} parent=43 // pred_check
                _
              $region57: #{tri_model_forward.8} parent=43 // pred_check_branch
                %262 = sbr.rel (0) target = $region59
              $region58: #{tri_model_forward.8} parent=43 // pred_region
                loop: start=0, step=1, limit=1
                $region60: #{tri_model_forward.8} parent=58 // loop_pre_header
                  _
                $region61: #{tri_model_forward.8} parent=58 // loop_header
                  %s264 = sphi 0, %s268
                  %p265 = scmp.ge.s32.totalorder %s264, 1
                  %s269 = sphi %s240, %s240
                  %s270 = sphi %s238, %s238
                $region62: #{tri_model_forward.8} parent=58 // loop_header_branch
                  %267 = sbr.rel (%p265) target = $region66
                $region63: #{tri_model_forward.8} parent=58 // loop_body
                  _
                $region64: #{tri_model_forward.8} parent=58 // loop_footer
                  %s268 = sadd.s32 1, %s264
                $region65: #{tri_model_forward.8} parent=58 // loop_footer_branch
                  %263 = sbr.rel target = $region61
                $region66: #{tri_model_forward.8} parent=58 // loop_exit
                  _
                %s272 = ssub.s32 16, 1
                loop: start=0, step=1, limit=1
                $region67: #{tri_model_forward.8} parent=58 // loop_pre_header
                  _
                $region68: #{tri_model_forward.8} parent=58 // loop_header
                  %s274 = sphi 0, %s278
                  %p275 = scmp.ge.s32.totalorder %s274, 1
                  %s279 = sphi %s240, %s240
                  %s280 = sphi %s238, %s238
                $region69: #{tri_model_forward.8} parent=58 // loop_header_branch
                  %277 = sbr.rel (%p275) target = $region73
                $region70: #{tri_model_forward.8} parent=58 // loop_body
                  %v281 = vld [vmem:[%s279] sm:%s272]
                  %282 = vst [vmem:[%s280] sm:%s272] %v281
                  %v283 = vld [vmem:[%s279 + $0x8] sm:%s272]
                  %284 = vst [vmem:[%s280 + $0x4] sm:%s272] %v283
                $region71: #{tri_model_forward.8} parent=58 // loop_footer
                  %s278 = sadd.s32 1, %s274
                $region72: #{tri_model_forward.8} parent=58 // loop_footer_branch
                  %273 = sbr.rel target = $region68
                $region73: #{tri_model_forward.8} parent=58 // loop_exit
                  _
              $region59: #{tri_model_forward.8} parent=43 // pred_fallthru
                _
            $region44: #{tri_model_forward.8} parent=39 // pred_fallthru
              _
            // Predicated region
            $region45: #{tri_model_forward.8} parent=39 // pred_check
              _
            $region46: #{tri_model_forward.8} parent=39 // pred_check_branch
              %246 = sbr.rel (0) target = $region48
            $region47: #{tri_model_forward.8} parent=39 // pred_region
              %s248 = ssub.s32 16, 1
              loop: start=0, step=1, limit=1
              $region49: #{tri_model_forward.8} parent=47 // loop_pre_header
                _
              $region50: #{tri_model_forward.8} parent=47 // loop_header
                %s250 = sphi 0, %s254
                %p251 = scmp.ge.s32.totalorder %s250, 1
                %s255 = sphi %s240, %s240
                %s256 = sphi %s238, %s238
              $region51: #{tri_model_forward.8} parent=47 // loop_header_branch
                %253 = sbr.rel (%p251) target = $region55
              $region52: #{tri_model_forward.8} parent=47 // loop_body
                %v257 = vld [vmem:[%s255] sm:%s248]
                %258 = vst [vmem:[%s256] sm:%s248] %v257
                %v259 = vld [vmem:[%s255 + $0x8] sm:%s248]
                %260 = vst [vmem:[%s256 + $0x4] sm:%s248] %v259
              $region53: #{tri_model_forward.8} parent=47 // loop_footer
                %s254 = sadd.s32 1, %s250
              $region54: #{tri_model_forward.8} parent=47 // loop_footer_branch
                %249 = sbr.rel target = $region50
              $region55: #{tri_model_forward.8} parent=47 // loop_exit
                _
            $region48: #{tri_model_forward.8} parent=39 // pred_fallthru
              _
          $region40: #{tri_model_forward.8} parent=35 // pred_fallthru
            _
          %285 = vnop
        $region36: #{tri_model_forward.8} parent=31 // pred_fallthru
          _
        // Predicated region
        $region74: #{tri_model_forward.8} parent=31 // pred_check
          %p286 = pneg %p59
        $region75: #{tri_model_forward.8} parent=31 // pred_check_branch
          %288 = sbr.rel (%p286) target = $region77
        $region76: #{tri_model_forward.8} parent=31 // pred_region
          %s289 = smul.u32 16, %s13
          %p290 = scmp.lt.s32.totalorder %s289, 31
          %s291 = scalar_select %p290, %s289, 31
          %s292 = smul.addr %s291, 4
          %s293 = scalar_lea.vmem %s1, %s292
          %s294 = smul.u32 16, %s13
        $region77: #{tri_model_forward.8} parent=31 // pred_fallthru
          _
        // Predicated region
        $region78: #{tri_model_forward.8} parent=31 // pred_check
          %p295 = pneg %p85
        $region79: #{tri_model_forward.8} parent=31 // pred_check_branch
          %297 = sbr.rel (%p295) target = $region81
        $region80: #{tri_model_forward.8} parent=31 // pred_region
          %s298 = smul.u32 16, %s13
          %p299 = scmp.lt.s32.totalorder %s298, 31
          %s300 = scalar_select %p299, %s298, 31
          %s301 = smul.addr %s300, 8
          %s302 = scalar_lea.vmem %s2, %s301
          %s303 = smul.u32 16, %s13
        $region81: #{tri_model_forward.8} parent=31 // pred_fallthru
          _
      $region32: #{tri_model_forward.8} parent=5 // pred_fallthru
        _
      %p304 = scmp.le.s32.totalorder 1, %s13
      %p305 = scmp.lt.s32.totalorder %s13, 3
      %p306 = pnand %p304, %p305
      %p307 = pneg %p306
      // Predicated region
      $region82: #{tri_model_forward.8} parent=5 // pred_check
        _
      $region83: #{tri_model_forward.8} parent=5 // pred_check_branch
        %309 = sbr.rel (%p306) target = $region85
      $region84: #{tri_model_forward.8} parent=5 // pred_region
        %s310 = ssub.s32 %s13, 1
        %s311 = sand.u32 %s26, 1
        %s312 = sand.u32 %s26, 1
        %s313 = smul.addr %s312, 8
        %s314 = scalar_lea.vmem [#allocation2], %s313
        // Predicated region
        $region86: #{tri_model_forward.8} parent=84 // pred_check
          %p315 = pneg %p39
        $region87: #{tri_model_forward.8} parent=84 // pred_check_branch
          %317 = sbr.rel (%p315) target = $region89
        $region88: #{tri_model_forward.8} parent=84 // pred_region
          _
        $region89: #{tri_model_forward.8} parent=84 // pred_fallthru
          _
        %s318 = sand.u32 %s26, 1
        %s319 = sand.u32 %s26, 1
        %s320 = smul.addr %s319, 8
        %s321 = scalar_lea.vmem [#allocation2], %s320
        %p322 = pneg %p39
        %p323 = pneg %p36
        %s324 = smul.u32 16, %s18
        %p325 = scmp.lt.s32.totalorder %s324, 31
        %s326 = scalar_select %p325, %s324, 31
        %s327 = smul.addr %s326, 4
        %s328 = scalar_lea.vmem %s1, %s327
        %p329 = pneg %p65
        %p330 = pneg %p62
        %s331 = smul.u32 16, %s18
        %p332 = scmp.lt.s32.totalorder %s331, 31
        %s333 = scalar_select %p332, %s331, 31
        %s334 = smul.addr %s333, 8
        %s335 = scalar_lea.vmem %s2, %s334
        %p336 = pneg %p91
        %p337 = pneg %p88
        %p338 = pneg %p112
        %p339 = pneg %p109
        %p340 = pneg %p133
        %p341 = pneg %p130
        %p342 = pneg %p154
        %p343 = pneg %p151
        %p344 = pneg %p175
        %p345 = pneg %p172
        %p346 = pneg %p201
        %p347 = pneg %p198
        %s348 = smul.u32 16, %s18
        %p349 = scmp.lt.s32.totalorder %s348, 31
        %s350 = scalar_select %p349, %s348, 31
        %s351 = smul.addr %s350, 8
        %s352 = scalar_lea.vmem %s7, %s351
        %s353 = smul.u32 16, %s18
        %p354 = scmp.lt.s32.totalorder %s353, 31
        %s355 = scalar_select %p354, %s353, 31
        %s356 = smul.addr %s355, 4
        %s357 = scalar_lea.vmem %s1, %s356
        %s358 = smul.u32 16, %s18
        %s359 = smul.u32 16, %s18
        %p360 = scmp.lt.s32.totalorder %s359, 31
        %s361 = scalar_select %p360, %s359, 31
        %s362 = smul.addr %s361, 8
        %s363 = scalar_lea.vmem %s2, %s362
        %s364 = smul.u32 16, %s18
        %s365 = smul.u32 16, %s18
        %p366 = scmp.lt.s32.totalorder %s365, 31
        %s367 = scalar_select %p366, %s365, 31
        %s368 = smul.addr %s367, 8
        %s369 = scalar_lea.vmem %s7, %s368
        %s370 = smul.u32 16, %s18
        %v372 = vld [vmem:[%s314] sm:$0xf]
        %v373 = vld [vmem:[%s314 + $0x4] sm:$0xf]
        %v374 = vunpack.c.l.bf16 %v372
        %v375 = vunpack.c.l.bf16 %v373
        %v376 = vadd.f32 %v374, %v375
        %v377 = vrot.slane %v376, 4
        %v378 = vadd.f32 %v376, %v377
        %v379 = vrot.slane %v378, 2
        %v380 = vadd.f32 %v378, %v379
        %v381 = vrot.slane %v380, 1
        %v382 = vadd.f32 %v380, %v381
        %v383 = vrcp.pop 16.0
        %v384 = vmul.f32 16.0, %v383
        %v385 = vsub.f32 1.0, %v384
        %v386 = vmul.f32 %v383, %v385
        %v387 = vadd.f32 %v383, %v386
        %vm388 = vweird.f32 %v383
        %v389 = vsel %vm388, %v383, %v387
        %v390 = vmul.f32 %v382, %v389
        %v391 = vsub.f32 %v374, %v390
        %v392 = vsub.f32 %v375, %v390
        %v393 = vmul.f32 %v391, %v391
        %v394 = vmul.f32 %v392, %v392
        %v395 = vadd.f32 %v393, %v394
        %v396 = vrot.slane %v395, 4
        %v397 = vadd.f32 %v395, %v396
        %v398 = vrot.slane %v397, 2
        %v399 = vadd.f32 %v397, %v398
        %v400 = vrot.slane %v399, 1
        %v401 = vadd.f32 %v399, %v400
        %v402 = vmul.f32 %v401, %v389
        %v403 = vadd.f32 %v402, 1e-05
        %v404 = vrsqrt.pop %v403
        %v405 = vmul.f32 %v404, %v403
        %v406 = vmul.f32 %v405, %v404
        %v407 = vmul.f32 0.5, %v406
        %v408 = vsub.f32 1.5, %v407
        %v409 = vmul.f32 %v404, %v408
        %vm410 = vweird.f32 %v403
        %vm411 = vweird.f32 %v404
        %vm412 = vmor %vm410, %vm411
        %v413 = vsel %vm412, %v404, %v409
        %v414 = vmul.f32 %v391, %v413
        %v415 = vmul.f32 %v392, %v413
        %v416 = vld [vmem:[%s3] sm:$0xff]
        %v417 = vld [vmem:[%s3 + $0x8] sm:$0xff]
        %419 = vset.pattern.permute.xlu0 0
        %420 = vperm.xlu0 %419, %v416
        %v421 = vpop.permute.xlu0 %420
        %424 = vset.pattern.permute.xlu0 0
        %425 = vperm.xlu0 %424, %v417
        %v426 = vpop.permute.xlu0 %425
        %v428 = vmul.f32 %v414, %v421
        %v429 = vmul.f32 %v415, %v426
        %v430 = vld [vmem:[%s4] sm:$0xff]
        %v431 = vld [vmem:[%s4 + $0x8] sm:$0xff]
        %433 = vset.pattern.permute.xlu0 0
        %434 = vperm.xlu0 %433, %v430
        %v435 = vpop.permute.xlu0 %434
        %438 = vset.pattern.permute.xlu0 0
        %439 = vperm.xlu0 %438, %v431
        %v440 = vpop.permute.xlu0 %439
        %v442 = vadd.f32 %v428, %v435
        %v443 = vadd.f32 %v429, %v440
        %v444 = vpack.c.bf16 %v443, %v442
        %v445 = vld [vmem:[%s5] sm:$0xf]
        %v446 = vld [vmem:[%s5 + $0x4] sm:$0xf]
        %v447 = vld [vmem:[%s6] sm:$0x1]
        %v449 = vperm.slane %v447, 0
        %451 = vxpose.xlu0.c.b16.start [1/8] %v444, 128
        %452 = vxpose.xlu0.c.b16.cont [2/8] 0, 128
        %453 = vxpose.xlu0.c.b16.cont [3/8] 0, 128
        %454 = vxpose.xlu0.c.b16.cont [4/8] 0, 128
        %455 = vxpose.xlu0.c.b16.cont [5/8] 0, 128
        %456 = vxpose.xlu0.c.b16.cont [6/8] 0, 128
        %457 = vxpose.xlu0.c.b16.cont [7/8] 0, 128
        %458 = vxpose.xlu0.c.b16.end [8/8] 0, 128
        %v459 = vpop.trf.xlu0
        %v460 = vpop.trf.xlu0
        %v461 = vpop.trf.xlu0
        %v462 = vpop.trf.xlu0
        %v463 = vpop.trf.xlu0
        %v464 = vpop.trf.xlu0
        %v465 = vpop.trf.xlu0
        %v466 = vpop.trf.xlu0
        %v469 = vunpack.c.l.b16 %v445
        %v470 = vunpack.c.l.b16 %v446
        %v471 = vpack.c.b16 %v470, %v469
        %vm473 = vcmask 130048
        %v475 = vsel %vm473, %v459, 0
        %v478 = vsel %vm473, %v460, 0
        %v481 = vsel %vm473, %v461, 0
        %v484 = vsel %vm473, %v462, 0
        %v487 = vsel %vm473, %v463, 0
        %v490 = vsel %vm473, %v464, 0
        %v493 = vsel %vm473, %v465, 0
        %v496 = vsel %vm473, %v466, 0
        %498 = vmatpush.bf16.msra.mxu0 0
        %499 = vmatpush.bf16.msra.mxu0 0
        %500 = vmatpush.bf16.msra.mxu0 0
        %501 = vmatpush.bf16.msra.mxu0 0
        %502 = vmatpush.bf16.msra.mxu0 0
        %503 = vmatpush.bf16.msra.mxu0 0
        %504 = vmatpush.bf16.msra.mxu0 0
        %505 = vmatpush.bf16.msra.mxu0 %v471
        %506 = vmatmul.bf16.gmra.mxu0 %v475
        %v507 = vpop.f32.mrf.mxu0
        %v508 = vadd.f32 %v449, %v507
        %v509 = vpop.f32.mrf.mxu0
        %v510 = vadd.f32 %v449, %v509
        %511 = vmatmul.bf16.gmra.mxu0 %v478
        %v512 = vpop.f32.mrf.mxu0
        %v513 = vadd.f32 %v449, %v512
        %v514 = vpop.f32.mrf.mxu0
        %v515 = vadd.f32 %v449, %v514
        %516 = vmatmul.bf16.gmra.mxu0 %v481
        %v517 = vpop.f32.mrf.mxu0
        %v518 = vadd.f32 %v449, %v517
        %v519 = vpop.f32.mrf.mxu0
        %v520 = vadd.f32 %v449, %v519
        %521 = vmatmul.bf16.gmra.mxu0 %v484
        %v522 = vpop.f32.mrf.mxu0
        %v523 = vadd.f32 %v449, %v522
        %v524 = vpop.f32.mrf.mxu0
        %v525 = vadd.f32 %v449, %v524
        %526 = vmatmul.bf16.gmra.mxu0 %v487
        %v527 = vpop.f32.mrf.mxu0
        %v528 = vadd.f32 %v449, %v527
        %v529 = vpop.f32.mrf.mxu0
        %v530 = vadd.f32 %v449, %v529
        %531 = vmatmul.bf16.gmra.mxu0 %v490
        %v532 = vpop.f32.mrf.mxu0
        %v533 = vadd.f32 %v449, %v532
        %v534 = vpop.f32.mrf.mxu0
        %v535 = vadd.f32 %v449, %v534
        %536 = vmatmul.bf16.gmra.mxu0 %v493
        %v537 = vpop.f32.mrf.mxu0
        %v538 = vadd.f32 %v449, %v537
        %v539 = vpop.f32.mrf.mxu0
        %v540 = vadd.f32 %v449, %v539
        %541 = vmatmul.bf16.gmra.mxu0 %v496
        %v542 = vpop.f32.mrf.mxu0
        %v543 = vadd.f32 %v449, %v542
        %v544 = vpop.f32.mrf.mxu0
        %v545 = vadd.f32 %v449, %v544
        %546 = vdwg.mxu0
        %v547 = vld [vmem:[%s363] sm:$0xff]
        %v548 = vld [vmem:[%s363 + $0x8] sm:$0xff]
        %v549 = vld [vmem:[%s363 + $0x10] sm:$0xff]
        %v550 = vld [vmem:[%s363 + $0x18] sm:$0xff]
        %v551 = vld [vmem:[%s363 + $0x20] sm:$0xff]
        %v552 = vld [vmem:[%s363 + $0x28] sm:$0xff]
        %v553 = vld [vmem:[%s363 + $0x30] sm:$0xff]
        %v554 = vld [vmem:[%s363 + $0x38] sm:$0xff]
        %v555 = vld [vmem:[%s363 + $0x40] sm:$0xff]
        %v556 = vld [vmem:[%s363 + $0x48] sm:$0xff]
        %v557 = vld [vmem:[%s363 + $0x50] sm:$0xff]
        %v558 = vld [vmem:[%s363 + $0x58] sm:$0xff]
        %v559 = vld [vmem:[%s363 + $0x60] sm:$0xff]
        %v560 = vld [vmem:[%s363 + $0x68] sm:$0xff]
        %v561 = vld [vmem:[%s363 + $0x70] sm:$0xff]
        %v562 = vld [vmem:[%s363 + $0x78] sm:$0xff]
        %v563 = vld [vmem:[%s357] sm:$0xf]
        %v564 = vld [vmem:[%s357 + $0x4] sm:$0xf]
        %v565 = vld [vmem:[%s357 + $0x8] sm:$0xf]
        %v566 = vld [vmem:[%s357 + $0xc] sm:$0xf]
        %v567 = vld [vmem:[%s357 + $0x10] sm:$0xf]
        %v568 = vld [vmem:[%s357 + $0x14] sm:$0xf]
        %v569 = vld [vmem:[%s357 + $0x18] sm:$0xf]
        %v570 = vld [vmem:[%s357 + $0x1c] sm:$0xf]
        %v571 = vld [vmem:[%s357 + $0x20] sm:$0xf]
        %v572 = vld [vmem:[%s357 + $0x24] sm:$0xf]
        %v573 = vld [vmem:[%s357 + $0x28] sm:$0xf]
        %v574 = vld [vmem:[%s357 + $0x2c] sm:$0xf]
        %v575 = vld [vmem:[%s357 + $0x30] sm:$0xf]
        %v576 = vld [vmem:[%s357 + $0x34] sm:$0xf]
        %v577 = vld [vmem:[%s357 + $0x38] sm:$0xf]
        %v578 = vld [vmem:[%s357 + $0x3c] sm:$0xf]
        %v579 = vunpack.c.l.bf16 %v563
        %v580 = vunpack.c.l.bf16 %v564
        %v581 = vunpack.c.l.bf16 %v565
        %v582 = vunpack.c.l.bf16 %v566
        %v583 = vunpack.c.l.bf16 %v567
        %v584 = vunpack.c.l.bf16 %v568
        %v585 = vunpack.c.l.bf16 %v569
        %v586 = vunpack.c.l.bf16 %v570
        %v587 = vunpack.c.l.bf16 %v571
        %v588 = vunpack.c.l.bf16 %v572
        %v589 = vunpack.c.l.bf16 %v573
        %v590 = vunpack.c.l.bf16 %v574
        %v591 = vunpack.c.l.bf16 %v575
        %v592 = vunpack.c.l.bf16 %v576
        %v593 = vunpack.c.l.bf16 %v577
        %v594 = vunpack.c.l.bf16 %v578
        %v595 = vmul.f32 %v508, %v579
        %v596 = vmul.f32 %v510, %v580
        %v597 = vmul.f32 %v513, %v581
        %v598 = vmul.f32 %v515, %v582
        %v599 = vmul.f32 %v518, %v583
        %v600 = vmul.f32 %v520, %v584
        %v601 = vmul.f32 %v523, %v585
        %v602 = vmul.f32 %v525, %v586
        %v603 = vmul.f32 %v528, %v587
        %v604 = vmul.f32 %v530, %v588
        %v605 = vmul.f32 %v533, %v589
        %v606 = vmul.f32 %v535, %v590
        %v607 = vmul.f32 %v538, %v591
        %v608 = vmul.f32 %v540, %v592
        %v609 = vmul.f32 %v543, %v593
        %v610 = vmul.f32 %v545, %v594
        %v611 = vadd.f32 %v547, %v595
        %v612 = vadd.f32 %v548, %v596
        %v613 = vadd.f32 %v549, %v597
        %v614 = vadd.f32 %v550, %v598
        %v615 = vadd.f32 %v551, %v599
        %v616 = vadd.f32 %v552, %v600
        %v617 = vadd.f32 %v553, %v601
        %v618 = vadd.f32 %v554, %v602
        %v619 = vadd.f32 %v555, %v603
        %v620 = vadd.f32 %v556, %v604
        %v621 = vadd.f32 %v557, %v605
        %v622 = vadd.f32 %v558, %v606
        %v623 = vadd.f32 %v559, %v607
        %v624 = vadd.f32 %v560, %v608
        %v625 = vadd.f32 %v561, %v609
        %v626 = vadd.f32 %v562, %v610
        %vm627 = vcmask 261120
        %628 = vst.msk [vmem:[%s369] sm:$0xff] %vm627, %v611
        %629 = vst.msk [vmem:[%s369 + $0x8] sm:$0xff] %vm627, %v612
        %630 = vst.msk [vmem:[%s369 + $0x10] sm:$0xff] %vm627, %v613
        %631 = vst.msk [vmem:[%s369 + $0x18] sm:$0xff] %vm627, %v614
        %632 = vst.msk [vmem:[%s369 + $0x20] sm:$0xff] %vm627, %v615
        %633 = vst.msk [vmem:[%s369 + $0x28] sm:$0xff] %vm627, %v616
        %634 = vst.msk [vmem:[%s369 + $0x30] sm:$0xff] %vm627, %v617
        %635 = vst.msk [vmem:[%s369 + $0x38] sm:$0xff] %vm627, %v618
        %636 = vst.msk [vmem:[%s369 + $0x40] sm:$0xff] %vm627, %v619
        %637 = vst.msk [vmem:[%s369 + $0x48] sm:$0xff] %vm627, %v620
        %638 = vst.msk [vmem:[%s369 + $0x50] sm:$0xff] %vm627, %v621
        %639 = vst.msk [vmem:[%s369 + $0x58] sm:$0xff] %vm627, %v622
        %640 = vst.msk [vmem:[%s369 + $0x60] sm:$0xff] %vm627, %v623
        %641 = vst.msk [vmem:[%s369 + $0x68] sm:$0xff] %vm627, %v624
        %642 = vst.msk [vmem:[%s369 + $0x70] sm:$0xff] %vm627, %v625
        %643 = vst.msk [vmem:[%s369 + $0x78] sm:$0xff] %vm627, %v626
        %s644 = smul.u32 16, %s18
        %p645 = scmp.lt.s32.totalorder %s644, 31
        %s646 = scalar_select %p645, %s644, 31
        %s647 = smul.addr %s646, 8
        %s648 = scalar_lea.vmem %s7, %s647
        // Predicated region
        $region90: #{tri_model_forward.8} parent=84 // pred_check
          %p649 = pneg %p198
        $region91: #{tri_model_forward.8} parent=84 // pred_check_branch
          %651 = sbr.rel (%p649) target = $region93
        $region92: #{tri_model_forward.8} parent=84 // pred_region
          %s652 = smul.u32 16, %s18
        $region93: #{tri_model_forward.8} parent=84 // pred_fallthru
          _
      $region85: #{tri_model_forward.8} parent=5 // pred_fallthru
        _
      %p653 = scmp.le.s32.totalorder 2, %s13
      // Predicated region
      $region94: #{tri_model_forward.8} parent=5 // pred_check
        %p654 = pneg %p653
      $region95: #{tri_model_forward.8} parent=5 // pred_check_branch
        %656 = sbr.rel (%p654) target = $region97
      $region96: #{tri_model_forward.8} parent=5 // pred_region
        %s657 = ssub.s32 %s13, 2
        // Predicated region
        $region98: #{tri_model_forward.8} parent=96 // pred_check
          %p658 = pneg %p204
        $region99: #{tri_model_forward.8} parent=96 // pred_check_branch
          %660 = sbr.rel (%p658) target = $region101
        $region100: #{tri_model_forward.8} parent=96 // pred_region
          %s661 = smul.u32 16, %s19
          %p662 = scmp.lt.s32.totalorder %s661, 31
          %s663 = scalar_select %p662, %s661, 31
          %s664 = smul.addr %s663, 8
          %s665 = scalar_lea.vmem %s7, %s664
        $region101: #{tri_model_forward.8} parent=96 // pred_fallthru
          _
      $region97: #{tri_model_forward.8} parent=5 // pred_fallthru
        _
    $region6: #{tri_model_forward.8} parent=1 // loop_footer
      %s17 = sadd.s32 1, %s13
    $region7: #{tri_model_forward.8} parent=1 // loop_footer_branch
      %12 = sbr.rel target = $region3
    $region8: #{tri_model_forward.8} parent=1 // loop_exit
      _

// kernel: tri_model_forward.6
$region0: #{tri_model_forward.6}
  #allocation0 [shape = 'u32[]', space=smem, size = 0x4, offset = 0x4, fixed_abs, tag = 'smem constant byte address 0x4 - core index']
  #allocation1 [shape = 'u32[72,128]{1,0:T(1,128)}', space=vmem, size = 0x9000, scoped, tag = 'internal scratch']
  %s0 = inlined_call_operand.vmem [shape: f32[16,16,32], index: 0, kind: input, shape index: {}]
  %s1 = inlined_call_operand.vmem [shape: f32[1,32], index: 1, kind: input, shape index: {}]
  %s2 = inlined_call_operand.vmem [shape: f32[1,32], index: 2, kind: input, shape index: {}]
  %s3 = inlined_call_operand.vmem [shape: bf16[32,96], index: 3, kind: input, shape index: {}]
  %s4 = inlined_call_operand.vmem [shape: f32[1,96], index: 4, kind: input, shape index: {}]
  %s5 = inlined_call_operand.vmem [shape: bf16[16,256], index: 5, kind: output, shape index: {0}]
  %s6 = inlined_call_operand.vmem [shape: bf16[16,256], index: 6, kind: output, shape index: {1}]
  %s7 = inlined_call_operand.vmem [shape: bf16[256,32], index: 7, kind: output, shape index: {2}]
  %8 = xla_tuple %s5, %s6, %s7
  %s9 = sld [smem:[#allocation0]]
  $region143: #{tri_model_forward.6} parent=0
    _
  %s11 = ssub.s32 1, %s9
  %s12 = scalar_select 0, %s11, %s9
  $region1: #{tri_model_forward.6} parent=0
    #allocation2 [shape = 'u8[8192]{0}', space=vmem, size = 0x2000, scoped, tag = 'output window, operand 0']
    #allocation3 [shape = 'u8[8192]{0}', space=vmem, size = 0x2000, scoped, tag = 'output window, operand 1']
    loop: start=0, step=1, limit=4
    $region2: #{tri_model_forward.6} parent=1 // loop_pre_header
      _
    $region3: #{tri_model_forward.6} parent=1 // loop_header
      %s14 = sphi 0, %s18
      %p15 = scmp.ge.s32.totalorder %s14, 4
      %s24 = sphi 0, %s26
      %s27 = sphi 0, %s24
      %s28 = sphi 0, %s27
      %s44 = sphi 0, %s28
      %s48 = sphi 0, %s48
      %s50 = sphi 0, %s48
      %s51 = sphi 0, %s50
      %s65 = sphi 0, %s51
      %s69 = sphi 0, %s69
      %s71 = sphi 0, %s69
      %s72 = sphi 0, %s71
      %s86 = sphi 0, %s72
      %s90 = sphi 0, %s90
      %s92 = sphi 0, %s90
      %s93 = sphi 0, %s92
      %s107 = sphi 0, %s93
      %s111 = sphi 0, %s111
      %s113 = sphi 0, %s111
      %s114 = sphi 0, %s113
      %s128 = sphi 0, %s114
      %s134 = sphi 0, %s136
      %s137 = sphi 0, %s134
      %s138 = sphi 0, %s137
      %s154 = sphi 0, %s138
      %s160 = sphi 0, %s162
      %s163 = sphi 0, %s160
      %s164 = sphi 0, %s163
      %s180 = sphi 0, %s164
      %s186 = sphi 0, %s188
      %s189 = sphi 0, %s186
      %s190 = sphi 0, %s189
      %s206 = sphi 0, %s190
    $region4: #{tri_model_forward.6} parent=1 // loop_header_branch
      %17 = sbr.rel (%p15) target = $region8
    $region5: #{tri_model_forward.6} parent=1 // loop_body
      %s19 = ssub.s32 %s14, 1
      %s20 = ssub.s32 %s14, 2
      %s21 = sadd.s32 %s14, 1
      %s22 = ssub.s32 %s14, %s21
      %p23 = scmp.eq.s32.totalorder %s22, 0
      %s25 = sadd.s32 %s24, 1
      %s26 = scalar_select %p23, %s24, %s25
      %p29 = pneg %p23
      %p30 = scmp.eq.s32.totalorder %s14, 1
      %p31 = por %p29, %p30
      %p32 = scmp.ne.s32.totalorder %s24, %s27
      %p33 = scmp.eq.s32.totalorder %s14, 0
      %p34 = por %p32, %p33
      %p35 = scmp.ne.s32.totalorder %s24, %s27
      %p36 = scmp.eq.s32.totalorder %s19, 1
      %p37 = por %p35, %p36
      %p38 = scmp.ne.s32.totalorder %s27, %s28
      %p39 = scmp.eq.s32.totalorder %s19, 0
      %p40 = por %p38, %p39
      %p41 = scmp.ne.s32.totalorder %s27, %s28
      %p42 = scmp.eq.s32.totalorder %s20, 1
      %p43 = por %p41, %p42
      %p45 = scmp.ne.s32.totalorder %s28, %s44
      %p46 = scmp.eq.s32.totalorder %s20, 0
      %p47 = por %p45, %p46
      %s49 = sadd.s32 %s48, 1
      %p52 = scmp.eq.s32.totalorder %s14, 1
      %p53 = scmp.ne.s32.totalorder %s48, %s50
      %p54 = scmp.eq.s32.totalorder %s14, 0
      %p55 = por %p53, %p54
      %p56 = scmp.ne.s32.totalorder %s48, %s50
      %p57 = scmp.eq.s32.totalorder %s19, 1
      %p58 = por %p56, %p57
      %p59 = scmp.ne.s32.totalorder %s50, %s51
      %p60 = scmp.eq.s32.totalorder %s19, 0
      %p61 = por %p59, %p60
      %p62 = scmp.ne.s32.totalorder %s50, %s51
      %p63 = scmp.eq.s32.totalorder %s20, 1
      %p64 = por %p62, %p63
      %p66 = scmp.ne.s32.totalorder %s51, %s65
      %p67 = scmp.eq.s32.totalorder %s20, 0
      %p68 = por %p66, %p67
      %s70 = sadd.s32 %s69, 1
      %p73 = scmp.eq.s32.totalorder %s14, 1
      %p74 = scmp.ne.s32.totalorder %s69, %s71
      %p75 = scmp.eq.s32.totalorder %s14, 0
      %p76 = por %p74, %p75
      %p77 = scmp.ne.s32.totalorder %s69, %s71
      %p78 = scmp.eq.s32.totalorder %s19, 1
      %p79 = por %p77, %p78
      %p80 = scmp.ne.s32.totalorder %s71, %s72
      %p81 = scmp.eq.s32.totalorder %s19, 0
      %p82 = por %p80, %p81
      %p83 = scmp.ne.s32.totalorder %s71, %s72
      %p84 = scmp.eq.s32.totalorder %s20, 1
      %p85 = por %p83, %p84
      %p87 = scmp.ne.s32.totalorder %s72, %s86
      %p88 = scmp.eq.s32.totalorder %s20, 0
      %p89 = por %p87, %p88
      %s91 = sadd.s32 %s90, 1
      %p94 = scmp.eq.s32.totalorder %s14, 1
      %p95 = scmp.ne.s32.totalorder %s90, %s92
      %p96 = scmp.eq.s32.totalorder %s14, 0
      %p97 = por %p95, %p96
      %p98 = scmp.ne.s32.totalorder %s90, %s92
      %p99 = scmp.eq.s32.totalorder %s19, 1
      %p100 = por %p98, %p99
      %p101 = scmp.ne.s32.totalorder %s92, %s93
      %p102 = scmp.eq.s32.totalorder %s19, 0
      %p103 = por %p101, %p102
      %p104 = scmp.ne.s32.totalorder %s92, %s93
      %p105 = scmp.eq.s32.totalorder %s20, 1
      %p106 = por %p104, %p105
      %p108 = scmp.ne.s32.totalorder %s93, %s107
      %p109 = scmp.eq.s32.totalorder %s20, 0
      %p110 = por %p108, %p109
      %s112 = sadd.s32 %s111, 1
      %p115 = scmp.eq.s32.totalorder %s14, 1
      %p116 = scmp.ne.s32.totalorder %s111, %s113
      %p117 = scmp.eq.s32.totalorder %s14, 0
      %p118 = por %p116, %p117
      %p119 = scmp.ne.s32.totalorder %s111, %s113
      %p120 = scmp.eq.s32.totalorder %s19, 1
      %p121 = por %p119, %p120
      %p122 = scmp.ne.s32.totalorder %s113, %s114
      %p123 = scmp.eq.s32.totalorder %s19, 0
      %p124 = por %p122, %p123
      %p125 = scmp.ne.s32.totalorder %s113, %s114
      %p126 = scmp.eq.s32.totalorder %s20, 1
      %p127 = por %p125, %p126
      %p129 = scmp.ne.s32.totalorder %s114, %s128
      %p130 = scmp.eq.s32.totalorder %s20, 0
      %p131 = por %p129, %p130
      %s132 = ssub.s32 %s14, %s21
      %p133 = scmp.eq.s32.totalorder %s132, 0
      %s135 = sadd.s32 %s134, 1
      %s136 = scalar_select %p133, %s134, %s135
      %p139 = pneg %p133
      %p140 = scmp.eq.s32.totalorder %s14, 1
      %p141 = por %p139, %p140
      %p142 = scmp.ne.s32.totalorder %s134, %s137
      %p143 = scmp.eq.s32.totalorder %s14, 0
      %p144 = por %p142, %p143
      %p145 = scmp.ne.s32.totalorder %s134, %s137
      %p146 = scmp.eq.s32.totalorder %s19, 1
      %p147 = por %p145, %p146
      %p148 = scmp.ne.s32.totalorder %s137, %s138
      %p149 = scmp.eq.s32.totalorder %s19, 0
      %p150 = por %p148, %p149
      %p151 = scmp.ne.s32.totalorder %s137, %s138
      %p152 = scmp.eq.s32.totalorder %s20, 1
      %p153 = por %p151, %p152
      %p155 = scmp.ne.s32.totalorder %s138, %s154
      %p156 = scmp.eq.s32.totalorder %s20, 0
      %p157 = por %p155, %p156
      %s158 = ssub.s32 %s14, %s21
      %p159 = scmp.eq.s32.totalorder %s158, 0
      %s161 = sadd.s32 %s160, 1
      %s162 = scalar_select %p159, %s160, %s161
      %p165 = pneg %p159
      %p166 = scmp.eq.s32.totalorder %s14, 1
      %p167 = por %p165, %p166
      %p168 = scmp.ne.s32.totalorder %s160, %s163
      %p169 = scmp.eq.s32.totalorder %s14, 0
      %p170 = por %p168, %p169
      %p171 = scmp.ne.s32.totalorder %s160, %s163
      %p172 = scmp.eq.s32.totalorder %s19, 1
      %p173 = por %p171, %p172
      %p174 = scmp.ne.s32.totalorder %s163, %s164
      %p175 = scmp.eq.s32.totalorder %s19, 0
      %p176 = por %p174, %p175
      %p177 = scmp.ne.s32.totalorder %s163, %s164
      %p178 = scmp.eq.s32.totalorder %s20, 1
      %p179 = por %p177, %p178
      %p181 = scmp.ne.s32.totalorder %s164, %s180
      %p182 = scmp.eq.s32.totalorder %s20, 0
      %p183 = por %p181, %p182
      %s184 = ssub.s32 %s14, %s21
      %p185 = scmp.eq.s32.totalorder %s184, 0
      %s187 = sadd.s32 %s186, 1
      %s188 = scalar_select %p185, %s186, %s187
      %p191 = pneg %p185
      %p192 = scmp.eq.s32.totalorder %s14, 1
      %p193 = por %p191, %p192
      %p194 = scmp.ne.s32.totalorder %s186, %s189
      %p195 = scmp.eq.s32.totalorder %s14, 0
      %p196 = por %p194, %p195
      %p197 = scmp.ne.s32.totalorder %s186, %s189
      %p198 = scmp.eq.s32.totalorder %s19, 1
      %p199 = por %p197, %p198
      %p200 = scmp.ne.s32.totalorder %s189, %s190
      %p201 = scmp.eq.s32.totalorder %s19, 0
      %p202 = por %p200, %p201
      %p203 = scmp.ne.s32.totalorder %s189, %s190
      %p204 = scmp.eq.s32.totalorder %s20, 1
      %p205 = por %p203, %p204
      %p207 = scmp.ne.s32.totalorder %s190, %s206
      %p208 = scmp.eq.s32.totalorder %s20, 0
      %p209 = por %p207, %p208
      %p210 = scmp.le.s32.totalorder 1, %s14
      %p211 = scmp.lt.s32.totalorder %s14, 3
      %p212 = pnand %p210, %p211
      %p213 = pneg %p212
      // Predicated region
      $region9: #{tri_model_forward.6} parent=5 // pred_check
        _
      $region10: #{tri_model_forward.6} parent=5 // pred_check_branch
        %215 = sbr.rel (%p212) target = $region12
      $region11: #{tri_model_forward.6} parent=5 // pred_region
        %s216 = ssub.s32 %s14, 1
        // Predicated region
        $region13: #{tri_model_forward.6} parent=11 // pred_check
          %p217 = pneg %p61
        $region14: #{tri_model_forward.6} parent=11 // pred_check_branch
          %219 = sbr.rel (%p217) target = $region16
        $region15: #{tri_model_forward.6} parent=11 // pred_region
          _
        $region16: #{tri_model_forward.6} parent=11 // pred_fallthru
          _
        // Predicated region
        $region17: #{tri_model_forward.6} parent=11 // pred_check
          %p220 = pneg %p82
        $region18: #{tri_model_forward.6} parent=11 // pred_check_branch
          %222 = sbr.rel (%p220) target = $region20
        $region19: #{tri_model_forward.6} parent=11 // pred_region
          _
        $region20: #{tri_model_forward.6} parent=11 // pred_fallthru
          _
        // Predicated region
        $region21: #{tri_model_forward.6} parent=11 // pred_check
          %p223 = pneg %p103
        $region22: #{tri_model_forward.6} parent=11 // pred_check_branch
          %225 = sbr.rel (%p223) target = $region24
        $region23: #{tri_model_forward.6} parent=11 // pred_region
          _
        $region24: #{tri_model_forward.6} parent=11 // pred_fallthru
          _
        // Predicated region
        $region25: #{tri_model_forward.6} parent=11 // pred_check
          %p226 = pneg %p124
        $region26: #{tri_model_forward.6} parent=11 // pred_check_branch
          %228 = sbr.rel (%p226) target = $region28
        $region27: #{tri_model_forward.6} parent=11 // pred_region
          _
        $region28: #{tri_model_forward.6} parent=11 // pred_fallthru
          _
      $region12: #{tri_model_forward.6} parent=5 // pred_fallthru
        _
      %p229 = scmp.lt.s32.totalorder %s14, 2
      // Predicated region
      $region29: #{tri_model_forward.6} parent=5 // pred_check
        %p230 = pneg %p229
      $region30: #{tri_model_forward.6} parent=5 // pred_check_branch
        %232 = sbr.rel (%p230) target = $region32
      $region31: #{tri_model_forward.6} parent=5 // pred_region
        // Predicated region
        $region33: #{tri_model_forward.6} parent=31 // pred_check
          %p233 = pneg %p34
        $region34: #{tri_model_forward.6} parent=31 // pred_check_branch
          %235 = sbr.rel (%p233) target = $region36
        $region35: #{tri_model_forward.6} parent=31 // pred_region
          %s236 = smul.u32 8, %s14
          %p237 = scmp.lt.s32.totalorder %s236, 15
          %s238 = scalar_select %p237, %s236, 15
          %s239 = smul.addr %s238, 2
          %s240 = smul.addr %s239, 8
          %s241 = scalar_lea.vmem %s0, %s240
          %s242 = smul.u32 8, %s14
        $region36: #{tri_model_forward.6} parent=31 // pred_fallthru
          _
      $region32: #{tri_model_forward.6} parent=5 // pred_fallthru
        _
      %p243 = scmp.le.s32.totalorder 1, %s14
      %p244 = scmp.lt.s32.totalorder %s14, 3
      %p245 = pnand %p243, %p244
      %p246 = pneg %p245
      // Predicated region
      $region37: #{tri_model_forward.6} parent=5 // pred_check
        _
      $region38: #{tri_model_forward.6} parent=5 // pred_check_branch
        %248 = sbr.rel (%p245) target = $region40
      $region39: #{tri_model_forward.6} parent=5 // pred_region
        %s249 = ssub.s32 %s14, 1
        %s250 = smul.u32 8, %s19
        %p251 = scmp.lt.s32.totalorder %s250, 15
        %s252 = scalar_select %p251, %s250, 15
        %s253 = smul.addr %s252, 2
        %s254 = smul.addr %s253, 8
        %s255 = scalar_lea.vmem %s0, %s254
        %p256 = pneg %p40
        %p257 = pneg %p37
        %p258 = pneg %p61
        %p259 = pneg %p58
        %p260 = pneg %p82
        %p261 = pneg %p79
        %p262 = pneg %p103
        %p263 = pneg %p100
        %p264 = pneg %p124
        %p265 = pneg %p121
        %p266 = pneg %p150
        %p267 = pneg %p147
        %s268 = sand.u32 %s137, 1
        %s269 = sand.u32 %s137, 1
        %s270 = smul.addr %s269, 8
        %s271 = scalar_lea.vmem [#allocation2], %s270
        %p272 = pneg %p176
        %p273 = pneg %p173
        %s274 = sand.u32 %s163, 1
        %s275 = sand.u32 %s163, 1
        %s276 = smul.addr %s275, 8
        %s277 = scalar_lea.vmem [#allocation3], %s276
        %p278 = pneg %p202
        %p279 = pneg %p199
        %s280 = smul.u32 16, %s19
        %p281 = scmp.lt.s32.totalorder %s280, 31
        %s282 = scalar_select %p281, %s280, 31
        %s283 = smul.addr %s282, 4
        %s284 = scalar_lea.vmem %s7, %s283
        %s285 = smul.u32 8, %s19
        %p286 = scmp.lt.s32.totalorder %s285, 15
        %s287 = scalar_select %p286, %s285, 15
        %s288 = smul.addr %s287, 2
        %s289 = smul.addr %s288, 8
        %s290 = scalar_lea.vmem %s0, %s289
        %s291 = smul.u32 8, %s19
        %s292 = smul.u32 16, %s19
        %p293 = scmp.lt.s32.totalorder %s292, 31
        %s294 = scalar_select %p293, %s292, 31
        %s295 = smul.addr %s294, 4
        %s296 = scalar_lea.vmem %s7, %s295
        %s297 = smul.u32 16, %s19
        %v299 = vld [vmem:[%s290] sm:$0xff]
        %v300 = vld [vmem:[%s290 + $0x8] sm:$0xff]
        %v301 = vld [vmem:[%s290 + $0x10] sm:$0xff]
        %v302 = vld [vmem:[%s290 + $0x18] sm:$0xff]
        %v303 = vld [vmem:[%s290 + $0x20] sm:$0xff]
        %v304 = vld [vmem:[%s290 + $0x28] sm:$0xff]
        %v305 = vld [vmem:[%s290 + $0x30] sm:$0xff]
        %v306 = vld [vmem:[%s290 + $0x38] sm:$0xff]
        %v307 = vld [vmem:[%s290 + $0x40] sm:$0xff]
        %v308 = vld [vmem:[%s290 + $0x48] sm:$0xff]
        %v309 = vld [vmem:[%s290 + $0x50] sm:$0xff]
        %v310 = vld [vmem:[%s290 + $0x58] sm:$0xff]
        %v311 = vld [vmem:[%s290 + $0x60] sm:$0xff]
        %v312 = vld [vmem:[%s290 + $0x68] sm:$0xff]
        %v313 = vld [vmem:[%s290 + $0x70] sm:$0xff]
        %v314 = vld [vmem:[%s290 + $0x78] sm:$0xff]
        %vm315 = vcmask 261120
        %v316 = vsel %vm315, %v299, 0.0
        %317 = vadd.xlane.f32.xlu0 %v316
        %v318 = vpop.xlane.xlu0 %317
        %v319 = vsel %vm315, %v300, 0.0
        %320 = vadd.xlane.f32.xlu0 %v319
        %v321 = vpop.xlane.xlu0 %320
        %v322 = vsel %vm315, %v301, 0.0
        %323 = vadd.xlane.f32.xlu0 %v322
        %v324 = vpop.xlane.xlu0 %323
        %v325 = vsel %vm315, %v302, 0.0
        %326 = vadd.xlane.f32.xlu0 %v325
        %v327 = vpop.xlane.xlu0 %326
        %v328 = vsel %vm315, %v303, 0.0
        %329 = vadd.xlane.f32.xlu0 %v328
        %v330 = vpop.xlane.xlu0 %329
        %v331 = vsel %vm315, %v304, 0.0
        %332 = vadd.xlane.f32.xlu0 %v331
        %v333 = vpop.xlane.xlu0 %332
        %v334 = vsel %vm315, %v305, 0.0
        %335 = vadd.xlane.f32.xlu0 %v334
        %v336 = vpop.xlane.xlu0 %335
        %v337 = vsel %vm315, %v306, 0.0
        %338 = vadd.xlane.f32.xlu0 %v337
        %v339 = vpop.xlane.xlu0 %338
        %v340 = vsel %vm315, %v307, 0.0
        %341 = vadd.xlane.f32.xlu0 %v340
        %v342 = vpop.xlane.xlu0 %341
        %v343 = vsel %vm315, %v308, 0.0
        %344 = vadd.xlane.f32.xlu0 %v343
        %v345 = vpop.xlane.xlu0 %344
        %v346 = vsel %vm315, %v309, 0.0
        %347 = vadd.xlane.f32.xlu0 %v346
        %v348 = vpop.xlane.xlu0 %347
        %v349 = vsel %vm315, %v310, 0.0
        %350 = vadd.xlane.f32.xlu0 %v349
        %v351 = vpop.xlane.xlu0 %350
        %v352 = vsel %vm315, %v311, 0.0
        %353 = vadd.xlane.f32.xlu0 %v352
        %v354 = vpop.xlane.xlu0 %353
        %v355 = vsel %vm315, %v312, 0.0
        %356 = vadd.xlane.f32.xlu0 %v355
        %v357 = vpop.xlane.xlu0 %356
        %v358 = vsel %vm315, %v313, 0.0
        %359 = vadd.xlane.f32.xlu0 %v358
        %v360 = vpop.xlane.xlu0 %359
        %v361 = vsel %vm315, %v314, 0.0
        %362 = vadd.xlane.f32.xlu0 %v361
        %v363 = vpop.xlane.xlu0 %362
        %v364 = vrcp.pop 32.0
        %v365 = vmul.f32 32.0, %v364
        %v366 = vsub.f32 1.0, %v365
        %v367 = vmul.f32 %v364, %v366
        %v368 = vadd.f32 %v364, %v367
        %vm369 = vweird.f32 %v364
        %v370 = vsel %vm369, %v364, %v368
        %v371 = vmul.f32 %v318, %v370
        %v372 = vmul.f32 %v321, %v370
        %v373 = vmul.f32 %v324, %v370
        %v374 = vmul.f32 %v327, %v370
        %v375 = vmul.f32 %v330, %v370
        %v376 = vmul.f32 %v333, %v370
        %v377 = vmul.f32 %v336, %v370
        %v378 = vmul.f32 %v339, %v370
        %v379 = vmul.f32 %v342, %v370
        %v380 = vmul.f32 %v345, %v370
        %v381 = vmul.f32 %v348, %v370
        %v382 = vmul.f32 %v351, %v370
        %v383 = vmul.f32 %v354, %v370
        %v384 = vmul.f32 %v357, %v370
        %v385 = vmul.f32 %v360, %v370
        %v386 = vmul.f32 %v363, %v370
        %v387 = vsub.f32 %v299, %v371
        %v388 = vsub.f32 %v300, %v372
        %v389 = vsub.f32 %v301, %v373
        %v390 = vsub.f32 %v302, %v374
        %v391 = vsub.f32 %v303, %v375
        %v392 = vsub.f32 %v304, %v376
        %v393 = vsub.f32 %v305, %v377
        %v394 = vsub.f32 %v306, %v378
        %v395 = vsub.f32 %v307, %v379
        %v396 = vsub.f32 %v308, %v380
        %v397 = vsub.f32 %v309, %v381
        %v398 = vsub.f32 %v310, %v382
        %v399 = vsub.f32 %v311, %v383
        %v400 = vsub.f32 %v312, %v384
        %v401 = vsub.f32 %v313, %v385
        %v402 = vsub.f32 %v314, %v386
        %v403 = vmul.f32 %v387, %v387
        %v404 = vmul.f32 %v388, %v388
        %v405 = vmul.f32 %v389, %v389
        %v406 = vmul.f32 %v390, %v390
        %v407 = vmul.f32 %v391, %v391
        %v408 = vmul.f32 %v392, %v392
        %v409 = vmul.f32 %v393, %v393
        %v410 = vmul.f32 %v394, %v394
        %v411 = vmul.f32 %v395, %v395
        %v412 = vmul.f32 %v396, %v396
        %v413 = vmul.f32 %v397, %v397
        %v414 = vmul.f32 %v398, %v398
        %v415 = vmul.f32 %v399, %v399
        %v416 = vmul.f32 %v400, %v400
        %v417 = vmul.f32 %v401, %v401
        %v418 = vmul.f32 %v402, %v402
        %v419 = vsel %vm315, %v403, 0.0
        %420 = vadd.xlane.f32.xlu0 %v419
        %v421 = vpop.xlane.xlu0 %420
        %v422 = vsel %vm315, %v404, 0.0
        %423 = vadd.xlane.f32.xlu0 %v422
        %v424 = vpop.xlane.xlu0 %423
        %v425 = vsel %vm315, %v405, 0.0
        %426 = vadd.xlane.f32.xlu0 %v425
        %v427 = vpop.xlane.xlu0 %426
        %v428 = vsel %vm315, %v406, 0.0
        %429 = vadd.xlane.f32.xlu0 %v428
        %v430 = vpop.xlane.xlu0 %429
        %v431 = vsel %vm315, %v407, 0.0
        %432 = vadd.xlane.f32.xlu0 %v431
        %v433 = vpop.xlane.xlu0 %432
        %v434 = vsel %vm315, %v408, 0.0
        %435 = vadd.xlane.f32.xlu0 %v434
        %v436 = vpop.xlane.xlu0 %435
        %v437 = vsel %vm315, %v409, 0.0
        %438 = vadd.xlane.f32.xlu0 %v437
        %v439 = vpop.xlane.xlu0 %438
        %v440 = vsel %vm315, %v410, 0.0
        %441 = vadd.xlane.f32.xlu0 %v440
        %v442 = vpop.xlane.xlu0 %441
        %v443 = vsel %vm315, %v411, 0.0
        %444 = vadd.xlane.f32.xlu0 %v443
        %v445 = vpop.xlane.xlu0 %444
        %v446 = vsel %vm315, %v412, 0.0
        %447 = vadd.xlane.f32.xlu0 %v446
        %v448 = vpop.xlane.xlu0 %447
        %v449 = vsel %vm315, %v413, 0.0
        %450 = vadd.xlane.f32.xlu0 %v449
        %v451 = vpop.xlane.xlu0 %450
        %v452 = vsel %vm315, %v414, 0.0
        %453 = vadd.xlane.f32.xlu0 %v452
        %v454 = vpop.xlane.xlu0 %453
        %v455 = vsel %vm315, %v415, 0.0
        %456 = vadd.xlane.f32.xlu0 %v455
        %v457 = vpop.xlane.xlu0 %456
        %v458 = vsel %vm315, %v416, 0.0
        %459 = vadd.xlane.f32.xlu0 %v458
        %v460 = vpop.xlane.xlu0 %459
        %v461 = vsel %vm315, %v417, 0.0
        %462 = vadd.xlane.f32.xlu0 %v461
        %v463 = vpop.xlane.xlu0 %462
        %v464 = vsel %vm315, %v418, 0.0
        %465 = vadd.xlane.f32.xlu0 %v464
        %v466 = vpop.xlane.xlu0 %465
        %v467 = vmul.f32 %v421, %v370
        %v468 = vmul.f32 %v424, %v370
        %v469 = vmul.f32 %v427, %v370
        %v470 = vmul.f32 %v430, %v370
        %v471 = vmul.f32 %v433, %v370
        %v472 = vmul.f32 %v436, %v370
        %v473 = vmul.f32 %v439, %v370
        %v474 = vmul.f32 %v442, %v370
        %v475 = vmul.f32 %v445, %v370
        %v476 = vmul.f32 %v448, %v370
        %v477 = vmul.f32 %v451, %v370
        %v478 = vmul.f32 %v454, %v370
        %v479 = vmul.f32 %v457, %v370
        %v480 = vmul.f32 %v460, %v370
        %v481 = vmul.f32 %v463, %v370
        %v482 = vmul.f32 %v466, %v370
        %v483 = vadd.f32 %v467, 1e-05
        %v484 = vadd.f32 %v468, 1e-05
        %v485 = vadd.f32 %v469, 1e-05
        %v486 = vadd.f32 %v470, 1e-05
        %v487 = vadd.f32 %v471, 1e-05
        %v488 = vadd.f32 %v472, 1e-05
        %v489 = vadd.f32 %v473, 1e-05
        %v490 = vadd.f32 %v474, 1e-05
        %v491 = vadd.f32 %v475, 1e-05
        %v492 = vadd.f32 %v476, 1e-05
        %v493 = vadd.f32 %v477, 1e-05
        %v494 = vadd.f32 %v478, 1e-05
        %v495 = vadd.f32 %v479, 1e-05
        %v496 = vadd.f32 %v480, 1e-05
        %v497 = vadd.f32 %v481, 1e-05
        %v498 = vadd.f32 %v482, 1e-05
        %v499 = vrsqrt.pop %v483
        %v500 = vmul.f32 %v499, %v483
        %v501 = vmul.f32 %v500, %v499
        %v502 = vmul.f32 0.5, %v501
        %v503 = vsub.f32 1.5, %v502
        %v504 = vmul.f32 %v499, %v503
        %vm505 = vweird.f32 %v483
        %vm506 = vweird.f32 %v499
        %vm507 = vmor %vm505, %vm506
        %v508 = vsel %vm507, %v499, %v504
        %v509 = vrsqrt.pop %v484
        %v510 = vmul.f32 %v509, %v484
        %v511 = vmul.f32 %v510, %v509
        %v512 = vmul.f32 0.5, %v511
        %v513 = vsub.f32 1.5, %v512
        %v514 = vmul.f32 %v509, %v513
        %vm515 = vweird.f32 %v484
        %vm516 = vweird.f32 %v509
        %vm517 = vmor %vm515, %vm516
        %v518 = vsel %vm517, %v509, %v514
        %v519 = vrsqrt.pop %v485
        %v520 = vmul.f32 %v519, %v485
        %v521 = vmul.f32 %v520, %v519
        %v522 = vmul.f32 0.5, %v521
        %v523 = vsub.f32 1.5, %v522
        %v524 = vmul.f32 %v519, %v523
        %vm525 = vweird.f32 %v485
        %vm526 = vweird.f32 %v519
        %vm527 = vmor %vm525, %vm526
        %v528 = vsel %vm527, %v519, %v524
        %v529 = vrsqrt.pop %v486
        %v530 = vmul.f32 %v529, %v486
        %v531 = vmul.f32 %v530, %v529
        %v532 = vmul.f32 0.5, %v531
        %v533 = vsub.f32 1.5, %v532
        %v534 = vmul.f32 %v529, %v533
        %vm535 = vweird.f32 %v486
        %vm536 = vweird.f32 %v529
        %vm537 = vmor %vm535, %vm536
        %v538 = vsel %vm537, %v529, %v534
        %v539 = vrsqrt.pop %v487
        %v540 = vmul.f32 %v539, %v487
        %v541 = vmul.f32 %v540, %v539
        %v542 = vmul.f32 0.5, %v541
        %v543 = vsub.f32 1.5, %v542
        %v544 = vmul.f32 %v539, %v543
        %vm545 = vweird.f32 %v487
        %vm546 = vweird.f32 %v539
        %vm547 = vmor %vm545, %vm546
        %v548 = vsel %vm547, %v539, %v544
        %v549 = vrsqrt.pop %v488
        %v550 = vmul.f32 %v549, %v488
        %v551 = vmul.f32 %v550, %v549
        %v552 = vmul.f32 0.5, %v551
        %v553 = vsub.f32 1.5, %v552
        %v554 = vmul.f32 %v549, %v553
        %vm555 = vweird.f32 %v488
        %vm556 = vweird.f32 %v549
        %vm557 = vmor %vm555, %vm556
        %v558 = vsel %vm557, %v549, %v554
        %v559 = vrsqrt.pop %v489
        %v560 = vmul.f32 %v559, %v489
        %v561 = vmul.f32 %v560, %v559
        %v562 = vmul.f32 0.5, %v561
        %v563 = vsub.f32 1.5, %v562
        %v564 = vmul.f32 %v559, %v563
        %vm565 = vweird.f32 %v489
        %vm566 = vweird.f32 %v559
        %vm567 = vmor %vm565, %vm566
        %v568 = vsel %vm567, %v559, %v564
        %v569 = vrsqrt.pop %v490
        %v570 = vmul.f32 %v569, %v490
        %v571 = vmul.f32 %v570, %v569
        %v572 = vmul.f32 0.5, %v571
        %v573 = vsub.f32 1.5, %v572
        %v574 = vmul.f32 %v569, %v573
        %vm575 = vweird.f32 %v490
        %vm576 = vweird.f32 %v569
        %vm577 = vmor %vm575, %vm576
        %v578 = vsel %vm577, %v569, %v574
        %v579 = vrsqrt.pop %v491
        %v580 = vmul.f32 %v579, %v491
        %v581 = vmul.f32 %v580, %v579
        %v582 = vmul.f32 0.5, %v581
        %v583 = vsub.f32 1.5, %v582
        %v584 = vmul.f32 %v579, %v583
        %vm585 = vweird.f32 %v491
        %vm586 = vweird.f32 %v579
        %vm587 = vmor %vm585, %vm586
        %v588 = vsel %vm587, %v579, %v584
        %v589 = vrsqrt.pop %v492
        %v590 = vmul.f32 %v589, %v492
        %v591 = vmul.f32 %v590, %v589
        %v592 = vmul.f32 0.5, %v591
        %v593 = vsub.f32 1.5, %v592
        %v594 = vmul.f32 %v589, %v593
        %vm595 = vweird.f32 %v492
        %vm596 = vweird.f32 %v589
        %vm597 = vmor %vm595, %vm596
        %v598 = vsel %vm597, %v589, %v594
        %v599 = vrsqrt.pop %v493
        %v600 = vmul.f32 %v599, %v493
        %v601 = vmul.f32 %v600, %v599
        %v602 = vmul.f32 0.5, %v601
        %v603 = vsub.f32 1.5, %v602
        %v604 = vmul.f32 %v599, %v603
        %vm605 = vweird.f32 %v493
        %vm606 = vweird.f32 %v599
        %vm607 = vmor %vm605, %vm606
        %v608 = vsel %vm607, %v599, %v604
        %v609 = vrsqrt.pop %v494
        %v610 = vmul.f32 %v609, %v494
        %v611 = vmul.f32 %v610, %v609
        %v612 = vmul.f32 0.5, %v611
        %v613 = vsub.f32 1.5, %v612
        %v614 = vmul.f32 %v609, %v613
        %vm615 = vweird.f32 %v494
        %vm616 = vweird.f32 %v609
        %vm617 = vmor %vm615, %vm616
        %v618 = vsel %vm617, %v609, %v614
        %v619 = vrsqrt.pop %v495
        %v620 = vmul.f32 %v619, %v495
        %v621 = vmul.f32 %v620, %v619
        %v622 = vmul.f32 0.5, %v621
        %v623 = vsub.f32 1.5, %v622
        %v624 = vmul.f32 %v619, %v623
        %vm625 = vweird.f32 %v495
        %vm626 = vweird.f32 %v619
        %vm627 = vmor %vm625, %vm626
        %v628 = vsel %vm627, %v619, %v624
        %v629 = vrsqrt.pop %v496
        %v630 = vmul.f32 %v629, %v496
        %v631 = vmul.f32 %v630, %v629
        %v632 = vmul.f32 0.5, %v631
        %v633 = vsub.f32 1.5, %v632
        %v634 = vmul.f32 %v629, %v633
        %vm635 = vweird.f32 %v496
        %vm636 = vweird.f32 %v629
        %vm637 = vmor %vm635, %vm636
        %v638 = vsel %vm637, %v629, %v634
        %v639 = vrsqrt.pop %v497
        %v640 = vmul.f32 %v639, %v497
        %v641 = vmul.f32 %v640, %v639
        %v642 = vmul.f32 0.5, %v641
        %v643 = vsub.f32 1.5, %v642
        %v644 = vmul.f32 %v639, %v643
        %vm645 = vweird.f32 %v497
        %vm646 = vweird.f32 %v639
        %vm647 = vmor %vm645, %vm646
        %v648 = vsel %vm647, %v639, %v644
        %v649 = vrsqrt.pop %v498
        %v650 = vmul.f32 %v649, %v498
        %v651 = vmul.f32 %v650, %v649
        %v652 = vmul.f32 0.5, %v651
        %v653 = vsub.f32 1.5, %v652
        %v654 = vmul.f32 %v649, %v653
        %vm655 = vweird.f32 %v498
        %vm656 = vweird.f32 %v649
        %vm657 = vmor %vm655, %vm656
        %v658 = vsel %vm657, %v649, %v654
        %v659 = vmul.f32 %v387, %v508
        %v660 = vmul.f32 %v388, %v518
        %v661 = vmul.f32 %v389, %v528
        %v662 = vmul.f32 %v390, %v538
        %v663 = vmul.f32 %v391, %v548
        %v664 = vmul.f32 %v392, %v558
        %v665 = vmul.f32 %v393, %v568
        %v666 = vmul.f32 %v394, %v578
        %v667 = vmul.f32 %v395, %v588
        %v668 = vmul.f32 %v396, %v598
        %v669 = vmul.f32 %v397, %v608
        %v670 = vmul.f32 %v398, %v618
        %v671 = vmul.f32 %v399, %v628
        %v672 = vmul.f32 %v400, %v638
        %v673 = vmul.f32 %v401, %v648
        %v674 = vmul.f32 %v402, %v658
        %v675 = vld [vmem:[%s1] sm:$0x1]
        %v677 = vperm.slane %v675, 0
        %v679 = vmul.f32 %v659, %v677
        %v680 = vmul.f32 %v660, %v677
        %v681 = vmul.f32 %v661, %v677
        %v682 = vmul.f32 %v662, %v677
        %v683 = vmul.f32 %v663, %v677
        %v684 = vmul.f32 %v664, %v677
        %v685 = vmul.f32 %v665, %v677
        %v686 = vmul.f32 %v666, %v677
        %v687 = vmul.f32 %v667, %v677
        %v688 = vmul.f32 %v668, %v677
        %v689 = vmul.f32 %v669, %v677
        %v690 = vmul.f32 %v670, %v677
        %v691 = vmul.f32 %v671, %v677
        %v692 = vmul.f32 %v672, %v677
        %v693 = vmul.f32 %v673, %v677
        %v694 = vmul.f32 %v674, %v677
        %v695 = vld [vmem:[%s2] sm:$0x1]
        %v697 = vperm.slane %v695, 0
        %v699 = vadd.f32 %v679, %v697
        %v700 = vadd.f32 %v680, %v697
        %v701 = vadd.f32 %v681, %v697
        %v702 = vadd.f32 %v682, %v697
        %v703 = vadd.f32 %v683, %v697
        %v704 = vadd.f32 %v684, %v697
        %v705 = vadd.f32 %v685, %v697
        %v706 = vadd.f32 %v686, %v697
        %v707 = vadd.f32 %v687, %v697
        %v708 = vadd.f32 %v688, %v697
        %v709 = vadd.f32 %v689, %v697
        %v710 = vadd.f32 %v690, %v697
        %v711 = vadd.f32 %v691, %v697
        %v712 = vadd.f32 %v692, %v697
        %v713 = vadd.f32 %v693, %v697
        %v714 = vadd.f32 %v694, %v697
        %v715 = vpack.c.bf16 %v700, %v699
        %v716 = vpack.c.bf16 %v702, %v701
        %v717 = vpack.c.bf16 %v704, %v703
        %v718 = vpack.c.bf16 %v706, %v705
        %v719 = vpack.c.bf16 %v708, %v707
        %v720 = vpack.c.bf16 %v710, %v709
        %v721 = vpack.c.bf16 %v712, %v711
        %v722 = vpack.c.bf16 %v714, %v713
        %v723 = vld [vmem:[%s3] sm:$0xf]
        %v724 = vld [vmem:[%s3 + $0x4] sm:$0xf]
        %v725 = vld [vmem:[%s3 + $0x8] sm:$0xf]
        %v726 = vld [vmem:[%s3 + $0xc] sm:$0xf]
        %v727 = vld [vmem:[%s4] sm:$0x1]
        %v729 = vperm.slane %v727, 0
        %v735 = vunpack.c.l.b16 %v723
        %v736 = vunpack.c.l.b16 %v724
        %v737 = vunpack.c.l.b16 %v725
        %v738 = vunpack.c.l.b16 %v726
        %v739 = vpack.c.b16 %v736, %v735
        %v740 = vpack.c.b16 %v738, %v737
        %v744 = vsel %vm315, %v715, 0
        %v747 = vsel %vm315, %v716, 0
        %v750 = vsel %vm315, %v717, 0
        %v753 = vsel %vm315, %v718, 0
        %v756 = vsel %vm315, %v719, 0
        %v759 = vsel %vm315, %v720, 0
        %v762 = vsel %vm315, %v721, 0
        %v765 = vsel %vm315, %v722, 0
        %767 = vmatpush.bf16.msra.mxu0 0
        %768 = vmatpush.bf16.msra.mxu0 0
        %769 = vmatpush.bf16.msra.mxu0 0
        %770 = vmatpush.bf16.msra.mxu0 0
        %771 = vmatpush.bf16.msra.mxu0 0
        %772 = vmatpush.bf16.msra.mxu0 0
        %773 = vmatpush.bf16.msra.mxu0 %v740
        %774 = vmatpush.bf16.msra.mxu0 %v739
        %775 = vmatmul.bf16.gmra.mxu0 %v744
        %v776 = vpop.f32.mrf.mxu0
        %v777 = vadd.f32 %v729, %v776
        %v778 = vpop.f32.mrf.mxu0
        %v779 = vadd.f32 %v729, %v778
        %780 = vmatmul.bf16.gmra.mxu0 %v747
        %v781 = vpop.f32.mrf.mxu0
        %v782 = vadd.f32 %v729, %v781
        %v783 = vpop.f32.mrf.mxu0
        %v784 = vadd.f32 %v729, %v783
        %785 = vmatmul.bf16.gmra.mxu0 %v750
        %v786 = vpop.f32.mrf.mxu0
        %v787 = vadd.f32 %v729, %v786
        %v788 = vpop.f32.mrf.mxu0
        %v789 = vadd.f32 %v729, %v788
        %790 = vmatmul.bf16.gmra.mxu0 %v753
        %v791 = vpop.f32.mrf.mxu0
        %v792 = vadd.f32 %v729, %v791
        %v793 = vpop.f32.mrf.mxu0
        %v794 = vadd.f32 %v729, %v793
        %795 = vmatmul.bf16.gmra.mxu0 %v756
        %v796 = vpop.f32.mrf.mxu0
        %v797 = vadd.f32 %v729, %v796
        %v798 = vpop.f32.mrf.mxu0
        %v799 = vadd.f32 %v729, %v798
        %800 = vmatmul.bf16.gmra.mxu0 %v759
        %v801 = vpop.f32.mrf.mxu0
        %v802 = vadd.f32 %v729, %v801
        %v803 = vpop.f32.mrf.mxu0
        %v804 = vadd.f32 %v729, %v803
        %805 = vmatmul.bf16.gmra.mxu0 %v762
        %v806 = vpop.f32.mrf.mxu0
        %v807 = vadd.f32 %v729, %v806
        %v808 = vpop.f32.mrf.mxu0
        %v809 = vadd.f32 %v729, %v808
        %810 = vmatmul.bf16.gmra.mxu0 %v765
        %v811 = vpop.f32.mrf.mxu0
        %v812 = vadd.f32 %v729, %v811
        %v813 = vpop.f32.mrf.mxu0
        %v814 = vadd.f32 %v729, %v813
        %815 = vdwg.mxu0
        %v816 = vmul.f32 %v777, 0.5
        %v817 = vmul.f32 %v779, 0.5
        %v818 = vmul.f32 %v782, 0.5
        %v819 = vmul.f32 %v784, 0.5
        %v820 = vmul.f32 %v787, 0.5
        %v821 = vmul.f32 %v789, 0.5
        %v822 = vmul.f32 %v792, 0.5
        %v823 = vmul.f32 %v794, 0.5
        %v824 = vmul.f32 %v797, 0.5
        %v825 = vmul.f32 %v799, 0.5
        %v826 = vmul.f32 %v802, 0.5
        %v827 = vmul.f32 %v804, 0.5
        %v828 = vmul.f32 %v807, 0.5
        %v829 = vmul.f32 %v809, 0.5
        %v830 = vmul.f32 %v812, 0.5
        %v831 = vmul.f32 %v814, 0.5
        %v832 = vtanh.pop %v816
        %v833 = vtanh.pop %v817
        %v834 = vtanh.pop %v818
        %v835 = vtanh.pop %v819
        %v836 = vtanh.pop %v820
        %v837 = vtanh.pop %v821
        %v838 = vtanh.pop %v822
        %v839 = vtanh.pop %v823
        %v840 = vtanh.pop %v824
        %v841 = vtanh.pop %v825
        %v842 = vtanh.pop %v826
        %v843 = vtanh.pop %v827
        %v844 = vtanh.pop %v828
        %v845 = vtanh.pop %v829
        %v846 = vtanh.pop %v830
        %v847 = vtanh.pop %v831
        %v848 = vadd.f32 %v832, 1.0
        %v849 = vadd.f32 %v833, 1.0
        %v850 = vadd.f32 %v834, 1.0
        %v851 = vadd.f32 %v835, 1.0
        %v852 = vadd.f32 %v836, 1.0
        %v853 = vadd.f32 %v837, 1.0
        %v854 = vadd.f32 %v838, 1.0
        %v855 = vadd.f32 %v839, 1.0
        %v856 = vadd.f32 %v840, 1.0
        %v857 = vadd.f32 %v841, 1.0
        %v858 = vadd.f32 %v842, 1.0
        %v859 = vadd.f32 %v843, 1.0
        %v860 = vadd.f32 %v844, 1.0
        %v861 = vadd.f32 %v845, 1.0
        %v862 = vadd.f32 %v846, 1.0
        %v863 = vadd.f32 %v847, 1.0
        %v864 = vmul.f32 %v848, 0.5
        %v865 = vmul.f32 %v849, 0.5
        %v866 = vmul.f32 %v850, 0.5
        %v867 = vmul.f32 %v851, 0.5
        %v868 = vmul.f32 %v852, 0.5
        %v869 = vmul.f32 %v853, 0.5
        %v870 = vmul.f32 %v854, 0.5
        %v871 = vmul.f32 %v855, 0.5
        %v872 = vmul.f32 %v856, 0.5
        %v873 = vmul.f32 %v857, 0.5
        %v874 = vmul.f32 %v858, 0.5
        %v875 = vmul.f32 %v859, 0.5
        %v876 = vmul.f32 %v860, 0.5
        %v877 = vmul.f32 %v861, 0.5
        %v878 = vmul.f32 %v862, 0.5
        %v879 = vmul.f32 %v863, 0.5
        %896 = vrot.lane.b32.xlu0 %v864, 112
        %v897 = vpop.permute.xlu0 %896
        %898 = vrot.lane.b32.xlu0 %v865, 112
        %v899 = vpop.permute.xlu0 %898
        %900 = vrot.lane.b32.xlu0 %v866, 112
        %v901 = vpop.permute.xlu0 %900
        %902 = vrot.lane.b32.xlu0 %v867, 112
        %v903 = vpop.permute.xlu0 %902
        %904 = vrot.lane.b32.xlu0 %v868, 112
        %v905 = vpop.permute.xlu0 %904
        %906 = vrot.lane.b32.xlu0 %v869, 112
        %v907 = vpop.permute.xlu0 %906
        %908 = vrot.lane.b32.xlu0 %v870, 112
        %v909 = vpop.permute.xlu0 %908
        %910 = vrot.lane.b32.xlu0 %v871, 112
        %v911 = vpop.permute.xlu0 %910
        %912 = vrot.lane.b32.xlu0 %v872, 112
        %v913 = vpop.permute.xlu0 %912
        %914 = vrot.lane.b32.xlu0 %v873, 112
        %v915 = vpop.permute.xlu0 %914
        %916 = vrot.lane.b32.xlu0 %v874, 112
        %v917 = vpop.permute.xlu0 %916
        %918 = vrot.lane.b32.xlu0 %v875, 112
        %v919 = vpop.permute.xlu0 %918
        %920 = vrot.lane.b32.xlu0 %v876, 112
        %v921 = vpop.permute.xlu0 %920
        %922 = vrot.lane.b32.xlu0 %v877, 112
        %v923 = vpop.permute.xlu0 %922
        %924 = vrot.lane.b32.xlu0 %v878, 112
        %v925 = vpop.permute.xlu0 %924
        %926 = vrot.lane.b32.xlu0 %v879, 112
        %v927 = vpop.permute.xlu0 %926
        %v944 = vmul.f32 %v777, %v897
        %v945 = vmul.f32 %v779, %v899
        %v946 = vmul.f32 %v782, %v901
        %v947 = vmul.f32 %v784, %v903
        %v948 = vmul.f32 %v787, %v905
        %v949 = vmul.f32 %v789, %v907
        %v950 = vmul.f32 %v792, %v909
        %v951 = vmul.f32 %v794, %v911
        %v952 = vmul.f32 %v797, %v913
        %v953 = vmul.f32 %v799, %v915
        %v954 = vmul.f32 %v802, %v917
        %v955 = vmul.f32 %v804, %v919
        %v956 = vmul.f32 %v807, %v921
        %v957 = vmul.f32 %v809, %v923
        %v958 = vmul.f32 %v812, %v925
        %v959 = vmul.f32 %v814, %v927
        %v960 = vpack.c.bf16 %v864, %v864
        %v961 = vpack.c.bf16 %v865, %v865
        %v962 = vpack.c.bf16 %v866, %v866
        %v963 = vpack.c.bf16 %v867, %v867
        %v964 = vpack.c.bf16 %v868, %v868
        %v965 = vpack.c.bf16 %v869, %v869
        %v966 = vpack.c.bf16 %v870, %v870
        %v967 = vpack.c.bf16 %v871, %v871
        %v968 = vpack.c.bf16 %v872, %v872
        %v969 = vpack.c.bf16 %v873, %v873
        %v970 = vpack.c.bf16 %v874, %v874
        %v971 = vpack.c.bf16 %v875, %v875
        %v972 = vpack.c.bf16 %v876, %v876
        %v973 = vpack.c.bf16 %v877, %v877
        %v974 = vpack.c.bf16 %v878, %v878
        %v975 = vpack.c.bf16 %v879, %v879
        %992 = vrot.lane.b32.xlu0 %v960, 64
        %v993 = vpop.permute.xlu0 %992
        %994 = vrot.lane.b32.xlu0 %v961, 64
        %v995 = vpop.permute.xlu0 %994
        %996 = vrot.lane.b32.xlu0 %v962, 64
        %v997 = vpop.permute.xlu0 %996
        %998 = vrot.lane.b32.xlu0 %v963, 64
        %v999 = vpop.permute.xlu0 %998
        %1000 = vrot.lane.b32.xlu0 %v964, 64
        %v1001 = vpop.permute.xlu0 %1000
        %1002 = vrot.lane.b32.xlu0 %v965, 64
        %v1003 = vpop.permute.xlu0 %1002
        %1004 = vrot.lane.b32.xlu0 %v966, 64
        %v1005 = vpop.permute.xlu0 %1004
        %1006 = vrot.lane.b32.xlu0 %v967, 64
        %v1007 = vpop.permute.xlu0 %1006
        %1008 = vrot.lane.b32.xlu0 %v968, 64
        %v1009 = vpop.permute.xlu0 %1008
        %1010 = vrot.lane.b32.xlu0 %v969, 64
        %v1011 = vpop.permute.xlu0 %1010
        %1012 = vrot.lane.b32.xlu0 %v970, 64
        %v1013 = vpop.permute.xlu0 %1012
        %1014 = vrot.lane.b32.xlu0 %v971, 64
        %v1015 = vpop.permute.xlu0 %1014
        %1016 = vrot.lane.b32.xlu0 %v972, 64
        %v1017 = vpop.permute.xlu0 %1016
        %1018 = vrot.lane.b32.xlu0 %v973, 64
        %v1019 = vpop.permute.xlu0 %1018
        %1020 = vrot.lane.b32.xlu0 %v974, 64
        %v1021 = vpop.permute.xlu0 %1020
        %1022 = vrot.lane.b32.xlu0 %v975, 64
        %v1023 = vpop.permute.xlu0 %1022
        %vm1040 = vcmask 257024
        %1041 = vst.msk [vmem:[%s296] sm:$0xf] %vm1040, %v993
        %1042 = vst.msk [vmem:[%s296 + $0x4] sm:$0xf] %vm1040, %v995
        %1043 = vst.msk [vmem:[%s296 + $0x8] sm:$0xf] %vm1040, %v997
        %1044 = vst.msk [vmem:[%s296 + $0xc] sm:$0xf] %vm1040, %v999
        %1045 = vst.msk [vmem:[%s296 + $0x10] sm:$0xf] %vm1040, %v1001
        %1046 = vst.msk [vmem:[%s296 + $0x14] sm:$0xf] %vm1040, %v1003
        %1047 = vst.msk [vmem:[%s296 + $0x18] sm:$0xf] %vm1040, %v1005
        %1048 = vst.msk [vmem:[%s296 + $0x1c] sm:$0xf] %vm1040, %v1007
        %1049 = vst.msk [vmem:[%s296 + $0x20] sm:$0xf] %vm1040, %v1009
        %1050 = vst.msk [vmem:[%s296 + $0x24] sm:$0xf] %vm1040, %v1011
        %1051 = vst.msk [vmem:[%s296 + $0x28] sm:$0xf] %vm1040, %v1013
        %1052 = vst.msk [vmem:[%s296 + $0x2c] sm:$0xf] %vm1040, %v1015
        %1053 = vst.msk [vmem:[%s296 + $0x30] sm:$0xf] %vm1040, %v1017
        %1054 = vst.msk [vmem:[%s296 + $0x34] sm:$0xf] %vm1040, %v1019
        %1055 = vst.msk [vmem:[%s296 + $0x38] sm:$0xf] %vm1040, %v1021
        %1056 = vst.msk [vmem:[%s296 + $0x3c] sm:$0xf] %vm1040, %v1023
        %1057 = vxpose.xlu0.b32.start [1/16] %v944, 128
        %1058 = vxpose.xlu0.b32.cont [2/16] %v945, 128
        %1059 = vxpose.xlu0.b32.cont [3/16] %v946, 128
        %1060 = vxpose.xlu0.b32.cont [4/16] %v947, 128
        %1061 = vxpose.xlu0.b32.cont [5/16] %v948, 128
        %1062 = vxpose.xlu0.b32.cont [6/16] %v949, 128
        %1063 = vxpose.xlu0.b32.cont [7/16] %v950, 128
        %1064 = vxpose.xlu0.b32.cont [8/16] %v951, 128
        %1065 = vxpose.xlu0.b32.cont [9/16] %v952, 128
        %1066 = vxpose.xlu0.b32.cont [10/16] %v953, 128
        %1067 = vxpose.xlu0.b32.cont [11/16] %v954, 128
        %1068 = vxpose.xlu0.b32.cont [12/16] %v955, 128
        %1069 = vxpose.xlu0.b32.cont [13/16] %v956, 128
        %1070 = vxpose.xlu0.b32.cont [14/16] %v957, 128
        %1071 = vxpose.xlu0.b32.cont [15/16] %v958, 128
        %1072 = vxpose.xlu0.b32.end [16/16] %v959, 128
        %v1073 = vpop.trf.xlu0
        %v1074 = vpop.trf.xlu0
        %v1075 = vpop.trf.xlu0
        %v1076 = vpop.trf.xlu0
        %v1077 = vpop.trf.xlu0
        %v1078 = vpop.trf.xlu0
        %v1079 = vpop.trf.xlu0
        %v1080 = vpop.trf.xlu0
        %v1081 = vpop.trf.xlu0
        %v1082 = vpop.trf.xlu0
        %v1083 = vpop.trf.xlu0
        %v1084 = vpop.trf.xlu0
        %v1085 = vpop.trf.xlu0
        %v1086 = vpop.trf.xlu0
        %v1087 = vpop.trf.xlu0
        %v1088 = vpop.trf.xlu0
        %v1089 = vpack.c.bf16 %v1073, %v1073
        %v1090 = vpack.c.bf16 %v1074, %v1074
        %1091 = vst [vmem:[%s271] sm:$0xf] %v1089
        %1092 = vst [vmem:[%s271 + $0x4] sm:$0xf] %v1090
        %1109 = vrot.lane.b32.xlu0 %v944, 96
        %v1110 = vpop.permute.xlu0 %1109
        %1111 = vrot.lane.b32.xlu0 %v945, 96
        %v1112 = vpop.permute.xlu0 %1111
        %1113 = vrot.lane.b32.xlu0 %v946, 96
        %v1114 = vpop.permute.xlu0 %1113
        %1115 = vrot.lane.b32.xlu0 %v947, 96
        %v1116 = vpop.permute.xlu0 %1115
        %1117 = vrot.lane.b32.xlu0 %v948, 96
        %v1118 = vpop.permute.xlu0 %1117
        %1119 = vrot.lane.b32.xlu0 %v949, 96
        %v1120 = vpop.permute.xlu0 %1119
        %1121 = vrot.lane.b32.xlu0 %v950, 96
        %v1122 = vpop.permute.xlu0 %1121
        %1123 = vrot.lane.b32.xlu0 %v951, 96
        %v1124 = vpop.permute.xlu0 %1123
        %1125 = vrot.lane.b32.xlu0 %v952, 96
        %v1126 = vpop.permute.xlu0 %1125
        %1127 = vrot.lane.b32.xlu0 %v953, 96
        %v1128 = vpop.permute.xlu0 %1127
        %1129 = vrot.lane.b32.xlu0 %v954, 96
        %v1130 = vpop.permute.xlu0 %1129
        %1131 = vrot.lane.b32.xlu0 %v955, 96
        %v1132 = vpop.permute.xlu0 %1131
        %1133 = vrot.lane.b32.xlu0 %v956, 96
        %v1134 = vpop.permute.xlu0 %1133
        %1135 = vrot.lane.b32.xlu0 %v957, 96
        %v1136 = vpop.permute.xlu0 %1135
        %1137 = vrot.lane.b32.xlu0 %v958, 96
        %v1138 = vpop.permute.xlu0 %1137
        %1139 = vrot.lane.b32.xlu0 %v959, 96
        %v1140 = vpop.permute.xlu0 %1139
        %1157 = vxpose.xlu0.b32.start [1/16] %v1110, 128
        %1158 = vxpose.xlu0.b32.cont [2/16] %v1112, 128
        %1159 = vxpose.xlu0.b32.cont [3/16] %v1114, 128
        %1160 = vxpose.xlu0.b32.cont [4/16] %v1116, 128
        %1161 = vxpose.xlu0.b32.cont [5/16] %v1118, 128
        %1162 = vxpose.xlu0.b32.cont [6/16] %v1120, 128
        %1163 = vxpose.xlu0.b32.cont [7/16] %v1122, 128
        %1164 = vxpose.xlu0.b32.cont [8/16] %v1124, 128
        %1165 = vxpose.xlu0.b32.cont [9/16] %v1126, 128
        %1166 = vxpose.xlu0.b32.cont [10/16] %v1128, 128
        %1167 = vxpose.xlu0.b32.cont [11/16] %v1130, 128
        %1168 = vxpose.xlu0.b32.cont [12/16] %v1132, 128
        %1169 = vxpose.xlu0.b32.cont [13/16] %v1134, 128
        %1170 = vxpose.xlu0.b32.cont [14/16] %v1136, 128
        %1171 = vxpose.xlu0.b32.cont [15/16] %v1138, 128
        %1172 = vxpose.xlu0.b32.end [16/16] %v1140, 128
        %v1173 = vpop.trf.xlu0
        %v1174 = vpop.trf.xlu0
        %v1175 = vpop.trf.xlu0
        %v1176 = vpop.trf.xlu0
        %v1177 = vpop.trf.xlu0
        %v1178 = vpop.trf.xlu0
        %v1179 = vpop.trf.xlu0
        %v1180 = vpop.trf.xlu0
        %v1181 = vpop.trf.xlu0
        %v1182 = vpop.trf.xlu0
        %v1183 = vpop.trf.xlu0
        %v1184 = vpop.trf.xlu0
        %v1185 = vpop.trf.xlu0
        %v1186 = vpop.trf.xlu0
        %v1187 = vpop.trf.xlu0
        %v1188 = vpop.trf.xlu0
        %v1189 = vpack.c.bf16 %v1173, %v1173
        %v1190 = vpack.c.bf16 %v1174, %v1174
        %1191 = vst [vmem:[%s277] sm:$0xf] %v1189
        %1192 = vst [vmem:[%s277 + $0x4] sm:$0xf] %v1190
        %s1193 = sand.u32 %s137, 1
        %s1194 = sand.u32 %s137, 1
        %s1195 = smul.addr %s1194, 8
        %s1196 = scalar_lea.vmem [#allocation2], %s1195
        %s1197 = sand.u32 %s163, 1
        %s1198 = sand.u32 %s163, 1
        %s1199 = smul.addr %s1198, 8
        %s1200 = scalar_lea.vmem [#allocation3], %s1199
        %s1201 = smul.u32 16, %s19
        %p1202 = scmp.lt.s32.totalorder %s1201, 31
        %s1203 = scalar_select %p1202, %s1201, 31
        %s1204 = smul.addr %s1203, 4
        %s1205 = scalar_lea.vmem %s7, %s1204
        // Predicated region
        $region41: #{tri_model_forward.6} parent=39 // pred_check
          %p1206 = pneg %p147
        $region42: #{tri_model_forward.6} parent=39 // pred_check_branch
          %1208 = sbr.rel (%p1206) target = $region44
        $region43: #{tri_model_forward.6} parent=39 // pred_region
          %s1209 = smul.addr %s19, 4
          %s1210 = scalar_lea.vmem %s5, %s1209
          // Predicated region
          $region45: #{tri_model_forward.6} parent=43 // pred_check
            _
          $region46: #{tri_model_forward.6} parent=43 // pred_check_branch
            %1212 = sbr.rel (0) target = $region48
          $region47: #{tri_model_forward.6} parent=43 // pred_region
            // Predicated region
            $region49: #{tri_model_forward.6} parent=47 // pred_check
              _
            $region50: #{tri_model_forward.6} parent=47 // pred_check_branch
              %1214 = sbr.rel target = $region52
            $region51: #{tri_model_forward.6} parent=47 // pred_region
              // Predicated region
              $region64: #{tri_model_forward.6} parent=51 // pred_check
                _
              $region65: #{tri_model_forward.6} parent=51 // pred_check_branch
                %1232 = sbr.rel (0) target = $region67
              $region66: #{tri_model_forward.6} parent=51 // pred_region
                loop: start=0, step=1, limit=1
                $region68: #{tri_model_forward.6} parent=66 // loop_pre_header
                  _
                $region69: #{tri_model_forward.6} parent=66 // loop_header
                  %s1234 = sphi 0, %s1238
                  %p1235 = scmp.ge.s32.totalorder %s1234, 1
                  %s1239 = sphi %s1196, %s1196
                  %s1240 = sphi %s1210, %s1210
                $region70: #{tri_model_forward.6} parent=66 // loop_header_branch
                  %1237 = sbr.rel (%p1235) target = $region74
                $region71: #{tri_model_forward.6} parent=66 // loop_body
                  _
                $region72: #{tri_model_forward.6} parent=66 // loop_footer
                  %s1238 = sadd.s32 1, %s1234
                $region73: #{tri_model_forward.6} parent=66 // loop_footer_branch
                  %1233 = sbr.rel target = $region69
                $region74: #{tri_model_forward.6} parent=66 // loop_exit
                  _
                %s1242 = ssub.s32 16, 1
                loop: start=0, step=1, limit=1
                $region75: #{tri_model_forward.6} parent=66 // loop_pre_header
                  _
                $region76: #{tri_model_forward.6} parent=66 // loop_header
                  %s1244 = sphi 0, %s1248
                  %p1245 = scmp.ge.s32.totalorder %s1244, 1
                  %s1249 = sphi %s1196, %s1196
                  %s1250 = sphi %s1210, %s1210
                $region77: #{tri_model_forward.6} parent=66 // loop_header_branch
                  %1247 = sbr.rel (%p1245) target = $region81
                $region78: #{tri_model_forward.6} parent=66 // loop_body
                  %v1251 = vld [vmem:[%s1249] sm:%s1242]
                  %1252 = vst [vmem:[%s1250] sm:%s1242] %v1251
                  %v1253 = vld [vmem:[%s1249 + $0x4] sm:%s1242]
                  %1254 = vst [vmem:[%s1250 + $0x8] sm:%s1242] %v1253
                $region79: #{tri_model_forward.6} parent=66 // loop_footer
                  %s1248 = sadd.s32 1, %s1244
                $region80: #{tri_model_forward.6} parent=66 // loop_footer_branch
                  %1243 = sbr.rel target = $region76
                $region81: #{tri_model_forward.6} parent=66 // loop_exit
                  _
              $region67: #{tri_model_forward.6} parent=51 // pred_fallthru
                _
            $region52: #{tri_model_forward.6} parent=47 // pred_fallthru
              _
            // Predicated region
            $region53: #{tri_model_forward.6} parent=47 // pred_check
              _
            $region54: #{tri_model_forward.6} parent=47 // pred_check_branch
              %1216 = sbr.rel (0) target = $region56
            $region55: #{tri_model_forward.6} parent=47 // pred_region
              %s1218 = ssub.s32 16, 1
              loop: start=0, step=1, limit=1
              $region57: #{tri_model_forward.6} parent=55 // loop_pre_header
                _
              $region58: #{tri_model_forward.6} parent=55 // loop_header
                %s1220 = sphi 0, %s1224
                %p1221 = scmp.ge.s32.totalorder %s1220, 1
                %s1225 = sphi %s1196, %s1196
                %s1226 = sphi %s1210, %s1210
              $region59: #{tri_model_forward.6} parent=55 // loop_header_branch
                %1223 = sbr.rel (%p1221) target = $region63
              $region60: #{tri_model_forward.6} parent=55 // loop_body
                %v1227 = vld [vmem:[%s1225] sm:%s1218]
                %1228 = vst [vmem:[%s1226] sm:%s1218] %v1227
                %v1229 = vld [vmem:[%s1225 + $0x4] sm:%s1218]
                %1230 = vst [vmem:[%s1226 + $0x8] sm:%s1218] %v1229
              $region61: #{tri_model_forward.6} parent=55 // loop_footer
                %s1224 = sadd.s32 1, %s1220
              $region62: #{tri_model_forward.6} parent=55 // loop_footer_branch
                %1219 = sbr.rel target = $region58
              $region63: #{tri_model_forward.6} parent=55 // loop_exit
                _
            $region56: #{tri_model_forward.6} parent=47 // pred_fallthru
              _
          $region48: #{tri_model_forward.6} parent=43 // pred_fallthru
            _
          %1255 = vnop
        $region44: #{tri_model_forward.6} parent=39 // pred_fallthru
          _
        // Predicated region
        $region82: #{tri_model_forward.6} parent=39 // pred_check
          %p1256 = pneg %p173
        $region83: #{tri_model_forward.6} parent=39 // pred_check_branch
          %1258 = sbr.rel (%p1256) target = $region85
        $region84: #{tri_model_forward.6} parent=39 // pred_region
          %s1259 = smul.addr %s19, 4
          %s1260 = scalar_lea.vmem %s6, %s1259
          // Predicated region
          $region86: #{tri_model_forward.6} parent=84 // pred_check
            _
          $region87: #{tri_model_forward.6} parent=84 // pred_check_branch
            %1262 = sbr.rel (0) target = $region89
          $region88: #{tri_model_forward.6} parent=84 // pred_region
            // Predicated region
            $region90: #{tri_model_forward.6} parent=88 // pred_check
              _
            $region91: #{tri_model_forward.6} parent=88 // pred_check_branch
              %1264 = sbr.rel target = $region93
            $region92: #{tri_model_forward.6} parent=88 // pred_region
              // Predicated region
              $region105: #{tri_model_forward.6} parent=92 // pred_check
                _
              $region106: #{tri_model_forward.6} parent=92 // pred_check_branch
                %1282 = sbr.rel (0) target = $region108
              $region107: #{tri_model_forward.6} parent=92 // pred_region
                loop: start=0, step=1, limit=1
                $region109: #{tri_model_forward.6} parent=107 // loop_pre_header
                  _
                $region110: #{tri_model_forward.6} parent=107 // loop_header
                  %s1284 = sphi 0, %s1288
                  %p1285 = scmp.ge.s32.totalorder %s1284, 1
                  %s1289 = sphi %s1200, %s1200
                  %s1290 = sphi %s1260, %s1260
                $region111: #{tri_model_forward.6} parent=107 // loop_header_branch
                  %1287 = sbr.rel (%p1285) target = $region115
                $region112: #{tri_model_forward.6} parent=107 // loop_body
                  _
                $region113: #{tri_model_forward.6} parent=107 // loop_footer
                  %s1288 = sadd.s32 1, %s1284
                $region114: #{tri_model_forward.6} parent=107 // loop_footer_branch
                  %1283 = sbr.rel target = $region110
                $region115: #{tri_model_forward.6} parent=107 // loop_exit
                  _
                %s1292 = ssub.s32 16, 1
                loop: start=0, step=1, limit=1
                $region116: #{tri_model_forward.6} parent=107 // loop_pre_header
                  _
                $region117: #{tri_model_forward.6} parent=107 // loop_header
                  %s1294 = sphi 0, %s1298
                  %p1295 = scmp.ge.s32.totalorder %s1294, 1
                  %s1299 = sphi %s1200, %s1200
                  %s1300 = sphi %s1260, %s1260
                $region118: #{tri_model_forward.6} parent=107 // loop_header_branch
                  %1297 = sbr.rel (%p1295) target = $region122
                $region119: #{tri_model_forward.6} parent=107 // loop_body
                  %v1301 = vld [vmem:[%s1299] sm:%s1292]
                  %1302 = vst [vmem:[%s1300] sm:%s1292] %v1301
                  %v1303 = vld [vmem:[%s1299 + $0x4] sm:%s1292]
                  %1304 = vst [vmem:[%s1300 + $0x8] sm:%s1292] %v1303
                $region120: #{tri_model_forward.6} parent=107 // loop_footer
                  %s1298 = sadd.s32 1, %s1294
                $region121: #{tri_model_forward.6} parent=107 // loop_footer_branch
                  %1293 = sbr.rel target = $region117
                $region122: #{tri_model_forward.6} parent=107 // loop_exit
                  _
              $region108: #{tri_model_forward.6} parent=92 // pred_fallthru
                _
            $region93: #{tri_model_forward.6} parent=88 // pred_fallthru
              _
            // Predicated region
            $region94: #{tri_model_forward.6} parent=88 // pred_check
              _
            $region95: #{tri_model_forward.6} parent=88 // pred_check_branch
              %1266 = sbr.rel (0) target = $region97
            $region96: #{tri_model_forward.6} parent=88 // pred_region
              %s1268 = ssub.s32 16, 1
              loop: start=0, step=1, limit=1
              $region98: #{tri_model_forward.6} parent=96 // loop_pre_header
                _
              $region99: #{tri_model_forward.6} parent=96 // loop_header
                %s1270 = sphi 0, %s1274
                %p1271 = scmp.ge.s32.totalorder %s1270, 1
                %s1275 = sphi %s1200, %s1200
                %s1276 = sphi %s1260, %s1260
              $region100: #{tri_model_forward.6} parent=96 // loop_header_branch
                %1273 = sbr.rel (%p1271) target = $region104
              $region101: #{tri_model_forward.6} parent=96 // loop_body
                %v1277 = vld [vmem:[%s1275] sm:%s1268]
                %1278 = vst [vmem:[%s1276] sm:%s1268] %v1277
                %v1279 = vld [vmem:[%s1275 + $0x4] sm:%s1268]
                %1280 = vst [vmem:[%s1276 + $0x8] sm:%s1268] %v1279
              $region102: #{tri_model_forward.6} parent=96 // loop_footer
                %s1274 = sadd.s32 1, %s1270
              $region103: #{tri_model_forward.6} parent=96 // loop_footer_branch
                %1269 = sbr.rel target = $region99
              $region104: #{tri_model_forward.6} parent=96 // loop_exit
                _
            $region97: #{tri_model_forward.6} parent=88 // pred_fallthru
              _
          $region89: #{tri_model_forward.6} parent=84 // pred_fallthru
            _
          %1305 = vnop
        $region85: #{tri_model_forward.6} parent=39 // pred_fallthru
          _
        // Predicated region
        $region123: #{tri_model_forward.6} parent=39 // pred_check
          %p1306 = pneg %p199
        $region124: #{tri_model_forward.6} parent=39 // pred_check_branch
          %1308 = sbr.rel (%p1306) target = $region126
        $region125: #{tri_model_forward.6} parent=39 // pred_region
          %s1309 = smul.u32 16, %s19
        $region126: #{tri_model_forward.6} parent=39 // pred_fallthru
          _
      $region40: #{tri_model_forward.6} parent=5 // pred_fallthru
        _
      %p1310 = scmp.le.s32.totalorder 2, %s14
      // Predicated region
      $region127: #{tri_model_forward.6} parent=5 // pred_check
        %p1311 = pneg %p1310
      $region128: #{tri_model_forward.6} parent=5 // pred_check_branch
        %1313 = sbr.rel (%p1311) target = $region130
      $region129: #{tri_model_forward.6} parent=5 // pred_region
        %s1314 = ssub.s32 %s14, 2
        // Predicated region
        $region131: #{tri_model_forward.6} parent=129 // pred_check
          %p1315 = pneg %p153
        $region132: #{tri_model_forward.6} parent=129 // pred_check_branch
          %1317 = sbr.rel (%p1315) target = $region134
        $region133: #{tri_model_forward.6} parent=129 // pred_region
          %s1318 = sand.u32 %s138, 1
          %s1319 = sand.u32 %s138, 1
          %s1320 = smul.addr %s1319, 8
          %s1321 = scalar_lea.vmem [#allocation2], %s1320
        $region134: #{tri_model_forward.6} parent=129 // pred_fallthru
          _
        // Predicated region
        $region135: #{tri_model_forward.6} parent=129 // pred_check
          %p1322 = pneg %p179
        $region136: #{tri_model_forward.6} parent=129 // pred_check_branch
          %1324 = sbr.rel (%p1322) target = $region138
        $region137: #{tri_model_forward.6} parent=129 // pred_region
          %s1325 = sand.u32 %s164, 1
          %s1326 = sand.u32 %s164, 1
          %s1327 = smul.addr %s1326, 8
          %s1328 = scalar_lea.vmem [#allocation3], %s1327
        $region138: #{tri_model_forward.6} parent=129 // pred_fallthru
          _
        // Predicated region
        $region139: #{tri_model_forward.6} parent=129 // pred_check
          %p1329 = pneg %p205
        $region140: #{tri_model_forward.6} parent=129 // pred_check_branch
          %1331 = sbr.rel (%p1329) target = $region142
        $region141: #{tri_model_forward.6} parent=129 // pred_region
          %s1332 = smul.u32 16, %s20
          %p1333 = scmp.lt.s32.totalorder %s1332, 31
          %s1334 = scalar_select %p1333, %s1332, 31
          %s1335 = smul.addr %s1334, 4
          %s1336 = scalar_lea.vmem %s7, %s1335
        $region142: #{tri_model_forward.6} parent=129 // pred_fallthru
          _
      $region130: #{tri_model_forward.6} parent=5 // pred_fallthru
        _
    $region6: #{tri_model_forward.6} parent=1 // loop_footer
      %s18 = sadd.s32 1, %s14
    $region7: #{tri_model_forward.6} parent=1 // loop_footer_branch
      %13 = sbr.rel target = $region3
    $region8: #{tri_model_forward.6} parent=1 // loop_exit
      _

// kernel: tri_model_forward.10
$region0: #{tri_model_forward.10}
  #allocation0 [shape = 'u32[]', space=smem, size = 0x4, offset = 0x4, fixed_abs, tag = 'smem constant byte address 0x4 - core index']
  #allocation1 [shape = 'u32[72,128]{1,0:T(1,128)}', space=vmem, size = 0x9000, scoped, tag = 'internal scratch']
  %s0 = inlined_call_operand.vmem [shape: bf16[16,16,16], index: 0, kind: input, shape index: {}]
  %s1 = inlined_call_operand.vmem [shape: bf16[16,16,16], index: 1, kind: input, shape index: {}]
  %s2 = inlined_call_operand.vmem [shape: bf16[16,16,16], index: 2, kind: output, shape index: {}]
  %s3 = sld [smem:[#allocation0]]
  $region41: #{tri_model_forward.10} parent=0
    _
  %s5 = ssub.s32 1, %s3
  %s6 = scalar_select 0, %s5, %s3
  loop: start=0, step=1, limit=4
  $region2: #{tri_model_forward.10} parent=0 // loop_pre_header
    _
  $region3: #{tri_model_forward.10} parent=0 // loop_header
    %s8 = sphi 0, %s12
    %p9 = scmp.ge.s32.totalorder %s8, 4
    %s15 = sphi 0, %s27
    %s16 = sphi 0, %s23
    %s17 = sphi 0, %s15
    %s18 = sphi 0, %s16
    %s19 = sphi 0, %s17
    %s20 = sphi 0, %s18
    %s32 = sphi 0, %s34
    %s35 = sphi 0, %s32
    %s36 = sphi 0, %s35
    %s52 = sphi 0, %s36
    %s58 = sphi 0, %s60
    %s61 = sphi 0, %s58
    %s62 = sphi 0, %s61
    %s78 = sphi 0, %s62
    %s86 = sphi 0, %s88
    %s89 = sphi 0, %s86
    %s90 = sphi 0, %s89
    %s106 = sphi 0, %s90
  $region4: #{tri_model_forward.10} parent=0 // loop_header_branch
    %11 = sbr.rel (%p9) target = $region8
  $region5: #{tri_model_forward.10} parent=0 // loop_body
    %s13 = ssub.s32 %s8, 1
    %s14 = ssub.s32 %s8, 2
    %s21 = sadd.s32 1, %s16
    %p22 = scmp.ge.s32.totalorder %s21, 1
    %s23 = scalar_select %p22, 0, %s21
    %s24 = sadd.s32 1, %s15
    %s25 = scalar_select %p22, %s24, %s15
    %p26 = scmp.ge.s32.totalorder %s25, 2
    %s27 = scalar_select %p26, 0, %s25
    %s28 = ssub.s32 %s15, %s27
    %s29 = ssub.s32 %s16, %s23
    %s30 = sor.u32 %s28, %s29
    %p31 = scmp.eq.s32.totalorder %s30, 0
    %s33 = sadd.s32 %s32, 1
    %s34 = scalar_select %p31, %s32, %s33
    %p37 = pneg %p31
    %p38 = scmp.eq.s32.totalorder %s8, 1
    %p39 = por %p37, %p38
    %p40 = scmp.ne.s32.totalorder %s32, %s35
    %p41 = scmp.eq.s32.totalorder %s8, 0
    %p42 = por %p40, %p41
    %p43 = scmp.ne.s32.totalorder %s32, %s35
    %p44 = scmp.eq.s32.totalorder %s13, 1
    %p45 = por %p43, %p44
    %p46 = scmp.ne.s32.totalorder %s35, %s36
    %p47 = scmp.eq.s32.totalorder %s13, 0
    %p48 = por %p46, %p47
    %p49 = scmp.ne.s32.totalorder %s35, %s36
    %p50 = scmp.eq.s32.totalorder %s14, 1
    %p51 = por %p49, %p50
    %p53 = scmp.ne.s32.totalorder %s36, %s52
    %p54 = scmp.eq.s32.totalorder %s14, 0
    %p55 = por %p53, %p54
    %s56 = ssub.s32 %s15, %s27
    %p57 = scmp.eq.s32.totalorder %s56, 0
    %s59 = sadd.s32 %s58, 1
    %s60 = scalar_select %p57, %s58, %s59
    %p63 = pneg %p57
    %p64 = scmp.eq.s32.totalorder %s8, 1
    %p65 = por %p63, %p64
    %p66 = scmp.ne.s32.totalorder %s58, %s61
    %p67 = scmp.eq.s32.totalorder %s8, 0
    %p68 = por %p66, %p67
    %p69 = scmp.ne.s32.totalorder %s58, %s61
    %p70 = scmp.eq.s32.totalorder %s13, 1
    %p71 = por %p69, %p70
    %p72 = scmp.ne.s32.totalorder %s61, %s62
    %p73 = scmp.eq.s32.totalorder %s13, 0
    %p74 = por %p72, %p73
    %p75 = scmp.ne.s32.totalorder %s61, %s62
    %p76 = scmp.eq.s32.totalorder %s14, 1
    %p77 = por %p75, %p76
    %p79 = scmp.ne.s32.totalorder %s62, %s78
    %p80 = scmp.eq.s32.totalorder %s14, 0
    %p81 = por %p79, %p80
    %s82 = ssub.s32 %s15, %s27
    %s83 = ssub.s32 %s16, %s23
    %s84 = sor.u32 %s82, %s83
    %p85 = scmp.eq.s32.totalorder %s84, 0
    %s87 = sadd.s32 %s86, 1
    %s88 = scalar_select %p85, %s86, %s87
    %p91 = pneg %p85
    %p92 = scmp.eq.s32.totalorder %s8, 1
    %p93 = por %p91, %p92
    %p94 = scmp.ne.s32.totalorder %s86, %s89
    %p95 = scmp.eq.s32.totalorder %s8, 0
    %p96 = por %p94, %p95
    %p97 = scmp.ne.s32.totalorder %s86, %s89
    %p98 = scmp.eq.s32.totalorder %s13, 1
    %p99 = por %p97, %p98
    %p100 = scmp.ne.s32.totalorder %s89, %s90
    %p101 = scmp.eq.s32.totalorder %s13, 0
    %p102 = por %p100, %p101
    %p103 = scmp.ne.s32.totalorder %s89, %s90
    %p104 = scmp.eq.s32.totalorder %s14, 1
    %p105 = por %p103, %p104
    %p107 = scmp.ne.s32.totalorder %s90, %s106
    %p108 = scmp.eq.s32.totalorder %s14, 0
    %p109 = por %p107, %p108
    %p110 = scmp.le.s32.totalorder 1, %s8
    %p111 = scmp.lt.s32.totalorder %s8, 3
    %p112 = pnand %p110, %p111
    %p113 = pneg %p112
    // Predicated region
    $region9: #{tri_model_forward.10} parent=5 // pred_check
      _
    $region10: #{tri_model_forward.10} parent=5 // pred_check_branch
      %115 = sbr.rel (%p112) target = $region12
    $region11: #{tri_model_forward.10} parent=5 // pred_region
      %s116 = ssub.s32 %s8, 1
    $region12: #{tri_model_forward.10} parent=5 // pred_fallthru
      _
    %p117 = scmp.lt.s32.totalorder %s8, 2
    // Predicated region
    $region13: #{tri_model_forward.10} parent=5 // pred_check
      %p118 = pneg %p117
    $region14: #{tri_model_forward.10} parent=5 // pred_check_branch
      %120 = sbr.rel (%p118) target = $region16
    $region15: #{tri_model_forward.10} parent=5 // pred_region
      // Predicated region
      $region17: #{tri_model_forward.10} parent=15 // pred_check
        %p121 = pneg %p42
      $region18: #{tri_model_forward.10} parent=15 // pred_check_branch
        %123 = sbr.rel (%p121) target = $region20
      $region19: #{tri_model_forward.10} parent=15 // pred_region
        %s124 = smul.u32 8, %s15
        %s125 = smul.u32 2, %s16
        %p126 = scmp.lt.s32.totalorder %s124, 15
        %s127 = scalar_select %p126, %s124, 15
        %p128 = scmp.lt.s32.totalorder %s125, 1
        %s129 = scalar_select %p128, %s125, 1
        %s130 = smul.addr %s127, 2
        %s131 = sadd.s32 %s129, %s130
        %s132 = smul.addr %s131, 4
        %s133 = scalar_lea.vmem %s0, %s132
        %s134 = smul.u32 8, %s15
        %s135 = smul.u32 2, %s16
      $region20: #{tri_model_forward.10} parent=15 // pred_fallthru
        _
      // Predicated region
      $region21: #{tri_model_forward.10} parent=15 // pred_check
        %p136 = pneg %p68
      $region22: #{tri_model_forward.10} parent=15 // pred_check_branch
        %138 = sbr.rel (%p136) target = $region24
      $region23: #{tri_model_forward.10} parent=15 // pred_region
        %s139 = smul.u32 8, %s15
        %p140 = scmp.lt.s32.totalorder %s139, 15
        %s141 = scalar_select %p140, %s139, 15
        %s142 = smul.addr %s141, 2
        %s143 = smul.addr %s142, 4
        %s144 = scalar_lea.vmem %s1, %s143
        %s145 = smul.u32 8, %s15
      $region24: #{tri_model_forward.10} parent=15 // pred_fallthru
        _
    $region16: #{tri_model_forward.10} parent=5 // pred_fallthru
      _
    %p146 = scmp.le.s32.totalorder 1, %s8
    %p147 = scmp.lt.s32.totalorder %s8, 3
    %p148 = pnand %p146, %p147
    %p149 = pneg %p148
    // Predicated region
    $region25: #{tri_model_forward.10} parent=5 // pred_check
      _
    $region26: #{tri_model_forward.10} parent=5 // pred_check_branch
      %151 = sbr.rel (%p148) target = $region28
    $region27: #{tri_model_forward.10} parent=5 // pred_region
      %s152 = ssub.s32 %s8, 1
      %s153 = smul.u32 8, %s17
      %s154 = smul.u32 2, %s18
      %p155 = scmp.lt.s32.totalorder %s153, 15
      %s156 = scalar_select %p155, %s153, 15
      %p157 = scmp.lt.s32.totalorder %s154, 1
      %s158 = scalar_select %p157, %s154, 1
      %s159 = smul.addr %s156, 2
      %s160 = sadd.s32 %s158, %s159
      %s161 = smul.addr %s160, 4
      %s162 = scalar_lea.vmem %s0, %s161
      %p163 = pneg %p48
      %p164 = pneg %p45
      %s165 = smul.u32 8, %s17
      %p166 = scmp.lt.s32.totalorder %s165, 15
      %s167 = scalar_select %p166, %s165, 15
      %s168 = smul.addr %s167, 2
      %s169 = smul.addr %s168, 4
      %s170 = scalar_lea.vmem %s1, %s169
      %p171 = pneg %p74
      %p172 = pneg %p71
      %p173 = pneg %p102
      %p174 = pneg %p99
      %s175 = smul.u32 8, %s17
      %s176 = smul.u32 2, %s18
      %p177 = scmp.lt.s32.totalorder %s175, 15
      %s178 = scalar_select %p177, %s175, 15
      %p179 = scmp.lt.s32.totalorder %s176, 1
      %s180 = scalar_select %p179, %s176, 1
      %s181 = smul.addr %s178, 2
      %s182 = sadd.s32 %s180, %s181
      %s183 = smul.addr %s182, 4
      %s184 = scalar_lea.vmem %s2, %s183
      %s185 = smul.u32 8, %s17
      %s186 = smul.u32 2, %s18
      %p187 = scmp.lt.s32.totalorder %s185, 15
      %s188 = scalar_select %p187, %s185, 15
      %p189 = scmp.lt.s32.totalorder %s186, 1
      %s190 = scalar_select %p189, %s186, 1
      %s191 = smul.addr %s188, 2
      %s192 = sadd.s32 %s190, %s191
      %s193 = smul.addr %s192, 4
      %s194 = scalar_lea.vmem %s0, %s193
      %s195 = smul.u32 8, %s17
      %s196 = smul.u32 2, %s18
      %s197 = smul.u32 8, %s17
      %p198 = scmp.lt.s32.totalorder %s197, 15
      %s199 = scalar_select %p198, %s197, 15
      %s200 = smul.addr %s199, 2
      %s201 = smul.addr %s200, 4
      %s202 = scalar_lea.vmem %s1, %s201
      %s203 = smul.u32 8, %s17
      %s204 = smul.u32 8, %s17
      %s205 = smul.u32 2, %s18
      %p206 = scmp.lt.s32.totalorder %s204, 15
      %s207 = scalar_select %p206, %s204, 15
      %p208 = scmp.lt.s32.totalorder %s205, 1
      %s209 = scalar_select %p208, %s205, 1
      %s210 = smul.addr %s207, 2
      %s211 = sadd.s32 %s209, %s210
      %s212 = smul.addr %s211, 4
      %s213 = scalar_lea.vmem %s2, %s212
      %s214 = smul.u32 8, %s17
      %s215 = smul.u32 2, %s18
      %v217 = vld [vmem:[%s194] sm:$0xf]
      %v218 = vld [vmem:[%s194 + $0x4] sm:$0xf]
      %v219 = vld [vmem:[%s194 + $0x8] sm:$0xf]
      %v220 = vld [vmem:[%s194 + $0xc] sm:$0xf]
      %v221 = vld [vmem:[%s194 + $0x10] sm:$0xf]
      %v222 = vld [vmem:[%s194 + $0x14] sm:$0xf]
      %v223 = vld [vmem:[%s194 + $0x18] sm:$0xf]
      %v224 = vld [vmem:[%s194 + $0x1c] sm:$0xf]
      %v225 = vld [vmem:[%s194 + $0x20] sm:$0xf]
      %v226 = vld [vmem:[%s194 + $0x24] sm:$0xf]
      %v227 = vld [vmem:[%s194 + $0x28] sm:$0xf]
      %v228 = vld [vmem:[%s194 + $0x2c] sm:$0xf]
      %v229 = vld [vmem:[%s194 + $0x30] sm:$0xf]
      %v230 = vld [vmem:[%s194 + $0x34] sm:$0xf]
      %v231 = vld [vmem:[%s194 + $0x38] sm:$0xf]
      %v232 = vld [vmem:[%s194 + $0x3c] sm:$0xf]
      %v233 = vld [vmem:[%s202] sm:$0xf]
      %v234 = vld [vmem:[%s202 + $0x4] sm:$0xf]
      %v235 = vld [vmem:[%s202 + $0x8] sm:$0xf]
      %v236 = vld [vmem:[%s202 + $0xc] sm:$0xf]
      %v237 = vld [vmem:[%s202 + $0x10] sm:$0xf]
      %v238 = vld [vmem:[%s202 + $0x14] sm:$0xf]
      %v239 = vld [vmem:[%s202 + $0x18] sm:$0xf]
      %v240 = vld [vmem:[%s202 + $0x1c] sm:$0xf]
      %v241 = vld [vmem:[%s202 + $0x20] sm:$0xf]
      %v242 = vld [vmem:[%s202 + $0x24] sm:$0xf]
      %v243 = vld [vmem:[%s202 + $0x28] sm:$0xf]
      %v244 = vld [vmem:[%s202 + $0x2c] sm:$0xf]
      %v245 = vld [vmem:[%s202 + $0x30] sm:$0xf]
      %v246 = vld [vmem:[%s202 + $0x34] sm:$0xf]
      %v247 = vld [vmem:[%s202 + $0x38] sm:$0xf]
      %v248 = vld [vmem:[%s202 + $0x3c] sm:$0xf]
      %v251 = vunpack.c.l.b16 %v217
      %v252 = vunpack.c.l.b16 %v218
      %v253 = vpack.c.b16 %v252, %v251
      %v256 = vunpack.c.l.b16 %v233
      %v257 = vunpack.c.l.b16 %v234
      %v258 = vpack.c.b16 %v257, %v256
      %vm259 = vcmask 130048
      %v261 = vsel %vm259, %v253, 0
      %v264 = vsel %vm259, %v258, 0
      %266 = vmatpush.bf16.xpose.msra.mxu0 0
      %267 = vmatpush.bf16.xpose.msra.mxu0 0
      %268 = vmatpush.bf16.xpose.msra.mxu0 0
      %269 = vmatpush.bf16.xpose.msra.mxu0 0
      %270 = vmatpush.bf16.xpose.msra.mxu0 0
      %271 = vmatpush.bf16.xpose.msra.mxu0 0
      %272 = vmatpush.bf16.xpose.msra.mxu0 0
      %273 = vmatpush.bf16.xpose.msra.mxu0 %v264
      %274 = vmatmul.bf16.gmra.mxu0 %v261
      %v275 = vpop.f32.mrf.mxu0
      %v276 = vadd.f32 0.0, %v275
      %v277 = vpop.f32.mrf.mxu0
      %v278 = vadd.f32 0.0, %v277
      %279 = vdwg.mxu0
      %v282 = vunpack.c.l.b16 %v219
      %v283 = vunpack.c.l.b16 %v220
      %v284 = vpack.c.b16 %v283, %v282
      %v287 = vunpack.c.l.b16 %v235
      %v288 = vunpack.c.l.b16 %v236
      %v289 = vpack.c.b16 %v288, %v287
      %v291 = vsel %vm259, %v284, 0
      %v294 = vsel %vm259, %v289, 0
      %296 = vmatpush.bf16.xpose.msra.mxu0 0
      %297 = vmatpush.bf16.xpose.msra.mxu0 0
      %298 = vmatpush.bf16.xpose.msra.mxu0 0
      %299 = vmatpush.bf16.xpose.msra.mxu0 0
      %300 = vmatpush.bf16.xpose.msra.mxu0 0
      %301 = vmatpush.bf16.xpose.msra.mxu0 0
      %302 = vmatpush.bf16.xpose.msra.mxu0 0
      %303 = vmatpush.bf16.xpose.msra.mxu0 %v294
      %304 = vmatmul.bf16.gmra.mxu0 %v291
      %v305 = vpop.f32.mrf.mxu0
      %v306 = vadd.f32 0.0, %v305
      %v307 = vpop.f32.mrf.mxu0
      %v308 = vadd.f32 0.0, %v307
      %309 = vdwg.mxu0
      %v312 = vunpack.c.l.b16 %v221
      %v313 = vunpack.c.l.b16 %v222
      %v314 = vpack.c.b16 %v313, %v312
      %v317 = vunpack.c.l.b16 %v237
      %v318 = vunpack.c.l.b16 %v238
      %v319 = vpack.c.b16 %v318, %v317
      %v321 = vsel %vm259, %v314, 0
      %v324 = vsel %vm259, %v319, 0
      %326 = vmatpush.bf16.xpose.msra.mxu0 0
      %327 = vmatpush.bf16.xpose.msra.mxu0 0
      %328 = vmatpush.bf16.xpose.msra.mxu0 0
      %329 = vmatpush.bf16.xpose.msra.mxu0 0
      %330 = vmatpush.bf16.xpose.msra.mxu0 0
      %331 = vmatpush.bf16.xpose.msra.mxu0 0
      %332 = vmatpush.bf16.xpose.msra.mxu0 0
      %333 = vmatpush.bf16.xpose.msra.mxu0 %v324
      %334 = vmatmul.bf16.gmra.mxu0 %v321
      %v335 = vpop.f32.mrf.mxu0
      %v336 = vadd.f32 0.0, %v335
      %v337 = vpop.f32.mrf.mxu0
      %v338 = vadd.f32 0.0, %v337
      %339 = vdwg.mxu0
      %v342 = vunpack.c.l.b16 %v223
      %v343 = vunpack.c.l.b16 %v224
      %v344 = vpack.c.b16 %v343, %v342
      %v347 = vunpack.c.l.b16 %v239
      %v348 = vunpack.c.l.b16 %v240
      %v349 = vpack.c.b16 %v348, %v347
      %v351 = vsel %vm259, %v344, 0
      %v354 = vsel %vm259, %v349, 0
      %356 = vmatpush.bf16.xpose.msra.mxu0 0
      %357 = vmatpush.bf16.xpose.msra.mxu0 0
      %358 = vmatpush.bf16.xpose.msra.mxu0 0
      %359 = vmatpush.bf16.xpose.msra.mxu0 0
      %360 = vmatpush.bf16.xpose.msra.mxu0 0
      %361 = vmatpush.bf16.xpose.msra.mxu0 0
      %362 = vmatpush.bf16.xpose.msra.mxu0 0
      %363 = vmatpush.bf16.xpose.msra.mxu0 %v354
      %364 = vmatmul.bf16.gmra.mxu0 %v351
      %v365 = vpop.f32.mrf.mxu0
      %v366 = vadd.f32 0.0, %v365
      %v367 = vpop.f32.mrf.mxu0
      %v368 = vadd.f32 0.0, %v367
      %369 = vdwg.mxu0
      %v372 = vunpack.c.l.b16 %v225
      %v373 = vunpack.c.l.b16 %v226
      %v374 = vpack.c.b16 %v373, %v372
      %v377 = vunpack.c.l.b16 %v241
      %v378 = vunpack.c.l.b16 %v242
      %v379 = vpack.c.b16 %v378, %v377
      %v381 = vsel %vm259, %v374, 0
      %v384 = vsel %vm259, %v379, 0
      %386 = vmatpush.bf16.xpose.msra.mxu0 0
      %387 = vmatpush.bf16.xpose.msra.mxu0 0
      %388 = vmatpush.bf16.xpose.msra.mxu0 0
      %389 = vmatpush.bf16.xpose.msra.mxu0 0
      %390 = vmatpush.bf16.xpose.msra.mxu0 0
      %391 = vmatpush.bf16.xpose.msra.mxu0 0
      %392 = vmatpush.bf16.xpose.msra.mxu0 0
      %393 = vmatpush.bf16.xpose.msra.mxu0 %v384
      %394 = vmatmul.bf16.gmra.mxu0 %v381
      %v395 = vpop.f32.mrf.mxu0
      %v396 = vadd.f32 0.0, %v395
      %v397 = vpop.f32.mrf.mxu0
      %v398 = vadd.f32 0.0, %v397
      %399 = vdwg.mxu0
      %v402 = vunpack.c.l.b16 %v227
      %v403 = vunpack.c.l.b16 %v228
      %v404 = vpack.c.b16 %v403, %v402
      %v407 = vunpack.c.l.b16 %v243
      %v408 = vunpack.c.l.b16 %v244
      %v409 = vpack.c.b16 %v408, %v407
      %v411 = vsel %vm259, %v404, 0
      %v414 = vsel %vm259, %v409, 0
      %416 = vmatpush.bf16.xpose.msra.mxu0 0
      %417 = vmatpush.bf16.xpose.msra.mxu0 0
      %418 = vmatpush.bf16.xpose.msra.mxu0 0
      %419 = vmatpush.bf16.xpose.msra.mxu0 0
      %420 = vmatpush.bf16.xpose.msra.mxu0 0
      %421 = vmatpush.bf16.xpose.msra.mxu0 0
      %422 = vmatpush.bf16.xpose.msra.mxu0 0
      %423 = vmatpush.bf16.xpose.msra.mxu0 %v414
      %424 = vmatmul.bf16.gmra.mxu0 %v411
      %v425 = vpop.f32.mrf.mxu0
      %v426 = vadd.f32 0.0, %v425
      %v427 = vpop.f32.mrf.mxu0
      %v428 = vadd.f32 0.0, %v427
      %429 = vdwg.mxu0
      %v432 = vunpack.c.l.b16 %v229
      %v433 = vunpack.c.l.b16 %v230
      %v434 = vpack.c.b16 %v433, %v432
      %v437 = vunpack.c.l.b16 %v245
      %v438 = vunpack.c.l.b16 %v246
      %v439 = vpack.c.b16 %v438, %v437
      %v441 = vsel %vm259, %v434, 0
      %v444 = vsel %vm259, %v439, 0
      %446 = vmatpush.bf16.xpose.msra.mxu0 0
      %447 = vmatpush.bf16.xpose.msra.mxu0 0
      %448 = vmatpush.bf16.xpose.msra.mxu0 0
      %449 = vmatpush.bf16.xpose.msra.mxu0 0
      %450 = vmatpush.bf16.xpose.msra.mxu0 0
      %451 = vmatpush.bf16.xpose.msra.mxu0 0
      %452 = vmatpush.bf16.xpose.msra.mxu0 0
      %453 = vmatpush.bf16.xpose.msra.mxu0 %v444
      %454 = vmatmul.bf16.gmra.mxu0 %v441
      %v455 = vpop.f32.mrf.mxu0
      %v456 = vadd.f32 0.0, %v455
      %v457 = vpop.f32.mrf.mxu0
      %v458 = vadd.f32 0.0, %v457
      %459 = vdwg.mxu0
      %v462 = vunpack.c.l.b16 %v231
      %v463 = vunpack.c.l.b16 %v232
      %v464 = vpack.c.b16 %v463, %v462
      %v467 = vunpack.c.l.b16 %v247
      %v468 = vunpack.c.l.b16 %v248
      %v469 = vpack.c.b16 %v468, %v467
      %v471 = vsel %vm259, %v464, 0
      %v474 = vsel %vm259, %v469, 0
      %476 = vmatpush.bf16.xpose.msra.mxu0 0
      %477 = vmatpush.bf16.xpose.msra.mxu0 0
      %478 = vmatpush.bf16.xpose.msra.mxu0 0
      %479 = vmatpush.bf16.xpose.msra.mxu0 0
      %480 = vmatpush.bf16.xpose.msra.mxu0 0
      %481 = vmatpush.bf16.xpose.msra.mxu0 0
      %482 = vmatpush.bf16.xpose.msra.mxu0 0
      %483 = vmatpush.bf16.xpose.msra.mxu0 %v474
      %484 = vmatmul.bf16.gmra.mxu0 %v471
      %v485 = vpop.f32.mrf.mxu0
      %v486 = vadd.f32 0.0, %v485
      %v487 = vpop.f32.mrf.mxu0
      %v488 = vadd.f32 0.0, %v487
      %489 = vdwg.mxu0
      %v490 = vpack.c.bf16 %v276, %v276
      %v491 = vpack.c.bf16 %v278, %v278
      %v492 = vpack.c.bf16 %v306, %v306
      %v493 = vpack.c.bf16 %v308, %v308
      %v494 = vpack.c.bf16 %v336, %v336
      %v495 = vpack.c.bf16 %v338, %v338
      %v496 = vpack.c.bf16 %v366, %v366
      %v497 = vpack.c.bf16 %v368, %v368
      %v498 = vpack.c.bf16 %v396, %v396
      %v499 = vpack.c.bf16 %v398, %v398
      %v500 = vpack.c.bf16 %v426, %v426
      %v501 = vpack.c.bf16 %v428, %v428
      %v502 = vpack.c.bf16 %v456, %v456
      %v503 = vpack.c.bf16 %v458, %v458
      %v504 = vpack.c.bf16 %v486, %v486
      %v505 = vpack.c.bf16 %v488, %v488
      %vm506 = vcmask 125952
      %507 = vst.msk [vmem:[%s213] sm:$0xf] %vm506, %v490
      %508 = vst.msk [vmem:[%s213 + $0x4] sm:$0xf] %vm506, %v491
      %509 = vst.msk [vmem:[%s213 + $0x8] sm:$0xf] %vm506, %v492
      %510 = vst.msk [vmem:[%s213 + $0xc] sm:$0xf] %vm506, %v493
      %511 = vst.msk [vmem:[%s213 + $0x10] sm:$0xf] %vm506, %v494
      %512 = vst.msk [vmem:[%s213 + $0x14] sm:$0xf] %vm506, %v495
      %513 = vst.msk [vmem:[%s213 + $0x18] sm:$0xf] %vm506, %v496
      %514 = vst.msk [vmem:[%s213 + $0x1c] sm:$0xf] %vm506, %v497
      %515 = vst.msk [vmem:[%s213 + $0x20] sm:$0xf] %vm506, %v498
      %516 = vst.msk [vmem:[%s213 + $0x24] sm:$0xf] %vm506, %v499
      %517 = vst.msk [vmem:[%s213 + $0x28] sm:$0xf] %vm506, %v500
      %518 = vst.msk [vmem:[%s213 + $0x2c] sm:$0xf] %vm506, %v501
      %519 = vst.msk [vmem:[%s213 + $0x30] sm:$0xf] %vm506, %v502
      %520 = vst.msk [vmem:[%s213 + $0x34] sm:$0xf] %vm506, %v503
      %521 = vst.msk [vmem:[%s213 + $0x38] sm:$0xf] %vm506, %v504
      %522 = vst.msk [vmem:[%s213 + $0x3c] sm:$0xf] %vm506, %v505
      %s523 = smul.u32 8, %s17
      %s524 = smul.u32 2, %s18
      %p525 = scmp.lt.s32.totalorder %s523, 15
      %s526 = scalar_select %p525, %s523, 15
      %p527 = scmp.lt.s32.totalorder %s524, 1
      %s528 = scalar_select %p527, %s524, 1
      %s529 = smul.addr %s526, 2
      %s530 = sadd.s32 %s528, %s529
      %s531 = smul.addr %s530, 4
      %s532 = scalar_lea.vmem %s2, %s531
      // Predicated region
      $region29: #{tri_model_forward.10} parent=27 // pred_check
        %p533 = pneg %p99
      $region30: #{tri_model_forward.10} parent=27 // pred_check_branch
        %535 = sbr.rel (%p533) target = $region32
      $region31: #{tri_model_forward.10} parent=27 // pred_region
        %s536 = smul.u32 8, %s17
        %s537 = smul.u32 2, %s18
      $region32: #{tri_model_forward.10} parent=27 // pred_fallthru
        _
    $region28: #{tri_model_forward.10} parent=5 // pred_fallthru
      _
    %p538 = scmp.le.s32.totalorder 2, %s8
    // Predicated region
    $region33: #{tri_model_forward.10} parent=5 // pred_check
      %p539 = pneg %p538
    $region34: #{tri_model_forward.10} parent=5 // pred_check_branch
      %541 = sbr.rel (%p539) target = $region36
    $region35: #{tri_model_forward.10} parent=5 // pred_region
      %s542 = ssub.s32 %s8, 2
      // Predicated region
      $region37: #{tri_model_forward.10} parent=35 // pred_check
        %p543 = pneg %p105
      $region38: #{tri_model_forward.10} parent=35 // pred_check_branch
        %545 = sbr.rel (%p543) target = $region40
      $region39: #{tri_model_forward.10} parent=35 // pred_region
        %s546 = smul.u32 8, %s19
        %s547 = smul.u32 2, %s20
        %p548 = scmp.lt.s32.totalorder %s546, 15
        %s549 = scalar_select %p548, %s546, 15
        %p550 = scmp.lt.s32.totalorder %s547, 1
        %s551 = scalar_select %p550, %s547, 1
        %s552 = smul.addr %s549, 2
        %s553 = sadd.s32 %s551, %s552
        %s554 = smul.addr %s553, 4
        %s555 = scalar_lea.vmem %s2, %s554
      $region40: #{tri_model_forward.10} parent=35 // pred_fallthru
        _
    $region36: #{tri_model_forward.10} parent=5 // pred_fallthru
      _
  $region6: #{tri_model_forward.10} parent=0 // loop_footer
    %s12 = sadd.s32 1, %s8
  $region7: #{tri_model_forward.10} parent=0 // loop_footer_branch
    %7 = sbr.rel target = $region3
  $region8: #{tri_model_forward.10} parent=0 // loop_exit
    _

// kernel: tri_model_forward.11
$region0: #{tri_model_forward.11}
  #allocation0 [shape = 'u32[]', space=smem, size = 0x4, offset = 0x4, fixed_abs, tag = 'smem constant byte address 0x4 - core index']
  #allocation1 [shape = 'u32[72,128]{1,0:T(1,128)}', space=vmem, size = 0x9000, scoped, tag = 'internal scratch']
  %s0 = inlined_call_operand.vmem [shape: bf16[16,256], index: 0, kind: input, shape index: {}]
  %s1 = inlined_call_operand.vmem [shape: bf16[256,32], index: 1, kind: input, shape index: {}]
  %s2 = inlined_call_operand.vmem [shape: f32[256,32], index: 2, kind: input, shape index: {}]
  %s3 = inlined_call_operand.vmem [shape: f32[16,1], index: 3, kind: input, shape index: {}]
  %s4 = inlined_call_operand.vmem [shape: f32[16,1], index: 4, kind: input, shape index: {}]
  %s5 = inlined_call_operand.vmem [shape: bf16[16,32], index: 5, kind: input, shape index: {}]
  %s6 = inlined_call_operand.vmem [shape: f32[1,32], index: 6, kind: input, shape index: {}]
  %s7 = inlined_call_operand.hbm [shape: f32[256,32], index: 7, kind: output, shape index: {}]
  %s8 = sld [smem:[#allocation0]]
  $region102: #{tri_model_forward.11} parent=0
    _
  %s10 = ssub.s32 1, %s8
  %s11 = scalar_select 0, %s10, %s8
  $region1: #{tri_model_forward.11} parent=0
    #allocation2 [shape = 'u8[8192]{0}', space=vmem, size = 0x2000, scoped, tag = 'input window, operand 0']
    #allocation3 [shape = 'u8[131072]{0}', space=vmem, size = 0x20000, scoped, tag = 'output window, operand 0']
    #allocation4 [shape = 's32[2]{0}', space=sflag, size = 0x8, scoped, tag = 'scoped memory for tri_model_forward.11']
    %12 = vsyncpa [#allocation4], 0
    %s13 = scalar_lea.sflag [#allocation4], 1
    %14 = vsyncpa %s13, 0
    loop: start=0, step=1, limit=4
    $region2: #{tri_model_forward.11} parent=1 // loop_pre_header
      _
    $region3: #{tri_model_forward.11} parent=1 // loop_header
      %s16 = sphi 0, %s20
      %p17 = scmp.ge.s32.totalorder %s16, 4
      %s26 = sphi 0, %s28
      %s29 = sphi 0, %s26
      %s30 = sphi 0, %s29
      %s46 = sphi 0, %s30
      %s52 = sphi 0, %s54
      %s55 = sphi 0, %s52
      %s56 = sphi 0, %s55
      %s72 = sphi 0, %s56
      %s78 = sphi 0, %s80
      %s81 = sphi 0, %s78
      %s82 = sphi 0, %s81
      %s98 = sphi 0, %s82
      %s102 = sphi 0, %s102
      %s104 = sphi 0, %s102
      %s105 = sphi 0, %s104
      %s119 = sphi 0, %s105
      %s123 = sphi 0, %s123
      %s125 = sphi 0, %s123
      %s126 = sphi 0, %s125
      %s140 = sphi 0, %s126
      %s144 = sphi 0, %s144
      %s146 = sphi 0, %s144
      %s147 = sphi 0, %s146
      %s161 = sphi 0, %s147
      %s165 = sphi 0, %s165
      %s167 = sphi 0, %s165
      %s168 = sphi 0, %s167
      %s182 = sphi 0, %s168
      %s188 = sphi 0, %s190
      %s191 = sphi 0, %s188
      %s192 = sphi 0, %s191
      %s208 = sphi 0, %s192
    $region4: #{tri_model_forward.11} parent=1 // loop_header_branch
      %19 = sbr.rel (%p17) target = $region8
    $region5: #{tri_model_forward.11} parent=1 // loop_body
      %s21 = ssub.s32 %s16, 1
      %s22 = ssub.s32 %s16, 2
      %s23 = sadd.s32 %s16, 1
      %s24 = ssub.s32 %s16, %s23
      %p25 = scmp.eq.s32.totalorder %s24, 0
      %s27 = sadd.s32 %s26, 1
      %s28 = scalar_select %p25, %s26, %s27
      %p31 = pneg %p25
      %p32 = scmp.eq.s32.totalorder %s16, 1
      %p33 = por %p31, %p32
      %p34 = scmp.ne.s32.totalorder %s26, %s29
      %p35 = scmp.eq.s32.totalorder %s16, 0
      %p36 = por %p34, %p35
      %p37 = scmp.ne.s32.totalorder %s26, %s29
      %p38 = scmp.eq.s32.totalorder %s21, 1
      %p39 = por %p37, %p38
      %p40 = scmp.ne.s32.totalorder %s29, %s30
      %p41 = scmp.eq.s32.totalorder %s21, 0
      %p42 = por %p40, %p41
      %p43 = scmp.ne.s32.totalorder %s29, %s30
      %p44 = scmp.eq.s32.totalorder %s22, 1
      %p45 = por %p43, %p44
      %p47 = scmp.ne.s32.totalorder %s30, %s46
      %p48 = scmp.eq.s32.totalorder %s22, 0
      %p49 = por %p47, %p48
      %s50 = ssub.s32 %s16, %s23
      %p51 = scmp.eq.s32.totalorder %s50, 0
      %s53 = sadd.s32 %s52, 1
      %s54 = scalar_select %p51, %s52, %s53
      %p57 = pneg %p51
      %p58 = scmp.eq.s32.totalorder %s16, 1
      %p59 = por %p57, %p58
      %p60 = scmp.ne.s32.totalorder %s52, %s55
      %p61 = scmp.eq.s32.totalorder %s16, 0
      %p62 = por %p60, %p61
      %p63 = scmp.ne.s32.totalorder %s52, %s55
      %p64 = scmp.eq.s32.totalorder %s21, 1
      %p65 = por %p63, %p64
      %p66 = scmp.ne.s32.totalorder %s55, %s56
      %p67 = scmp.eq.s32.totalorder %s21, 0
      %p68 = por %p66, %p67
      %p69 = scmp.ne.s32.totalorder %s55, %s56
      %p70 = scmp.eq.s32.totalorder %s22, 1
      %p71 = por %p69, %p70
      %p73 = scmp.ne.s32.totalorder %s56, %s72
      %p74 = scmp.eq.s32.totalorder %s22, 0
      %p75 = por %p73, %p74
      %s76 = ssub.s32 %s16, %s23
      %p77 = scmp.eq.s32.totalorder %s76, 0
      %s79 = sadd.s32 %s78, 1
      %s80 = scalar_select %p77, %s78, %s79
      %p83 = pneg %p77
      %p84 = scmp.eq.s32.totalorder %s16, 1
      %p85 = por %p83, %p84
      %p86 = scmp.ne.s32.totalorder %s78, %s81
      %p87 = scmp.eq.s32.totalorder %s16, 0
      %p88 = por %p86, %p87
      %p89 = scmp.ne.s32.totalorder %s78, %s81
      %p90 = scmp.eq.s32.totalorder %s21, 1
      %p91 = por %p89, %p90
      %p92 = scmp.ne.s32.totalorder %s81, %s82
      %p93 = scmp.eq.s32.totalorder %s21, 0
      %p94 = por %p92, %p93
      %p95 = scmp.ne.s32.totalorder %s81, %s82
      %p96 = scmp.eq.s32.totalorder %s22, 1
      %p97 = por %p95, %p96
      %p99 = scmp.ne.s32.totalorder %s82, %s98
      %p100 = scmp.eq.s32.totalorder %s22, 0
      %p101 = por %p99, %p100
      %s103 = sadd.s32 %s102, 1
      %p106 = scmp.eq.s32.totalorder %s16, 1
      %p107 = scmp.ne.s32.totalorder %s102, %s104
      %p108 = scmp.eq.s32.totalorder %s16, 0
      %p109 = por %p107, %p108
      %p110 = scmp.ne.s32.totalorder %s102, %s104
      %p111 = scmp.eq.s32.totalorder %s21, 1
      %p112 = por %p110, %p111
      %p113 = scmp.ne.s32.totalorder %s104, %s105
      %p114 = scmp.eq.s32.totalorder %s21, 0
      %p115 = por %p113, %p114
      %p116 = scmp.ne.s32.totalorder %s104, %s105
      %p117 = scmp.eq.s32.totalorder %s22, 1
      %p118 = por %p116, %p117
      %p120 = scmp.ne.s32.totalorder %s105, %s119
      %p121 = scmp.eq.s32.totalorder %s22, 0
      %p122 = por %p120, %p121
      %s124 = sadd.s32 %s123, 1
      %p127 = scmp.eq.s32.totalorder %s16, 1
      %p128 = scmp.ne.s32.totalorder %s123, %s125
      %p129 = scmp.eq.s32.totalorder %s16, 0
      %p130 = por %p128, %p129
      %p131 = scmp.ne.s32.totalorder %s123, %s125
      %p132 = scmp.eq.s32.totalorder %s21, 1
      %p133 = por %p131, %p132
      %p134 = scmp.ne.s32.totalorder %s125, %s126
      %p135 = scmp.eq.s32.totalorder %s21, 0
      %p136 = por %p134, %p135
      %p137 = scmp.ne.s32.totalorder %s125, %s126
      %p138 = scmp.eq.s32.totalorder %s22, 1
      %p139 = por %p137, %p138
      %p141 = scmp.ne.s32.totalorder %s126, %s140
      %p142 = scmp.eq.s32.totalorder %s22, 0
      %p143 = por %p141, %p142
      %s145 = sadd.s32 %s144, 1
      %p148 = scmp.eq.s32.totalorder %s16, 1
      %p149 = scmp.ne.s32.totalorder %s144, %s146
      %p150 = scmp.eq.s32.totalorder %s16, 0
      %p151 = por %p149, %p150
      %p152 = scmp.ne.s32.totalorder %s144, %s146
      %p153 = scmp.eq.s32.totalorder %s21, 1
      %p154 = por %p152, %p153
      %p155 = scmp.ne.s32.totalorder %s146, %s147
      %p156 = scmp.eq.s32.totalorder %s21, 0
      %p157 = por %p155, %p156
      %p158 = scmp.ne.s32.totalorder %s146, %s147
      %p159 = scmp.eq.s32.totalorder %s22, 1
      %p160 = por %p158, %p159
      %p162 = scmp.ne.s32.totalorder %s147, %s161
      %p163 = scmp.eq.s32.totalorder %s22, 0
      %p164 = por %p162, %p163
      %s166 = sadd.s32 %s165, 1
      %p169 = scmp.eq.s32.totalorder %s16, 1
      %p170 = scmp.ne.s32.totalorder %s165, %s167
      %p171 = scmp.eq.s32.totalorder %s16, 0
      %p172 = por %p170, %p171
      %p173 = scmp.ne.s32.totalorder %s165, %s167
      %p174 = scmp.eq.s32.totalorder %s21, 1
      %p175 = por %p173, %p174
      %p176 = scmp.ne.s32.totalorder %s167, %s168
      %p177 = scmp.eq.s32.totalorder %s21, 0
      %p178 = por %p176, %p177
      %p179 = scmp.ne.s32.totalorder %s167, %s168
      %p180 = scmp.eq.s32.totalorder %s22, 1
      %p181 = por %p179, %p180
      %p183 = scmp.ne.s32.totalorder %s168, %s182
      %p184 = scmp.eq.s32.totalorder %s22, 0
      %p185 = por %p183, %p184
      %s186 = ssub.s32 %s16, %s23
      %p187 = scmp.eq.s32.totalorder %s186, 0
      %s189 = sadd.s32 %s188, 1
      %s190 = scalar_select %p187, %s188, %s189
      %p193 = pneg %p187
      %p194 = scmp.eq.s32.totalorder %s16, 1
      %p195 = por %p193, %p194
      %p196 = scmp.ne.s32.totalorder %s188, %s191
      %p197 = scmp.eq.s32.totalorder %s16, 0
      %p198 = por %p196, %p197
      %p199 = scmp.ne.s32.totalorder %s188, %s191
      %p200 = scmp.eq.s32.totalorder %s21, 1
      %p201 = por %p199, %p200
      %p202 = scmp.ne.s32.totalorder %s191, %s192
      %p203 = scmp.eq.s32.totalorder %s21, 0
      %p204 = por %p202, %p203
      %p205 = scmp.ne.s32.totalorder %s191, %s192
      %p206 = scmp.eq.s32.totalorder %s22, 1
      %p207 = por %p205, %p206
      %p209 = scmp.ne.s32.totalorder %s192, %s208
      %p210 = scmp.eq.s32.totalorder %s22, 0
      %p211 = por %p209, %p210
      %p212 = scmp.le.s32.totalorder 1, %s16
      %p213 = scmp.lt.s32.totalorder %s16, 3
      %p214 = pnand %p212, %p213
      %p215 = pneg %p214
      // Predicated region
      $region9: #{tri_model_forward.11} parent=5 // pred_check
        _
      $region10: #{tri_model_forward.11} parent=5 // pred_check_branch
        %217 = sbr.rel (%p214) target = $region12
      $region11: #{tri_model_forward.11} parent=5 // pred_region
        %s218 = ssub.s32 %s16, 1
        // Predicated region
        $region13: #{tri_model_forward.11} parent=11 // pred_check
          %p219 = pneg %p115
        $region14: #{tri_model_forward.11} parent=11 // pred_check_branch
          %221 = sbr.rel (%p219) target = $region16
        $region15: #{tri_model_forward.11} parent=11 // pred_region
          _
        $region16: #{tri_model_forward.11} parent=11 // pred_fallthru
          _
        // Predicated region
        $region17: #{tri_model_forward.11} parent=11 // pred_check
          %p222 = pneg %p136
        $region18: #{tri_model_forward.11} parent=11 // pred_check_branch
          %224 = sbr.rel (%p222) target = $region20
        $region19: #{tri_model_forward.11} parent=11 // pred_region
          _
        $region20: #{tri_model_forward.11} parent=11 // pred_fallthru
          _
        // Predicated region
        $region21: #{tri_model_forward.11} parent=11 // pred_check
          %p225 = pneg %p157
        $region22: #{tri_model_forward.11} parent=11 // pred_check_branch
          %227 = sbr.rel (%p225) target = $region24
        $region23: #{tri_model_forward.11} parent=11 // pred_region
          _
        $region24: #{tri_model_forward.11} parent=11 // pred_fallthru
          _
        // Predicated region
        $region25: #{tri_model_forward.11} parent=11 // pred_check
          %p228 = pneg %p178
        $region26: #{tri_model_forward.11} parent=11 // pred_check_branch
          %230 = sbr.rel (%p228) target = $region28
        $region27: #{tri_model_forward.11} parent=11 // pred_region
          _
        $region28: #{tri_model_forward.11} parent=11 // pred_fallthru
          _
      $region12: #{tri_model_forward.11} parent=5 // pred_fallthru
        _
      %p231 = scmp.lt.s32.totalorder %s16, 2
      // Predicated region
      $region29: #{tri_model_forward.11} parent=5 // pred_check
        %p232 = pneg %p231
      $region30: #{tri_model_forward.11} parent=5 // pred_check_branch
        %234 = sbr.rel (%p232) target = $region32
      $region31: #{tri_model_forward.11} parent=5 // pred_region
        // Predicated region
        $region33: #{tri_model_forward.11} parent=31 // pred_check
          %p235 = pneg %p36
        $region34: #{tri_model_forward.11} parent=31 // pred_check_branch
          %237 = sbr.rel (%p235) target = $region36
        $region35: #{tri_model_forward.11} parent=31 // pred_region
          %s238 = sand.u32 %s26, 1
          %s239 = sand.u32 %s26, 1
          %s240 = smul.addr %s239, 8
          %s241 = scalar_lea.vmem [#allocation2], %s240
          %s242 = smul.addr %s16, 4
          %s243 = scalar_lea.vmem %s0, %s242
          // Predicated region
          $region37: #{tri_model_forward.11} parent=35 // pred_check
            _
          $region38: #{tri_model_forward.11} parent=35 // pred_check_branch
            %245 = sbr.rel (0) target = $region40
          $region39: #{tri_model_forward.11} parent=35 // pred_region
            // Predicated region
            $region41: #{tri_model_forward.11} parent=39 // pred_check
              _
            $region42: #{tri_model_forward.11} parent=39 // pred_check_branch
              %247 = sbr.rel target = $region44
            $region43: #{tri_model_forward.11} parent=39 // pred_region
              // Predicated region
              $region56: #{tri_model_forward.11} parent=43 // pred_check
                _
              $region57: #{tri_model_forward.11} parent=43 // pred_check_branch
                %265 = sbr.rel (0) target = $region59
              $region58: #{tri_model_forward.11} parent=43 // pred_region
                loop: start=0, step=1, limit=1
                $region60: #{tri_model_forward.11} parent=58 // loop_pre_header
                  _
                $region61: #{tri_model_forward.11} parent=58 // loop_header
                  %s267 = sphi 0, %s271
                  %p268 = scmp.ge.s32.totalorder %s267, 1
                  %s272 = sphi %s243, %s243
                  %s273 = sphi %s241, %s241
                $region62: #{tri_model_forward.11} parent=58 // loop_header_branch
                  %270 = sbr.rel (%p268) target = $region66
                $region63: #{tri_model_forward.11} parent=58 // loop_body
                  _
                $region64: #{tri_model_forward.11} parent=58 // loop_footer
                  %s271 = sadd.s32 1, %s267
                $region65: #{tri_model_forward.11} parent=58 // loop_footer_branch
                  %266 = sbr.rel target = $region61
                $region66: #{tri_model_forward.11} parent=58 // loop_exit
                  _
                %s275 = ssub.s32 16, 1
                loop: start=0, step=1, limit=1
                $region67: #{tri_model_forward.11} parent=58 // loop_pre_header
                  _
                $region68: #{tri_model_forward.11} parent=58 // loop_header
                  %s277 = sphi 0, %s281
                  %p278 = scmp.ge.s32.totalorder %s277, 1
                  %s282 = sphi %s243, %s243
                  %s283 = sphi %s241, %s241
                $region69: #{tri_model_forward.11} parent=58 // loop_header_branch
                  %280 = sbr.rel (%p278) target = $region73
                $region70: #{tri_model_forward.11} parent=58 // loop_body
                  %v284 = vld [vmem:[%s282] sm:%s275]
                  %285 = vst [vmem:[%s283] sm:%s275] %v284
                  %v286 = vld [vmem:[%s282 + $0x8] sm:%s275]
                  %287 = vst [vmem:[%s283 + $0x4] sm:%s275] %v286
                $region71: #{tri_model_forward.11} parent=58 // loop_footer
                  %s281 = sadd.s32 1, %s277
                $region72: #{tri_model_forward.11} parent=58 // loop_footer_branch
                  %276 = sbr.rel target = $region68
                $region73: #{tri_model_forward.11} parent=58 // loop_exit
                  _
              $region59: #{tri_model_forward.11} parent=43 // pred_fallthru
                _
            $region44: #{tri_model_forward.11} parent=39 // pred_fallthru
              _
            // Predicated region
            $region45: #{tri_model_forward.11} parent=39 // pred_check
              _
            $region46: #{tri_model_forward.11} parent=39 // pred_check_branch
              %249 = sbr.rel (0) target = $region48
            $region47: #{tri_model_forward.11} parent=39 // pred_region
              %s251 = ssub.s32 16, 1
              loop: start=0, step=1, limit=1
              $region49: #{tri_model_forward.11} parent=47 // loop_pre_header
                _
              $region50: #{tri_model_forward.11} parent=47 // loop_header
                %s253 = sphi 0, %s257
                %p254 = scmp.ge.s32.totalorder %s253, 1
                %s258 = sphi %s243, %s243
                %s259 = sphi %s241, %s241
              $region51: #{tri_model_forward.11} parent=47 // loop_header_branch
                %256 = sbr.rel (%p254) target = $region55
              $region52: #{tri_model_forward.11} parent=47 // loop_body
                %v260 = vld [vmem:[%s258] sm:%s251]
                %261 = vst [vmem:[%s259] sm:%s251] %v260
                %v262 = vld [vmem:[%s258 + $0x8] sm:%s251]
                %263 = vst [vmem:[%s259 + $0x4] sm:%s251] %v262
              $region53: #{tri_model_forward.11} parent=47 // loop_footer
                %s257 = sadd.s32 1, %s253
              $region54: #{tri_model_forward.11} parent=47 // loop_footer_branch
                %252 = sbr.rel target = $region50
              $region55: #{tri_model_forward.11} parent=47 // loop_exit
                _
            $region48: #{tri_model_forward.11} parent=39 // pred_fallthru
              _
          $region40: #{tri_model_forward.11} parent=35 // pred_fallthru
            _
          %288 = vnop
        $region36: #{tri_model_forward.11} parent=31 // pred_fallthru
          _
        // Predicated region
        $region74: #{tri_model_forward.11} parent=31 // pred_check
          %p289 = pneg %p62
        $region75: #{tri_model_forward.11} parent=31 // pred_check_branch
          %291 = sbr.rel (%p289) target = $region77
        $region76: #{tri_model_forward.11} parent=31 // pred_region
          %s292 = smul.u32 16, %s16
          %p293 = scmp.lt.s32.totalorder %s292, 31
          %s294 = scalar_select %p293, %s292, 31
          %s295 = smul.addr %s294, 4
          %s296 = scalar_lea.vmem %s1, %s295
          %s297 = smul.u32 16, %s16
        $region77: #{tri_model_forward.11} parent=31 // pred_fallthru
          _
        // Predicated region
        $region78: #{tri_model_forward.11} parent=31 // pred_check
          %p298 = pneg %p88
        $region79: #{tri_model_forward.11} parent=31 // pred_check_branch
          %300 = sbr.rel (%p298) target = $region81
        $region80: #{tri_model_forward.11} parent=31 // pred_region
          %s301 = smul.u32 16, %s16
          %p302 = scmp.lt.s32.totalorder %s301, 31
          %s303 = scalar_select %p302, %s301, 31
          %s304 = smul.addr %s303, 8
          %s305 = scalar_lea.vmem %s2, %s304
          %s306 = smul.u32 16, %s16
        $region81: #{tri_model_forward.11} parent=31 // pred_fallthru
          _
      $region32: #{tri_model_forward.11} parent=5 // pred_fallthru
        _
      %p307 = scmp.le.s32.totalorder 1, %s16
      %p308 = scmp.lt.s32.totalorder %s16, 3
      %p309 = pnand %p307, %p308
      %p310 = pneg %p309
      // Predicated region
      $region82: #{tri_model_forward.11} parent=5 // pred_check
        _
      $region83: #{tri_model_forward.11} parent=5 // pred_check_branch
        %312 = sbr.rel (%p309) target = $region85
      $region84: #{tri_model_forward.11} parent=5 // pred_region
        %s313 = ssub.s32 %s16, 1
        %s314 = sand.u32 %s29, 1
        %s315 = sand.u32 %s29, 1
        %s316 = smul.addr %s315, 8
        %s317 = scalar_lea.vmem [#allocation2], %s316
        // Predicated region
        $region86: #{tri_model_forward.11} parent=84 // pred_check
          %p318 = pneg %p42
        $region87: #{tri_model_forward.11} parent=84 // pred_check_branch
          %320 = sbr.rel (%p318) target = $region89
        $region88: #{tri_model_forward.11} parent=84 // pred_region
          _
        $region89: #{tri_model_forward.11} parent=84 // pred_fallthru
          _
        %s321 = sand.u32 %s29, 1
        %s322 = sand.u32 %s29, 1
        %s323 = smul.addr %s322, 8
        %s324 = scalar_lea.vmem [#allocation2], %s323
        %p325 = pneg %p42
        %p326 = pneg %p39
        %s327 = smul.u32 16, %s21
        %p328 = scmp.lt.s32.totalorder %s327, 31
        %s329 = scalar_select %p328, %s327, 31
        %s330 = smul.addr %s329, 4
        %s331 = scalar_lea.vmem %s1, %s330
        %p332 = pneg %p68
        %p333 = pneg %p65
        %s334 = smul.u32 16, %s21
        %p335 = scmp.lt.s32.totalorder %s334, 31
        %s336 = scalar_select %p335, %s334, 31
        %s337 = smul.addr %s336, 8
        %s338 = scalar_lea.vmem %s2, %s337
        %p339 = pneg %p94
        %p340 = pneg %p91
        %p341 = pneg %p115
        %p342 = pneg %p112
        %p343 = pneg %p136
        %p344 = pneg %p133
        %p345 = pneg %p157
        %p346 = pneg %p154
        %p347 = pneg %p178
        %p348 = pneg %p175
        %p349 = pneg %p204
        %p350 = pneg %p201
        %s351 = sand.u32 %s191, 1
        %s352 = scalar_lea.sflag [#allocation4], %s351
        %s353 = sand.u32 %s191, 1
        %s354 = smul.addr %s353, 128
        %s355 = scalar_lea.vmem [#allocation3], %s354
        %s356 = smul.u32 16, %s21
        %p357 = scmp.lt.s32.totalorder %s356, 31
        %s358 = scalar_select %p357, %s356, 31
        %s359 = smul.addr %s358, 4
        %s360 = scalar_lea.vmem %s1, %s359
        %s361 = smul.u32 16, %s21
        %s362 = smul.u32 16, %s21
        %p363 = scmp.lt.s32.totalorder %s362, 31
        %s364 = scalar_select %p363, %s362, 31
        %s365 = smul.addr %s364, 8
        %s366 = scalar_lea.vmem %s2, %s365
        %s367 = smul.u32 16, %s21
        %s368 = smul.u32 16, %s21
        %v370 = vld [vmem:[%s317] sm:$0xf]
        %v371 = vld [vmem:[%s317 + $0x4] sm:$0xf]
        %v372 = vunpack.c.l.bf16 %v370
        %v373 = vunpack.c.l.bf16 %v371
        %v374 = vadd.f32 %v372, %v373
        %v375 = vrot.slane %v374, 4
        %v376 = vadd.f32 %v374, %v375
        %v377 = vrot.slane %v376, 2
        %v378 = vadd.f32 %v376, %v377
        %v379 = vrot.slane %v378, 1
        %v380 = vadd.f32 %v378, %v379
        %v381 = vrcp.pop 16.0
        %v382 = vmul.f32 16.0, %v381
        %v383 = vsub.f32 1.0, %v382
        %v384 = vmul.f32 %v381, %v383
        %v385 = vadd.f32 %v381, %v384
        %vm386 = vweird.f32 %v381
        %v387 = vsel %vm386, %v381, %v385
        %v388 = vmul.f32 %v380, %v387
        %v389 = vsub.f32 %v372, %v388
        %v390 = vsub.f32 %v373, %v388
        %v391 = vmul.f32 %v389, %v389
        %v392 = vmul.f32 %v390, %v390
        %v393 = vadd.f32 %v391, %v392
        %v394 = vrot.slane %v393, 4
        %v395 = vadd.f32 %v393, %v394
        %v396 = vrot.slane %v395, 2
        %v397 = vadd.f32 %v395, %v396
        %v398 = vrot.slane %v397, 1
        %v399 = vadd.f32 %v397, %v398
        %v400 = vmul.f32 %v399, %v387
        %v401 = vadd.f32 %v400, 1e-05
        %v402 = vrsqrt.pop %v401
        %v403 = vmul.f32 %v402, %v401
        %v404 = vmul.f32 %v403, %v402
        %v405 = vmul.f32 0.5, %v404
        %v406 = vsub.f32 1.5, %v405
        %v407 = vmul.f32 %v402, %v406
        %vm408 = vweird.f32 %v401
        %vm409 = vweird.f32 %v402
        %vm410 = vmor %vm408, %vm409
        %v411 = vsel %vm410, %v402, %v407
        %v412 = vmul.f32 %v389, %v411
        %v413 = vmul.f32 %v390, %v411
        %v414 = vld [vmem:[%s3] sm:$0xff]
        %v415 = vld [vmem:[%s3 + $0x8] sm:$0xff]
        %417 = vset.pattern.permute.xlu0 0
        %418 = vperm.xlu0 %417, %v414
        %v419 = vpop.permute.xlu0 %418
        %422 = vset.pattern.permute.xlu0 0
        %423 = vperm.xlu0 %422, %v415
        %v424 = vpop.permute.xlu0 %423
        %v426 = vmul.f32 %v412, %v419
        %v427 = vmul.f32 %v413, %v424
        %v428 = vld [vmem:[%s4] sm:$0xff]
        %v429 = vld [vmem:[%s4 + $0x8] sm:$0xff]
        %431 = vset.pattern.permute.xlu0 0
        %432 = vperm.xlu0 %431, %v428
        %v433 = vpop.permute.xlu0 %432
        %436 = vset.pattern.permute.xlu0 0
        %437 = vperm.xlu0 %436, %v429
        %v438 = vpop.permute.xlu0 %437
        %v440 = vadd.f32 %v426, %v433
        %v441 = vadd.f32 %v427, %v438
        %v442 = vpack.c.bf16 %v441, %v440
        %v443 = vld [vmem:[%s5] sm:$0xf]
        %v444 = vld [vmem:[%s5 + $0x4] sm:$0xf]
        %v445 = vld [vmem:[%s6] sm:$0x1]
        %v447 = vperm.slane %v445, 0
        %449 = vxpose.xlu0.c.b16.start [1/8] %v442, 128
        %450 = vxpose.xlu0.c.b16.cont [2/8] 0, 128
        %451 = vxpose.xlu0.c.b16.cont [3/8] 0, 128
        %452 = vxpose.xlu0.c.b16.cont [4/8] 0, 128
        %453 = vxpose.xlu0.c.b16.cont [5/8] 0, 128
        %454 = vxpose.xlu0.c.b16.cont [6/8] 0, 128
        %455 = vxpose.xlu0.c.b16.cont [7/8] 0, 128
        %456 = vxpose.xlu0.c.b16.end [8/8] 0, 128
        %v457 = vpop.trf.xlu0
        %v458 = vpop.trf.xlu0
        %v459 = vpop.trf.xlu0
        %v460 = vpop.trf.xlu0
        %v461 = vpop.trf.xlu0
        %v462 = vpop.trf.xlu0
        %v463 = vpop.trf.xlu0
        %v464 = vpop.trf.xlu0
        %v467 = vunpack.c.l.b16 %v443
        %v468 = vunpack.c.l.b16 %v444
        %v469 = vpack.c.b16 %v468, %v467
        %vm471 = vcmask 130048
        %v473 = vsel %vm471, %v457, 0
        %v476 = vsel %vm471, %v458, 0
        %v479 = vsel %vm471, %v459, 0
        %v482 = vsel %vm471, %v460, 0
        %v485 = vsel %vm471, %v461, 0
        %v488 = vsel %vm471, %v462, 0
        %v491 = vsel %vm471, %v463, 0
        %v494 = vsel %vm471, %v464, 0
        %496 = vmatpush.bf16.msra.mxu0 0
        %497 = vmatpush.bf16.msra.mxu0 0
        %498 = vmatpush.bf16.msra.mxu0 0
        %499 = vmatpush.bf16.msra.mxu0 0
        %500 = vmatpush.bf16.msra.mxu0 0
        %501 = vmatpush.bf16.msra.mxu0 0
        %502 = vmatpush.bf16.msra.mxu0 0
        %503 = vmatpush.bf16.msra.mxu0 %v469
        %504 = vmatmul.bf16.gmra.mxu0 %v473
        %v505 = vpop.f32.mrf.mxu0
        %v506 = vadd.f32 %v447, %v505
        %v507 = vpop.f32.mrf.mxu0
        %v508 = vadd.f32 %v447, %v507
        %509 = vmatmul.bf16.gmra.mxu0 %v476
        %v510 = vpop.f32.mrf.mxu0
        %v511 = vadd.f32 %v447, %v510
        %v512 = vpop.f32.mrf.mxu0
        %v513 = vadd.f32 %v447, %v512
        %514 = vmatmul.bf16.gmra.mxu0 %v479
        %v515 = vpop.f32.mrf.mxu0
        %v516 = vadd.f32 %v447, %v515
        %v517 = vpop.f32.mrf.mxu0
        %v518 = vadd.f32 %v447, %v517
        %519 = vmatmul.bf16.gmra.mxu0 %v482
        %v520 = vpop.f32.mrf.mxu0
        %v521 = vadd.f32 %v447, %v520
        %v522 = vpop.f32.mrf.mxu0
        %v523 = vadd.f32 %v447, %v522
        %524 = vmatmul.bf16.gmra.mxu0 %v485
        %v525 = vpop.f32.mrf.mxu0
        %v526 = vadd.f32 %v447, %v525
        %v527 = vpop.f32.mrf.mxu0
        %v528 = vadd.f32 %v447, %v527
        %529 = vmatmul.bf16.gmra.mxu0 %v488
        %v530 = vpop.f32.mrf.mxu0
        %v531 = vadd.f32 %v447, %v530
        %v532 = vpop.f32.mrf.mxu0
        %v533 = vadd.f32 %v447, %v532
        %534 = vmatmul.bf16.gmra.mxu0 %v491
        %v535 = vpop.f32.mrf.mxu0
        %v536 = vadd.f32 %v447, %v535
        %v537 = vpop.f32.mrf.mxu0
        %v538 = vadd.f32 %v447, %v537
        %539 = vmatmul.bf16.gmra.mxu0 %v494
        %v540 = vpop.f32.mrf.mxu0
        %v541 = vadd.f32 %v447, %v540
        %v542 = vpop.f32.mrf.mxu0
        %v543 = vadd.f32 %v447, %v542
        %544 = vdwg.mxu0
        %v545 = vld [vmem:[%s366] sm:$0xff]
        %v546 = vld [vmem:[%s366 + $0x8] sm:$0xff]
        %v547 = vld [vmem:[%s366 + $0x10] sm:$0xff]
        %v548 = vld [vmem:[%s366 + $0x18] sm:$0xff]
        %v549 = vld [vmem:[%s366 + $0x20] sm:$0xff]
        %v550 = vld [vmem:[%s366 + $0x28] sm:$0xff]
        %v551 = vld [vmem:[%s366 + $0x30] sm:$0xff]
        %v552 = vld [vmem:[%s366 + $0x38] sm:$0xff]
        %v553 = vld [vmem:[%s366 + $0x40] sm:$0xff]
        %v554 = vld [vmem:[%s366 + $0x48] sm:$0xff]
        %v555 = vld [vmem:[%s366 + $0x50] sm:$0xff]
        %v556 = vld [vmem:[%s366 + $0x58] sm:$0xff]
        %v557 = vld [vmem:[%s366 + $0x60] sm:$0xff]
        %v558 = vld [vmem:[%s366 + $0x68] sm:$0xff]
        %v559 = vld [vmem:[%s366 + $0x70] sm:$0xff]
        %v560 = vld [vmem:[%s366 + $0x78] sm:$0xff]
        %v561 = vld [vmem:[%s360] sm:$0xf]
        %v562 = vld [vmem:[%s360 + $0x4] sm:$0xf]
        %v563 = vld [vmem:[%s360 + $0x8] sm:$0xf]
        %v564 = vld [vmem:[%s360 + $0xc] sm:$0xf]
        %v565 = vld [vmem:[%s360 + $0x10] sm:$0xf]
        %v566 = vld [vmem:[%s360 + $0x14] sm:$0xf]
        %v567 = vld [vmem:[%s360 + $0x18] sm:$0xf]
        %v568 = vld [vmem:[%s360 + $0x1c] sm:$0xf]
        %v569 = vld [vmem:[%s360 + $0x20] sm:$0xf]
        %v570 = vld [vmem:[%s360 + $0x24] sm:$0xf]
        %v571 = vld [vmem:[%s360 + $0x28] sm:$0xf]
        %v572 = vld [vmem:[%s360 + $0x2c] sm:$0xf]
        %v573 = vld [vmem:[%s360 + $0x30] sm:$0xf]
        %v574 = vld [vmem:[%s360 + $0x34] sm:$0xf]
        %v575 = vld [vmem:[%s360 + $0x38] sm:$0xf]
        %v576 = vld [vmem:[%s360 + $0x3c] sm:$0xf]
        %v577 = vunpack.c.l.bf16 %v561
        %v578 = vunpack.c.l.bf16 %v562
        %v579 = vunpack.c.l.bf16 %v563
        %v580 = vunpack.c.l.bf16 %v564
        %v581 = vunpack.c.l.bf16 %v565
        %v582 = vunpack.c.l.bf16 %v566
        %v583 = vunpack.c.l.bf16 %v567
        %v584 = vunpack.c.l.bf16 %v568
        %v585 = vunpack.c.l.bf16 %v569
        %v586 = vunpack.c.l.bf16 %v570
        %v587 = vunpack.c.l.bf16 %v571
        %v588 = vunpack.c.l.bf16 %v572
        %v589 = vunpack.c.l.bf16 %v573
        %v590 = vunpack.c.l.bf16 %v574
        %v591 = vunpack.c.l.bf16 %v575
        %v592 = vunpack.c.l.bf16 %v576
        %v593 = vmul.f32 %v506, %v577
        %v594 = vmul.f32 %v508, %v578
        %v595 = vmul.f32 %v511, %v579
        %v596 = vmul.f32 %v513, %v580
        %v597 = vmul.f32 %v516, %v581
        %v598 = vmul.f32 %v518, %v582
        %v599 = vmul.f32 %v521, %v583
        %v600 = vmul.f32 %v523, %v584
        %v601 = vmul.f32 %v526, %v585
        %v602 = vmul.f32 %v528, %v586
        %v603 = vmul.f32 %v531, %v587
        %v604 = vmul.f32 %v533, %v588
        %v605 = vmul.f32 %v536, %v589
        %v606 = vmul.f32 %v538, %v590
        %v607 = vmul.f32 %v541, %v591
        %v608 = vmul.f32 %v543, %v592
        %v609 = vadd.f32 %v545, %v593
        %v610 = vadd.f32 %v546, %v594
        %v611 = vadd.f32 %v547, %v595
        %v612 = vadd.f32 %v548, %v596
        %v613 = vadd.f32 %v549, %v597
        %v614 = vadd.f32 %v550, %v598
        %v615 = vadd.f32 %v551, %v599
        %v616 = vadd.f32 %v552, %v600
        %v617 = vadd.f32 %v553, %v601
        %v618 = vadd.f32 %v554, %v602
        %v619 = vadd.f32 %v555, %v603
        %v620 = vadd.f32 %v556, %v604
        %v621 = vadd.f32 %v557, %v605
        %v622 = vadd.f32 %v558, %v606
        %v623 = vadd.f32 %v559, %v607
        %v624 = vadd.f32 %v560, %v608
        %vm625 = vcmask 261120
        %626 = vst.msk [vmem:[%s355] sm:$0xff] %vm625, %v609
        %627 = vst.msk [vmem:[%s355 + $0x8] sm:$0xff] %vm625, %v610
        %628 = vst.msk [vmem:[%s355 + $0x10] sm:$0xff] %vm625, %v611
        %629 = vst.msk [vmem:[%s355 + $0x18] sm:$0xff] %vm625, %v612
        %630 = vst.msk [vmem:[%s355 + $0x20] sm:$0xff] %vm625, %v613
        %631 = vst.msk [vmem:[%s355 + $0x28] sm:$0xff] %vm625, %v614
        %632 = vst.msk [vmem:[%s355 + $0x30] sm:$0xff] %vm625, %v615
        %633 = vst.msk [vmem:[%s355 + $0x38] sm:$0xff] %vm625, %v616
        %634 = vst.msk [vmem:[%s355 + $0x40] sm:$0xff] %vm625, %v617
        %635 = vst.msk [vmem:[%s355 + $0x48] sm:$0xff] %vm625, %v618
        %636 = vst.msk [vmem:[%s355 + $0x50] sm:$0xff] %vm625, %v619
        %637 = vst.msk [vmem:[%s355 + $0x58] sm:$0xff] %vm625, %v620
        %638 = vst.msk [vmem:[%s355 + $0x60] sm:$0xff] %vm625, %v621
        %639 = vst.msk [vmem:[%s355 + $0x68] sm:$0xff] %vm625, %v622
        %640 = vst.msk [vmem:[%s355 + $0x70] sm:$0xff] %vm625, %v623
        %641 = vst.msk [vmem:[%s355 + $0x78] sm:$0xff] %vm625, %v624
        %s642 = sand.u32 %s191, 1
        %s643 = scalar_lea.sflag [#allocation4], %s642
        %s644 = sand.u32 %s191, 1
        %s645 = smul.addr %s644, 128
        %s646 = scalar_lea.vmem [#allocation3], %s645
        // Predicated region
        $region90: #{tri_model_forward.11} parent=84 // pred_check
          %p647 = pneg %p201
        $region91: #{tri_model_forward.11} parent=84 // pred_check_branch
          %649 = sbr.rel (%p647) target = $region93
        $region92: #{tri_model_forward.11} parent=84 // pred_region
          %s650 = smul.u32 16, %s21
          %652 = vsyncadd %s643, 0
          %s653 = smul.addr %s650, 8
          %s654 = scalar_lea.hbm %s7, %s653
          %s655 = sshll.u32 %s646, 4
          %s656 = int_to_ptr.vmem [resolvable:$true] %s655
          %s657 = sshll.u32 %s654, 4
          %s658 = int_to_ptr.hbm [resolvable:$true] %s657
          %663 = dma.vmem_to_hbm [thread:$0]  %s656, 2048, %s658, %s643, 128, 128, 8
        $region93: #{tri_model_forward.11} parent=84 // pred_fallthru
          _
      $region85: #{tri_model_forward.11} parent=5 // pred_fallthru
        _
      %p664 = scmp.le.s32.totalorder 2, %s16
      // Predicated region
      $region94: #{tri_model_forward.11} parent=5 // pred_check
        %p665 = pneg %p664
      $region95: #{tri_model_forward.11} parent=5 // pred_check_branch
        %667 = sbr.rel (%p665) target = $region97
      $region96: #{tri_model_forward.11} parent=5 // pred_region
        %s668 = ssub.s32 %s16, 2
        // Predicated region
        $region98: #{tri_model_forward.11} parent=96 // pred_check
          %p669 = pneg %p207
        $region99: #{tri_model_forward.11} parent=96 // pred_check_branch
          %671 = sbr.rel (%p669) target = $region101
        $region100: #{tri_model_forward.11} parent=96 // pred_region
          %s672 = sand.u32 %s192, 1
          %s673 = scalar_lea.sflag [#allocation4], %s672
          %s674 = sand.u32 %s192, 1
          %s675 = smul.addr %s674, 128
          %s676 = scalar_lea.vmem [#allocation3], %s675
          %678 = dma.done %s673, 2048
        $region101: #{tri_model_forward.11} parent=96 // pred_fallthru
          _
      $region97: #{tri_model_forward.11} parent=5 // pred_fallthru
        _
    $region6: #{tri_model_forward.11} parent=1 // loop_footer
      %s20 = sadd.s32 1, %s16
    $region7: #{tri_model_forward.11} parent=1 // loop_footer_branch
      %15 = sbr.rel target = $region3
    $region8: #{tri_model_forward.11} parent=1 // loop_exit
      _
    %679 = vsyncpa [#allocation4], 1
    %s680 = scalar_lea.sflag [#allocation4], 1
    %681 = vsyncpa %s680, 1

</llo_original>
